<compile_context>
chip_gen: v5e
topology: v5e:2x2
jax: 0.10.0
libtpu: 0.0.40
codegen_flags: <defaults>
</compile_context>

<pallas_src>
import functools
import math

import jax
import jax.numpy as jnp
from jax.experimental import pallas as pl
from jax.experimental.pallas import tpu as pltpu


# ------------------------------------------------------------------ utilities
def _pick_tile(total, target, align):
    """Largest multiple of `align` that divides `total` and is <= target."""
    if total <= target:
        return total
    best = None
    t = align
    while t <= target:
        if total % t == 0:
            best = t
        t += align
    if best is not None:
        return best
    for t in range(min(target, total), 0, -1):  # correctness fallback
        if total % t == 0:
            return t
    return total


def _vmem_limit_bytes():
    # v5e/v6e have 128 MiB of VMEM, v7x only 64 MiB: derive the scoped limit
    # from the actual part when possible, otherwise use a v7x-safe 48 MiB.
    try:
        cap = pltpu.get_tpu_info().vmem_capacity_bytes
        return int(min(cap * 3 // 4, 96 * 1024 * 1024))
    except Exception:
        return 48 * 1024 * 1024


# --------------------------------------------------------------- kernel 1: QKV
def _qkv_proj_kernel(x_ref, w_ref, q_ref, kv_ref, *, dq):
    # x_ref: (Tm, D) input dtype; w_ref: (D, 3*Dq) bf16 with [Q*scale | K | V]
    # columns in per-head padded layout; outputs: q (Tm, Dq), kv (Tm, 2*Dq).
    xb = x_ref[...].astype(w_ref.dtype)            # bf16 operands -> fast MXU
    y = jnp.dot(xb, w_ref[...], preferred_element_type=jnp.float32)
    q_ref[...] = y[:, :dq].astype(q_ref.dtype)     # lane-aligned column splits
    kv_ref[...] = y[:, dq:].astype(kv_ref.dtype)


# ----------------------------------------------- kernel 2: flash attn + to_out
def _flash_attn_out_kernel(q_ref, kv_ref, wout_ref, bias_ref, o_ref,
                           m_s, l_s, acc_s, *, heads, dh_pad):
    # q_ref: (1, Tq, Dq)   kv_ref: (1, Tk, 2*Dq) = [K | V]
    # wout_ref: (Dq, D) bf16   bias_ref: (1, D) f32   o_ref: (1, Tq, D)
    # scratch: m_s/l_s (H, Tq, 1) f32; acc_s (Tq, Dq) f32 with head h in the
    # 128-multiple lane block [h*dh_pad, (h+1)*dh_pad).
    ki = pl.program_id(2)
    nk = pl.num_programs(2)
    dq = heads * dh_pad

    @pl.when(ki == 0)
    def _init():
        m_s[...] = jnp.full_like(m_s, -jnp.inf)
        l_s[...] = jnp.zeros_like(l_s)
        acc_s[...] = jnp.zeros_like(acc_s)

    q = q_ref[0]      # (Tq, Dq) bf16 -- Q already carries the dim**-0.5 scale
    kv = kv_ref[0]    # (Tk, 2*Dq) bf16

    for h in range(heads):
        sl = slice(h * dh_pad, (h + 1) * dh_pad)           # 128-lane aligned
        qh = q[:, sl]
        kh = kv[:, sl]
        vh = kv[:, dq + h * dh_pad: dq + (h + 1) * dh_pad]

        # scores (Tq, Tk): bf16 operands, f32 accumulation on the MXU.
        s = jax.lax.dot_general(
            qh, kh, (((1,), (1,)), ((), ())),
            preferred_element_type=jnp.float32)

        m_prev = m_s[h]                                     # (Tq, 1)
        m_new = jnp.maximum(m_prev, jnp.max(s, axis=-1, keepdims=True))
        alpha = jnp.exp(m_prev - m_new)                     # (Tq, 1) f32 (EUP)
        p = jnp.exp(s - m_new)                              # (Tq, Tk) f32
        l_s[h] = alpha * l_s[h] + jnp.sum(p, axis=-1, keepdims=True)
        pv = jnp.dot(p.astype(vh.dtype), vh,
                     preferred_element_type=jnp.float32)    # (Tq, dh_pad)
        acc_s[:, sl] = alpha * acc_s[:, sl] + pv            # unmasked lane RMW
        m_s[h] = m_new

    @pl.when(ki == nk - 1)
    def _finalize():
        tq = acc_s.shape[0]
        # One lane-dense normalization pass: each head's exact 1/l broadcast
        # across its dh_pad lanes, single full-width multiply (runs once per
        # q tile, so the approximate reciprocal would save nothing).
        inv = [jnp.broadcast_to(1.0 / l_s[h], (tq, dh_pad))
               for h in range(heads)]
        inv_full = inv[0] if heads == 1 else jnp.concatenate(inv, axis=-1)
        out = (acc_s[...] * inv_full).astype(wout_ref.dtype)   # (Tq, Dq) bf16
        y = jnp.dot(out, wout_ref[...], preferred_element_type=jnp.float32)
        o_ref[0] = (y + bias_ref[...]).astype(o_ref.dtype)


# -------------------------------------------------------------------- wrapper
def fast_attention(x, w_qkv, w_out, b_out, *, heads,
                   block_rows=512, block_q=256, block_k=256):
    """Fused FastAttention forward.

    x: (B, N, D); w_qkv: torch layout (3D, D); w_out: (D, D); b_out: (D,).
    Returns (B, N, D) in x.dtype.
    """
    b, n, d = x.shape
    assert d % heads == 0, "dim must be divisible by heads"
    assert d % 128 == 0, "optimized path requires lane-aligned model dim (128)"
    dh = d // heads
    dh_pad = ((dh + 127) // 128) * 128        # pad each head to >=128 lanes
    dq = heads * dh_pad
    scale = float(d) ** (-0.5)
    compute_dtype = jnp.bfloat16

    # ---- host-side weight re-layout (one-time, tiny) ------------------------
    wq, wk, wv = jnp.split(w_qkv, 3, axis=0)             # torch (out, in) blocks

    def _pad_cols(w_t):                                  # (D, D) -> (D, Dq)
        blks = []
        for h in range(heads):
            blk = w_t[:, h * dh:(h + 1) * dh]
            if dh_pad > dh:
                blk = jnp.pad(blk, ((0, 0), (0, dh_pad - dh)))
            blks.append(blk)
        return blks[0] if heads == 1 else jnp.concatenate(blks, axis=1)

    wq_t = _pad_cols(wq.T * scale)                       # fold softmax scale
    wk_t = _pad_cols(wk.T)
    wv_t = _pad_cols(wv.T)
    w_in = jnp.concatenate([wq_t, wk_t, wv_t], axis=1).astype(compute_dtype)

    def _pad_rows(w_t):                                  # (D, D) -> (Dq, D)
        blks = []
        for h in range(heads):
            blk = w_t[h * dh:(h + 1) * dh, :]
            if dh_pad > dh:
                blk = jnp.pad(blk, ((0, dh_pad - dh), (0, 0)))
            blks.append(blk)
        return blks[0] if heads == 1 else jnp.concatenate(blks, axis=0)

    wout_t = _pad_rows(w_out.T).astype(compute_dtype)    # (Dq, D), zero pad rows
    bias2d = b_out.reshape(1, d).astype(jnp.float32)

    vmem_limit = _vmem_limit_bytes()
    in_bytes = jnp.dtype(x.dtype).itemsize
    cd_bytes = jnp.dtype(compute_dtype).itemsize

    # ---- kernel 1: row-tiled QKV projection (rows = B*N collapsed) ---------
    rows = b * n
    tm = _pick_tile(rows, block_rows, 8)
    x2 = x.reshape(rows, d)
    q2, kv2 = pl.pallas_call(
        functools.partial(_qkv_proj_kernel, dq=dq),
        out_shape=(jax.ShapeDtypeStruct((rows, dq), compute_dtype),
                   jax.ShapeDtypeStruct((rows, 2 * dq), compute_dtype)),
        grid_spec=pltpu.PrefetchScalarGridSpec(
            num_scalar_prefetch=0,
            grid=(rows // tm,),
            in_specs=[
                pl.BlockSpec((tm, d), lambda i: (i, 0)),
                pl.BlockSpec((d, 3 * dq), lambda i: (0, 0)),
            ],
            out_specs=[
                pl.BlockSpec((tm, dq), lambda i: (i, 0)),
                pl.BlockSpec((tm, 2 * dq), lambda i: (i, 0)),
            ],
        ),
        compiler_params=pltpu.CompilerParams(
            dimension_semantics=("parallel",),
            vmem_limit_bytes=vmem_limit),
        cost_estimate=pl.CostEstimate(
            flops=2 * rows * d * 3 * dq,
            transcendentals=0,
            bytes_accessed=(in_bytes * rows * d + cd_bytes * d * 3 * dq
                            + cd_bytes * rows * 3 * dq)),
    )(x2, w_in)

    q3 = q2.reshape(b, n, dq)
    kv3 = kv2.reshape(b, n, 2 * dq)

    # ---- kernel 2: flash attention + fused output projection ---------------
    tq = _pick_tile(n, block_q, 128)
    tk = _pick_tile(n, block_k, 128)
    # Keep >=2 parallel grid slices so both v7x TensorCores have work.
    while b * (n // tq) < 2 and tq > 128 and n % (tq // 2) == 0:
        tq //= 2

    kernel = functools.partial(_flash_attn_out_kernel, heads=heads,
                               dh_pad=dh_pad)
    out = pl.pallas_call(
        kernel,
        out_shape=jax.ShapeDtypeStruct((b, n, d), x.dtype),
        grid_spec=pltpu.PrefetchScalarGridSpec(
            num_scalar_prefetch=0,
            grid=(b, n // tq, n // tk),
            in_specs=[
                pl.BlockSpec((1, tq, dq), lambda bi, qi, ki: (bi, qi, 0)),      # Q
                pl.BlockSpec((1, tk, 2 * dq), lambda bi, qi, ki: (bi, ki, 0)),  # K|V
                # TODO(synk): for very large D on v7x (64 MiB VMEM), tile W_out
                # over output columns instead of keeping the full block resident.
                pl.BlockSpec((dq, d), lambda bi, qi, ki: (0, 0)),               # W_out
                pl.BlockSpec((1, d), lambda bi, qi, ki: (0, 0)),                # bias
            ],
            out_specs=pl.BlockSpec((1, tq, d), lambda bi, qi, ki: (bi, qi, 0)),
            scratch_shapes=[
                pltpu.VMEM((heads, tq, 1), jnp.float32),   # running max
                pltpu.VMEM((heads, tq, 1), jnp.float32),   # running denom
                pltpu.VMEM((tq, dq), jnp.float32),         # PV accumulator
            ],
        ),
        compiler_params=pltpu.CompilerParams(
            dimension_semantics=("parallel", "parallel", "arbitrary"),
            vmem_limit_bytes=vmem_limit),
        cost_estimate=pl.CostEstimate(
            flops=b * heads * 4 * n * n * dh_pad + 2 * b * n * dq * d,
            transcendentals=b * heads * n * n,
            bytes_accessed=(cd_bytes * (b * n * dq
                                        + (n // tq) * b * n * 2 * dq
                                        + dq * d)
                            + in_bytes * b * n * d)),
    )(q3, kv3, wout_t, bias2d)
    return out


# ------------------------------------------------------------------ reference
def fast_attention_ref(x, w_qkv, w_out, b_out, *, heads):
    """Pure-JAX reference mirroring the PyTorch forward (f32)."""
    b, n, d = x.shape
    scale = float(d) ** (-0.5)
    qkv = x @ w_qkv.T                                   # (B, N, 3D)
    q, k, v = jnp.split(qkv, 3, axis=-1)

    def to_heads(t):
        return t.reshape(b, n, heads, -1).transpose(0, 2, 1, 3)

    q, k, v = map(to_heads, (q, k, v))
    dots = jnp.einsum('bhqd,bhkd->bhqk', q, k) * scale
    attn = jax.nn.softmax(dots, axis=-1)
    out = jnp.einsum('bhqk,bhkd->bhqd', attn, v)
    out = out.transpose(0, 2, 1, 3).reshape(b, n, d)
    return out @ w_out.T + b_out


if __name__ == "__main__":
    # dh = D/H = 64 (< 128 lanes) so the padded per-head lane layout is
    # exercised; tiles are 256x256 so the flash grid is real.
    B, N, D, H = 2, 256, 256, 4

    key = jax.random.PRNGKey(0)
    kx, kq, ko, kb = jax.random.split(key, 4)

    x = jax.random.normal(kx, (B, N, D), dtype=jnp.float32)
    bound = 1.0 / math.sqrt(D)                    # torch.nn.Linear-like init
    w_qkv = jax.random.uniform(kq, (3 * D, D), jnp.float32, -bound, bound)
    w_out = jax.random.uniform(ko, (D, D), jnp.float32, -bound, bound)
    b_out = jax.random.uniform(kb, (D,), jnp.float32, -bound, bound)

    y = fast_attention(x, w_qkv, w_out, b_out, heads=H)
    y = jax.block_until_ready(y)

    y_ref = fast_attention_ref(x, w_qkv, w_out, b_out, heads=H)
    assert y.shape == (B, N, D)
    # bf16 MXU operands (per the perf review) -> compare against the f32
    # reference with a bf16-appropriate tolerance.
    assert jnp.allclose(y, y_ref, atol=1e-2, rtol=1e-2), "mismatch vs reference"

    print("KERNEL_OK")
</pallas_src>

<mosaic_0001>
module attributes {stable_mosaic.version = 11 : i64} {
  func.func @_qkv_proj_kernel(%arg0: i32, %arg1: memref<512x256xf32, #tpu.memory_space<vmem>>, %arg2: memref<256x1536xbf16, #tpu.memory_space<vmem>>, %arg3: memref<512x512xbf16, #tpu.memory_space<vmem>>, %arg4: memref<512x1024xbf16, #tpu.memory_space<vmem>>) attributes {dimension_semantics = [#tpu.dimension_semantics<parallel>], iteration_bounds = array<i64: 1>, scalar_prefetch = 0 : i64, scratch_operands = 0 : i64, tpu.core_type = #tpu.core_type<tc>, window_params = [{transform_indices = @transform_0, window_bounds = array<i64: 512, 256>}, {pipeline_mode = #tpu.pipeline_mode<synchronous>, transform_indices = @transform_1, window_bounds = array<i64: 256, 1536>}, {transform_indices = @transform_2, window_bounds = array<i64: 512, 512>}, {transform_indices = @transform_3, window_bounds = array<i64: 512, 1024>}]} {
    %c0 = arith.constant 0 : index
    %c0_0 = arith.constant 0 : index
    %0 = vector.load %arg1[%c0, %c0_0] : memref<512x256xf32, #tpu.memory_space<vmem>>, vector<512x256xf32>
    %1 = arith.truncf %0 : vector<512x256xf32> to vector<512x256xbf16>
    %c0_1 = arith.constant 0 : index
    %c0_2 = arith.constant 0 : index
    %2 = vector.load %arg2[%c0_1, %c0_2] : memref<256x1536xbf16, #tpu.memory_space<vmem>>, vector<256x1536xbf16>
    %cst = arith.constant dense<0.000000e+00> : vector<512x1536xf32>
    %3 = tpu.matmul %1, %2, %cst {dimension_numbers = #tpu.dot_dimension_numbers<[1], [0], [0], [1], [0, 0, 1, 1], [], []>} : vector<512x256xbf16>, vector<256x1536xbf16>, vector<512x1536xf32> -> vector<512x1536xf32>
    %4 = vector.extract_strided_slice %3 {offsets = [0, 0], sizes = [512, 512], strides = [1, 1]} : vector<512x1536xf32> to vector<512x512xf32>
    %5 = arith.truncf %4 : vector<512x512xf32> to vector<512x512xbf16>
    %c0_3 = arith.constant 0 : index
    %c0_4 = arith.constant 0 : index
    %6 = vector.load %arg3[%c0_3, %c0_4] : memref<512x512xbf16, #tpu.memory_space<vmem>>, vector<512x512xbf16>
    tpu.vector_store %arg3[%c0_3, %c0_4], %5 {strides = array<i32>} : memref<512x512xbf16, #tpu.memory_space<vmem>>, vector<512x512xbf16>,
    %7 = vector.extract_strided_slice %3 {offsets = [0, 512], sizes = [512, 1024], strides = [1, 1]} : vector<512x1536xf32> to vector<512x1024xf32>
    %8 = arith.truncf %7 : vector<512x1024xf32> to vector<512x1024xbf16>
    %c0_5 = arith.constant 0 : index
    %c0_6 = arith.constant 0 : index
    %9 = vector.load %arg4[%c0_5, %c0_6] : memref<512x1024xbf16, #tpu.memory_space<vmem>>, vector<512x1024xbf16>
    tpu.vector_store %arg4[%c0_5, %c0_6], %8 {strides = array<i32>} : memref<512x1024xbf16, #tpu.memory_space<vmem>>, vector<512x1024xbf16>,
    return
  }
  func.func @transform_0(%arg0: i32) -> (i32, i32) {
    %c0_i32 = arith.constant 0 : i32
    %c0_i32_0 = arith.constant 0 : i32
    return %arg0, %c0_i32 : i32, i32
  }
  func.func @transform_1(%arg0: i32) -> (i32, i32) {
    %c0_i32 = arith.constant 0 : i32
    %c0_i32_0 = arith.constant 0 : i32
    %c0_i32_1 = arith.constant 0 : i32
    return %c0_i32, %c0_i32_0 : i32, i32
  }
  func.func @transform_2(%arg0: i32) -> (i32, i32) {
    %c0_i32 = arith.constant 0 : i32
    %c0_i32_0 = arith.constant 0 : i32
    return %arg0, %c0_i32 : i32, i32
  }
  func.func @transform_3(%arg0: i32) -> (i32, i32) {
    %c0_i32 = arith.constant 0 : i32
    %c0_i32_0 = arith.constant 0 : i32
    return %arg0, %c0_i32 : i32, i32
  }
}

</mosaic_0001>

<llo_original>
// kernel: tpu_custom_call.1
$region0: #{tpu_custom_call.1}
  #allocation0 [shape = 'u32[]', space=smem, size = 0x4, offset = 0x4, fixed_abs, tag = 'smem constant byte address 0x4 - core index']
  #allocation1 [shape = 'u32[72,128]{1,0:T(1,128)}', space=vmem, size = 0x9000, scoped, tag = 'internal scratch']
  %s0 = inlined_call_operand.hbm [shape: f32[512,256], index: 0, kind: input, shape index: {}]
  %s1 = inlined_call_operand.hbm [shape: bf16[256,1536], index: 1, kind: input, shape index: {}]
  %s2 = inlined_call_operand.hbm [shape: bf16[512,512], index: 2, kind: output, shape index: {0}]
  %s3 = inlined_call_operand.hbm [shape: bf16[512,1024], index: 3, kind: output, shape index: {1}]
  %4 = xla_tuple %s2, %s3
  %s5 = sld [smem:[#allocation0]]
  $region34: #{tpu_custom_call.1} parent=0
    _
  %s7 = ssub.s32 1, %s5
  %s8 = scalar_select 0, %s7, %s5
  $region1: #{tpu_custom_call.1} parent=0
    #allocation2 [shape = 'u8[524288]{0}', space=vmem, size = 0x80000, scoped, tag = 'input window, operand 0, single buffered']
    #allocation3 [shape = 's32[1]{0}', space=sflag, size = 0x4, scoped, tag = 'scoped memory for tpu_custom_call.1']
    #allocation4 [shape = 's32[1]{0}', space=sflag, size = 0x4, scoped, tag = 'scoped memory for tpu_custom_call.1']
    #allocation5 [shape = 'u8[786432]{0}', space=vmem, size = 0xc0000, scoped, tag = 'input window, operand 1, single buffered']
    #allocation6 [shape = 's32[1]{0}', space=sflag, size = 0x4, scoped, tag = 'scoped memory for tpu_custom_call.1']
    #allocation7 [shape = 'u8[524288]{0}', space=vmem, size = 0x80000, scoped, tag = 'output window, operand 0, single buffered']
    #allocation8 [shape = 'u8[1048576]{0}', space=vmem, size = 0x100000, scoped, tag = 'output window, operand 1, single buffered']
    #allocation9 [shape = 's32[1]{0}', space=sflag, size = 0x4, scoped, tag = 'scoped memory for tpu_custom_call.1']
    %9 = vsyncpa [#allocation3], 0
    %10 = vsyncpa [#allocation6], 0
    %11 = vsyncpa [#allocation4], 0
    %12 = vsyncpa [#allocation9], 0
    // Predicated region
    $region2: #{tpu_custom_call.1} parent=1 // pred_check
      _
    $region3: #{tpu_custom_call.1} parent=1 // pred_check_branch
      %14 = sbr.rel (0) target = $region5
    $region4: #{tpu_custom_call.1} parent=1 // pred_region
      %16 = vsyncadd [#allocation3], 0
      %s17 = sshll.u32 %s0, 4
      %s18 = int_to_ptr.hbm [resolvable:$true] %s17
      %s19 = sshll.u32 [#allocation2], 4
      %s20 = int_to_ptr.vmem [resolvable:$true] %s19
      %25 = dma.hbm_to_vmem [thread:$0]  %s18, 16384, %s20, [#allocation3], 256, 256, 16
    $region5: #{tpu_custom_call.1} parent=1 // pred_fallthru
      _
    // Predicated region
    $region6: #{tpu_custom_call.1} parent=1 // pred_check
      _
    $region7: #{tpu_custom_call.1} parent=1 // pred_check_branch
      %27 = sbr.rel (0) target = $region9
    $region8: #{tpu_custom_call.1} parent=1 // pred_region
      %29 = vsyncadd [#allocation6], 0
      %s30 = sshll.u32 %s1, 4
      %s31 = int_to_ptr.hbm [resolvable:$true] %s30
      %s32 = sshll.u32 [#allocation5], 4
      %s33 = int_to_ptr.vmem [resolvable:$true] %s32
      %38 = dma.hbm_to_vmem [thread:$0]  %s31, 24576, %s33, [#allocation6], 768, 768, 48
    $region9: #{tpu_custom_call.1} parent=1 // pred_fallthru
      _
    // Predicated region
    $region10: #{tpu_custom_call.1} parent=1 // pred_check
      _
    $region11: #{tpu_custom_call.1} parent=1 // pred_check_branch
      %40 = sbr.rel (0) target = $region13
    $region12: #{tpu_custom_call.1} parent=1 // pred_region
      %42 = dma.done [#allocation3], 16384
    $region13: #{tpu_custom_call.1} parent=1 // pred_fallthru
      _
    // Predicated region
    $region14: #{tpu_custom_call.1} parent=1 // pred_check
      _
    $region15: #{tpu_custom_call.1} parent=1 // pred_check_branch
      %44 = sbr.rel (0) target = $region17
    $region16: #{tpu_custom_call.1} parent=1 // pred_region
      %46 = dma.done [#allocation6], 24576
    $region17: #{tpu_custom_call.1} parent=1 // pred_fallthru
      _
    %v47 = vld [vmem:[#allocation2] sm:$0xff]
    %v48 = vld [vmem:[#allocation2 + $0x8] sm:$0xff]
    %v49 = vld [vmem:[#allocation2 + $0x10] sm:$0xff]
    %v50 = vld [vmem:[#allocation2 + $0x18] sm:$0xff]
    %v51 = vld [vmem:[#allocation2 + $0x20] sm:$0xff]
    %v52 = vld [vmem:[#allocation2 + $0x28] sm:$0xff]
    %v53 = vld [vmem:[#allocation2 + $0x30] sm:$0xff]
    %v54 = vld [vmem:[#allocation2 + $0x38] sm:$0xff]
    %v55 = vld [vmem:[#allocation2 + $0x40] sm:$0xff]
    %v56 = vld [vmem:[#allocation2 + $0x48] sm:$0xff]
    %v57 = vld [vmem:[#allocation2 + $0x50] sm:$0xff]
    %v58 = vld [vmem:[#allocation2 + $0x58] sm:$0xff]
    %v59 = vld [vmem:[#allocation2 + $0x60] sm:$0xff]
    %v60 = vld [vmem:[#allocation2 + $0x68] sm:$0xff]
    %v61 = vld [vmem:[#allocation2 + $0x70] sm:$0xff]
    %v62 = vld [vmem:[#allocation2 + $0x78] sm:$0xff]
    %v63 = vld [vmem:[#allocation2 + $0x80] sm:$0xff]
    %v64 = vld [vmem:[#allocation2 + $0x88] sm:$0xff]
    %v65 = vld [vmem:[#allocation2 + $0x90] sm:$0xff]
    %v66 = vld [vmem:[#allocation2 + $0x98] sm:$0xff]
    %v67 = vld [vmem:[#allocation2 + $0xa0] sm:$0xff]
    %v68 = vld [vmem:[#allocation2 + $0xa8] sm:$0xff]
    %v69 = vld [vmem:[#allocation2 + $0xb0] sm:$0xff]
    %v70 = vld [vmem:[#allocation2 + $0xb8] sm:$0xff]
    %v71 = vld [vmem:[#allocation2 + $0xc0] sm:$0xff]
    %v72 = vld [vmem:[#allocation2 + $0xc8] sm:$0xff]
    %v73 = vld [vmem:[#allocation2 + $0xd0] sm:$0xff]
    %v74 = vld [vmem:[#allocation2 + $0xd8] sm:$0xff]
    %v75 = vld [vmem:[#allocation2 + $0xe0] sm:$0xff]
    %v76 = vld [vmem:[#allocation2 + $0xe8] sm:$0xff]
    %v77 = vld [vmem:[#allocation2 + $0xf0] sm:$0xff]
    %v78 = vld [vmem:[#allocation2 + $0xf8] sm:$0xff]
    %v79 = vld [vmem:[#allocation2 + $0x100] sm:$0xff]
    %v80 = vld [vmem:[#allocation2 + $0x108] sm:$0xff]
    %v81 = vld [vmem:[#allocation2 + $0x110] sm:$0xff]
    %v82 = vld [vmem:[#allocation2 + $0x118] sm:$0xff]
    %v83 = vld [vmem:[#allocation2 + $0x120] sm:$0xff]
    %v84 = vld [vmem:[#allocation2 + $0x128] sm:$0xff]
    %v85 = vld [vmem:[#allocation2 + $0x130] sm:$0xff]
    %v86 = vld [vmem:[#allocation2 + $0x138] sm:$0xff]
    %v87 = vld [vmem:[#allocation2 + $0x140] sm:$0xff]
    %v88 = vld [vmem:[#allocation2 + $0x148] sm:$0xff]
    %v89 = vld [vmem:[#allocation2 + $0x150] sm:$0xff]
    %v90 = vld [vmem:[#allocation2 + $0x158] sm:$0xff]
    %v91 = vld [vmem:[#allocation2 + $0x160] sm:$0xff]
    %v92 = vld [vmem:[#allocation2 + $0x168] sm:$0xff]
    %v93 = vld [vmem:[#allocation2 + $0x170] sm:$0xff]
    %v94 = vld [vmem:[#allocation2 + $0x178] sm:$0xff]
    %v95 = vld [vmem:[#allocation2 + $0x180] sm:$0xff]
    %v96 = vld [vmem:[#allocation2 + $0x188] sm:$0xff]
    %v97 = vld [vmem:[#allocation2 + $0x190] sm:$0xff]
    %v98 = vld [vmem:[#allocation2 + $0x198] sm:$0xff]
    %v99 = vld [vmem:[#allocation2 + $0x1a0] sm:$0xff]
    %v100 = vld [vmem:[#allocation2 + $0x1a8] sm:$0xff]
    %v101 = vld [vmem:[#allocation2 + $0x1b0] sm:$0xff]
    %v102 = vld [vmem:[#allocation2 + $0x1b8] sm:$0xff]
    %v103 = vld [vmem:[#allocation2 + $0x1c0] sm:$0xff]
    %v104 = vld [vmem:[#allocation2 + $0x1c8] sm:$0xff]
    %v105 = vld [vmem:[#allocation2 + $0x1d0] sm:$0xff]
    %v106 = vld [vmem:[#allocation2 + $0x1d8] sm:$0xff]
    %v107 = vld [vmem:[#allocation2 + $0x1e0] sm:$0xff]
    %v108 = vld [vmem:[#allocation2 + $0x1e8] sm:$0xff]
    %v109 = vld [vmem:[#allocation2 + $0x1f0] sm:$0xff]
    %v110 = vld [vmem:[#allocation2 + $0x1f8] sm:$0xff]
    %v111 = vld [vmem:[#allocation2 + $0x200] sm:$0xff]
    %v112 = vld [vmem:[#allocation2 + $0x208] sm:$0xff]
    %v113 = vld [vmem:[#allocation2 + $0x210] sm:$0xff]
    %v114 = vld [vmem:[#allocation2 + $0x218] sm:$0xff]
    %v115 = vld [vmem:[#allocation2 + $0x220] sm:$0xff]
    %v116 = vld [vmem:[#allocation2 + $0x228] sm:$0xff]
    %v117 = vld [vmem:[#allocation2 + $0x230] sm:$0xff]
    %v118 = vld [vmem:[#allocation2 + $0x238] sm:$0xff]
    %v119 = vld [vmem:[#allocation2 + $0x240] sm:$0xff]
    %v120 = vld [vmem:[#allocation2 + $0x248] sm:$0xff]
    %v121 = vld [vmem:[#allocation2 + $0x250] sm:$0xff]
    %v122 = vld [vmem:[#allocation2 + $0x258] sm:$0xff]
    %v123 = vld [vmem:[#allocation2 + $0x260] sm:$0xff]
    %v124 = vld [vmem:[#allocation2 + $0x268] sm:$0xff]
    %v125 = vld [vmem:[#allocation2 + $0x270] sm:$0xff]
    %v126 = vld [vmem:[#allocation2 + $0x278] sm:$0xff]
    %v127 = vld [vmem:[#allocation2 + $0x280] sm:$0xff]
    %v128 = vld [vmem:[#allocation2 + $0x288] sm:$0xff]
    %v129 = vld [vmem:[#allocation2 + $0x290] sm:$0xff]
    %v130 = vld [vmem:[#allocation2 + $0x298] sm:$0xff]
    %v131 = vld [vmem:[#allocation2 + $0x2a0] sm:$0xff]
    %v132 = vld [vmem:[#allocation2 + $0x2a8] sm:$0xff]
    %v133 = vld [vmem:[#allocation2 + $0x2b0] sm:$0xff]
    %v134 = vld [vmem:[#allocation2 + $0x2b8] sm:$0xff]
    %v135 = vld [vmem:[#allocation2 + $0x2c0] sm:$0xff]
    %v136 = vld [vmem:[#allocation2 + $0x2c8] sm:$0xff]
    %v137 = vld [vmem:[#allocation2 + $0x2d0] sm:$0xff]
    %v138 = vld [vmem:[#allocation2 + $0x2d8] sm:$0xff]
    %v139 = vld [vmem:[#allocation2 + $0x2e0] sm:$0xff]
    %v140 = vld [vmem:[#allocation2 + $0x2e8] sm:$0xff]
    %v141 = vld [vmem:[#allocation2 + $0x2f0] sm:$0xff]
    %v142 = vld [vmem:[#allocation2 + $0x2f8] sm:$0xff]
    %v143 = vld [vmem:[#allocation2 + $0x300] sm:$0xff]
    %v144 = vld [vmem:[#allocation2 + $0x308] sm:$0xff]
    %v145 = vld [vmem:[#allocation2 + $0x310] sm:$0xff]
    %v146 = vld [vmem:[#allocation2 + $0x318] sm:$0xff]
    %v147 = vld [vmem:[#allocation2 + $0x320] sm:$0xff]
    %v148 = vld [vmem:[#allocation2 + $0x328] sm:$0xff]
    %v149 = vld [vmem:[#allocation2 + $0x330] sm:$0xff]
    %v150 = vld [vmem:[#allocation2 + $0x338] sm:$0xff]
    %v151 = vld [vmem:[#allocation2 + $0x340] sm:$0xff]
    %v152 = vld [vmem:[#allocation2 + $0x348] sm:$0xff]
    %v153 = vld [vmem:[#allocation2 + $0x350] sm:$0xff]
    %v154 = vld [vmem:[#allocation2 + $0x358] sm:$0xff]
    %v155 = vld [vmem:[#allocation2 + $0x360] sm:$0xff]
    %v156 = vld [vmem:[#allocation2 + $0x368] sm:$0xff]
    %v157 = vld [vmem:[#allocation2 + $0x370] sm:$0xff]
    %v158 = vld [vmem:[#allocation2 + $0x378] sm:$0xff]
    %v159 = vld [vmem:[#allocation2 + $0x380] sm:$0xff]
    %v160 = vld [vmem:[#allocation2 + $0x388] sm:$0xff]
    %v161 = vld [vmem:[#allocation2 + $0x390] sm:$0xff]
    %v162 = vld [vmem:[#allocation2 + $0x398] sm:$0xff]
    %v163 = vld [vmem:[#allocation2 + $0x3a0] sm:$0xff]
    %v164 = vld [vmem:[#allocation2 + $0x3a8] sm:$0xff]
    %v165 = vld [vmem:[#allocation2 + $0x3b0] sm:$0xff]
    %v166 = vld [vmem:[#allocation2 + $0x3b8] sm:$0xff]
    %v167 = vld [vmem:[#allocation2 + $0x3c0] sm:$0xff]
    %v168 = vld [vmem:[#allocation2 + $0x3c8] sm:$0xff]
    %v169 = vld [vmem:[#allocation2 + $0x3d0] sm:$0xff]
    %v170 = vld [vmem:[#allocation2 + $0x3d8] sm:$0xff]
    %v171 = vld [vmem:[#allocation2 + $0x3e0] sm:$0xff]
    %v172 = vld [vmem:[#allocation2 + $0x3e8] sm:$0xff]
    %v173 = vld [vmem:[#allocation2 + $0x3f0] sm:$0xff]
    %v174 = vld [vmem:[#allocation2 + $0x3f8] sm:$0xff]
    %v175 = vpack.c.bf16 %v49, %v47
    %v176 = vpack.c.bf16 %v50, %v48
    %v177 = vpack.c.bf16 %v53, %v51
    %v178 = vpack.c.bf16 %v54, %v52
    %v179 = vpack.c.bf16 %v57, %v55
    %v180 = vpack.c.bf16 %v58, %v56
    %v181 = vpack.c.bf16 %v61, %v59
    %v182 = vpack.c.bf16 %v62, %v60
    %v183 = vpack.c.bf16 %v65, %v63
    %v184 = vpack.c.bf16 %v66, %v64
    %v185 = vpack.c.bf16 %v69, %v67
    %v186 = vpack.c.bf16 %v70, %v68
    %v187 = vpack.c.bf16 %v73, %v71
    %v188 = vpack.c.bf16 %v74, %v72
    %v189 = vpack.c.bf16 %v77, %v75
    %v190 = vpack.c.bf16 %v78, %v76
    %v191 = vpack.c.bf16 %v81, %v79
    %v192 = vpack.c.bf16 %v82, %v80
    %v193 = vpack.c.bf16 %v85, %v83
    %v194 = vpack.c.bf16 %v86, %v84
    %v195 = vpack.c.bf16 %v89, %v87
    %v196 = vpack.c.bf16 %v90, %v88
    %v197 = vpack.c.bf16 %v93, %v91
    %v198 = vpack.c.bf16 %v94, %v92
    %v199 = vpack.c.bf16 %v97, %v95
    %v200 = vpack.c.bf16 %v98, %v96
    %v201 = vpack.c.bf16 %v101, %v99
    %v202 = vpack.c.bf16 %v102, %v100
    %v203 = vpack.c.bf16 %v105, %v103
    %v204 = vpack.c.bf16 %v106, %v104
    %v205 = vpack.c.bf16 %v109, %v107
    %v206 = vpack.c.bf16 %v110, %v108
    %v207 = vpack.c.bf16 %v113, %v111
    %v208 = vpack.c.bf16 %v114, %v112
    %v209 = vpack.c.bf16 %v117, %v115
    %v210 = vpack.c.bf16 %v118, %v116
    %v211 = vpack.c.bf16 %v121, %v119
    %v212 = vpack.c.bf16 %v122, %v120
    %v213 = vpack.c.bf16 %v125, %v123
    %v214 = vpack.c.bf16 %v126, %v124
    %v215 = vpack.c.bf16 %v129, %v127
    %v216 = vpack.c.bf16 %v130, %v128
    %v217 = vpack.c.bf16 %v133, %v131
    %v218 = vpack.c.bf16 %v134, %v132
    %v219 = vpack.c.bf16 %v137, %v135
    %v220 = vpack.c.bf16 %v138, %v136
    %v221 = vpack.c.bf16 %v141, %v139
    %v222 = vpack.c.bf16 %v142, %v140
    %v223 = vpack.c.bf16 %v145, %v143
    %v224 = vpack.c.bf16 %v146, %v144
    %v225 = vpack.c.bf16 %v149, %v147
    %v226 = vpack.c.bf16 %v150, %v148
    %v227 = vpack.c.bf16 %v153, %v151
    %v228 = vpack.c.bf16 %v154, %v152
    %v229 = vpack.c.bf16 %v157, %v155
    %v230 = vpack.c.bf16 %v158, %v156
    %v231 = vpack.c.bf16 %v161, %v159
    %v232 = vpack.c.bf16 %v162, %v160
    %v233 = vpack.c.bf16 %v165, %v163
    %v234 = vpack.c.bf16 %v166, %v164
    %v235 = vpack.c.bf16 %v169, %v167
    %v236 = vpack.c.bf16 %v170, %v168
    %v237 = vpack.c.bf16 %v173, %v171
    %v238 = vpack.c.bf16 %v174, %v172
    %v239 = vld [vmem:[#allocation5] sm:$0xff]
    %v240 = vld [vmem:[#allocation5 + $0x8] sm:$0xff]
    %v241 = vld [vmem:[#allocation5 + $0x10] sm:$0xff]
    %v242 = vld [vmem:[#allocation5 + $0x18] sm:$0xff]
    %v243 = vld [vmem:[#allocation5 + $0x20] sm:$0xff]
    %v244 = vld [vmem:[#allocation5 + $0x28] sm:$0xff]
    %v245 = vld [vmem:[#allocation5 + $0x30] sm:$0xff]
    %v246 = vld [vmem:[#allocation5 + $0x38] sm:$0xff]
    %v247 = vld [vmem:[#allocation5 + $0x40] sm:$0xff]
    %v248 = vld [vmem:[#allocation5 + $0x48] sm:$0xff]
    %v249 = vld [vmem:[#allocation5 + $0x50] sm:$0xff]
    %v250 = vld [vmem:[#allocation5 + $0x58] sm:$0xff]
    %v251 = vld [vmem:[#allocation5 + $0x60] sm:$0xff]
    %v252 = vld [vmem:[#allocation5 + $0x68] sm:$0xff]
    %v253 = vld [vmem:[#allocation5 + $0x70] sm:$0xff]
    %v254 = vld [vmem:[#allocation5 + $0x78] sm:$0xff]
    %v255 = vld [vmem:[#allocation5 + $0x80] sm:$0xff]
    %v256 = vld [vmem:[#allocation5 + $0x88] sm:$0xff]
    %v257 = vld [vmem:[#allocation5 + $0x90] sm:$0xff]
    %v258 = vld [vmem:[#allocation5 + $0x98] sm:$0xff]
    %v259 = vld [vmem:[#allocation5 + $0xa0] sm:$0xff]
    %v260 = vld [vmem:[#allocation5 + $0xa8] sm:$0xff]
    %v261 = vld [vmem:[#allocation5 + $0xb0] sm:$0xff]
    %v262 = vld [vmem:[#allocation5 + $0xb8] sm:$0xff]
    %v263 = vld [vmem:[#allocation5 + $0xc0] sm:$0xff]
    %v264 = vld [vmem:[#allocation5 + $0xc8] sm:$0xff]
    %v265 = vld [vmem:[#allocation5 + $0xd0] sm:$0xff]
    %v266 = vld [vmem:[#allocation5 + $0xd8] sm:$0xff]
    %v267 = vld [vmem:[#allocation5 + $0xe0] sm:$0xff]
    %v268 = vld [vmem:[#allocation5 + $0xe8] sm:$0xff]
    %v269 = vld [vmem:[#allocation5 + $0xf0] sm:$0xff]
    %v270 = vld [vmem:[#allocation5 + $0xf8] sm:$0xff]
    %v271 = vld [vmem:[#allocation5 + $0x100] sm:$0xff]
    %v272 = vld [vmem:[#allocation5 + $0x108] sm:$0xff]
    %v273 = vld [vmem:[#allocation5 + $0x110] sm:$0xff]
    %v274 = vld [vmem:[#allocation5 + $0x118] sm:$0xff]
    %v275 = vld [vmem:[#allocation5 + $0x120] sm:$0xff]
    %v276 = vld [vmem:[#allocation5 + $0x128] sm:$0xff]
    %v277 = vld [vmem:[#allocation5 + $0x130] sm:$0xff]
    %v278 = vld [vmem:[#allocation5 + $0x138] sm:$0xff]
    %v279 = vld [vmem:[#allocation5 + $0x140] sm:$0xff]
    %v280 = vld [vmem:[#allocation5 + $0x148] sm:$0xff]
    %v281 = vld [vmem:[#allocation5 + $0x150] sm:$0xff]
    %v282 = vld [vmem:[#allocation5 + $0x158] sm:$0xff]
    %v283 = vld [vmem:[#allocation5 + $0x160] sm:$0xff]
    %v284 = vld [vmem:[#allocation5 + $0x168] sm:$0xff]
    %v285 = vld [vmem:[#allocation5 + $0x170] sm:$0xff]
    %v286 = vld [vmem:[#allocation5 + $0x178] sm:$0xff]
    %v287 = vld [vmem:[#allocation5 + $0x180] sm:$0xff]
    %v288 = vld [vmem:[#allocation5 + $0x188] sm:$0xff]
    %v289 = vld [vmem:[#allocation5 + $0x190] sm:$0xff]
    %v290 = vld [vmem:[#allocation5 + $0x198] sm:$0xff]
    %v291 = vld [vmem:[#allocation5 + $0x1a0] sm:$0xff]
    %v292 = vld [vmem:[#allocation5 + $0x1a8] sm:$0xff]
    %v293 = vld [vmem:[#allocation5 + $0x1b0] sm:$0xff]
    %v294 = vld [vmem:[#allocation5 + $0x1b8] sm:$0xff]
    %v295 = vld [vmem:[#allocation5 + $0x1c0] sm:$0xff]
    %v296 = vld [vmem:[#allocation5 + $0x1c8] sm:$0xff]
    %v297 = vld [vmem:[#allocation5 + $0x1d0] sm:$0xff]
    %v298 = vld [vmem:[#allocation5 + $0x1d8] sm:$0xff]
    %v299 = vld [vmem:[#allocation5 + $0x1e0] sm:$0xff]
    %v300 = vld [vmem:[#allocation5 + $0x1e8] sm:$0xff]
    %v301 = vld [vmem:[#allocation5 + $0x1f0] sm:$0xff]
    %v302 = vld [vmem:[#allocation5 + $0x1f8] sm:$0xff]
    %v303 = vld [vmem:[#allocation5 + $0x200] sm:$0xff]
    %v304 = vld [vmem:[#allocation5 + $0x208] sm:$0xff]
    %v305 = vld [vmem:[#allocation5 + $0x210] sm:$0xff]
    %v306 = vld [vmem:[#allocation5 + $0x218] sm:$0xff]
    %v307 = vld [vmem:[#allocation5 + $0x220] sm:$0xff]
    %v308 = vld [vmem:[#allocation5 + $0x228] sm:$0xff]
    %v309 = vld [vmem:[#allocation5 + $0x230] sm:$0xff]
    %v310 = vld [vmem:[#allocation5 + $0x238] sm:$0xff]
    %v311 = vld [vmem:[#allocation5 + $0x240] sm:$0xff]
    %v312 = vld [vmem:[#allocation5 + $0x248] sm:$0xff]
    %v313 = vld [vmem:[#allocation5 + $0x250] sm:$0xff]
    %v314 = vld [vmem:[#allocation5 + $0x258] sm:$0xff]
    %v315 = vld [vmem:[#allocation5 + $0x260] sm:$0xff]
    %v316 = vld [vmem:[#allocation5 + $0x268] sm:$0xff]
    %v317 = vld [vmem:[#allocation5 + $0x270] sm:$0xff]
    %v318 = vld [vmem:[#allocation5 + $0x278] sm:$0xff]
    %v319 = vld [vmem:[#allocation5 + $0x280] sm:$0xff]
    %v320 = vld [vmem:[#allocation5 + $0x288] sm:$0xff]
    %v321 = vld [vmem:[#allocation5 + $0x290] sm:$0xff]
    %v322 = vld [vmem:[#allocation5 + $0x298] sm:$0xff]
    %v323 = vld [vmem:[#allocation5 + $0x2a0] sm:$0xff]
    %v324 = vld [vmem:[#allocation5 + $0x2a8] sm:$0xff]
    %v325 = vld [vmem:[#allocation5 + $0x2b0] sm:$0xff]
    %v326 = vld [vmem:[#allocation5 + $0x2b8] sm:$0xff]
    %v327 = vld [vmem:[#allocation5 + $0x2c0] sm:$0xff]
    %v328 = vld [vmem:[#allocation5 + $0x2c8] sm:$0xff]
    %v329 = vld [vmem:[#allocation5 + $0x2d0] sm:$0xff]
    %v330 = vld [vmem:[#allocation5 + $0x2d8] sm:$0xff]
    %v331 = vld [vmem:[#allocation5 + $0x2e0] sm:$0xff]
    %v332 = vld [vmem:[#allocation5 + $0x2e8] sm:$0xff]
    %v333 = vld [vmem:[#allocation5 + $0x2f0] sm:$0xff]
    %v334 = vld [vmem:[#allocation5 + $0x2f8] sm:$0xff]
    %v335 = vld [vmem:[#allocation5 + $0x300] sm:$0xff]
    %v336 = vld [vmem:[#allocation5 + $0x308] sm:$0xff]
    %v337 = vld [vmem:[#allocation5 + $0x310] sm:$0xff]
    %v338 = vld [vmem:[#allocation5 + $0x318] sm:$0xff]
    %v339 = vld [vmem:[#allocation5 + $0x320] sm:$0xff]
    %v340 = vld [vmem:[#allocation5 + $0x328] sm:$0xff]
    %v341 = vld [vmem:[#allocation5 + $0x330] sm:$0xff]
    %v342 = vld [vmem:[#allocation5 + $0x338] sm:$0xff]
    %v343 = vld [vmem:[#allocation5 + $0x340] sm:$0xff]
    %v344 = vld [vmem:[#allocation5 + $0x348] sm:$0xff]
    %v345 = vld [vmem:[#allocation5 + $0x350] sm:$0xff]
    %v346 = vld [vmem:[#allocation5 + $0x358] sm:$0xff]
    %v347 = vld [vmem:[#allocation5 + $0x360] sm:$0xff]
    %v348 = vld [vmem:[#allocation5 + $0x368] sm:$0xff]
    %v349 = vld [vmem:[#allocation5 + $0x370] sm:$0xff]
    %v350 = vld [vmem:[#allocation5 + $0x378] sm:$0xff]
    %v351 = vld [vmem:[#allocation5 + $0x380] sm:$0xff]
    %v352 = vld [vmem:[#allocation5 + $0x388] sm:$0xff]
    %v353 = vld [vmem:[#allocation5 + $0x390] sm:$0xff]
    %v354 = vld [vmem:[#allocation5 + $0x398] sm:$0xff]
    %v355 = vld [vmem:[#allocation5 + $0x3a0] sm:$0xff]
    %v356 = vld [vmem:[#allocation5 + $0x3a8] sm:$0xff]
    %v357 = vld [vmem:[#allocation5 + $0x3b0] sm:$0xff]
    %v358 = vld [vmem:[#allocation5 + $0x3b8] sm:$0xff]
    %v359 = vld [vmem:[#allocation5 + $0x3c0] sm:$0xff]
    %v360 = vld [vmem:[#allocation5 + $0x3c8] sm:$0xff]
    %v361 = vld [vmem:[#allocation5 + $0x3d0] sm:$0xff]
    %v362 = vld [vmem:[#allocation5 + $0x3d8] sm:$0xff]
    %v363 = vld [vmem:[#allocation5 + $0x3e0] sm:$0xff]
    %v364 = vld [vmem:[#allocation5 + $0x3e8] sm:$0xff]
    %v365 = vld [vmem:[#allocation5 + $0x3f0] sm:$0xff]
    %v366 = vld [vmem:[#allocation5 + $0x3f8] sm:$0xff]
    %v367 = vld [vmem:[#allocation5 + $0x400] sm:$0xff]
    %v368 = vld [vmem:[#allocation5 + $0x408] sm:$0xff]
    %v369 = vld [vmem:[#allocation5 + $0x410] sm:$0xff]
    %v370 = vld [vmem:[#allocation5 + $0x418] sm:$0xff]
    %v371 = vld [vmem:[#allocation5 + $0x420] sm:$0xff]
    %v372 = vld [vmem:[#allocation5 + $0x428] sm:$0xff]
    %v373 = vld [vmem:[#allocation5 + $0x430] sm:$0xff]
    %v374 = vld [vmem:[#allocation5 + $0x438] sm:$0xff]
    %v375 = vld [vmem:[#allocation5 + $0x440] sm:$0xff]
    %v376 = vld [vmem:[#allocation5 + $0x448] sm:$0xff]
    %v377 = vld [vmem:[#allocation5 + $0x450] sm:$0xff]
    %v378 = vld [vmem:[#allocation5 + $0x458] sm:$0xff]
    %v379 = vld [vmem:[#allocation5 + $0x460] sm:$0xff]
    %v380 = vld [vmem:[#allocation5 + $0x468] sm:$0xff]
    %v381 = vld [vmem:[#allocation5 + $0x470] sm:$0xff]
    %v382 = vld [vmem:[#allocation5 + $0x478] sm:$0xff]
    %v383 = vld [vmem:[#allocation5 + $0x480] sm:$0xff]
    %v384 = vld [vmem:[#allocation5 + $0x488] sm:$0xff]
    %v385 = vld [vmem:[#allocation5 + $0x490] sm:$0xff]
    %v386 = vld [vmem:[#allocation5 + $0x498] sm:$0xff]
    %v387 = vld [vmem:[#allocation5 + $0x4a0] sm:$0xff]
    %v388 = vld [vmem:[#allocation5 + $0x4a8] sm:$0xff]
    %v389 = vld [vmem:[#allocation5 + $0x4b0] sm:$0xff]
    %v390 = vld [vmem:[#allocation5 + $0x4b8] sm:$0xff]
    %v391 = vld [vmem:[#allocation5 + $0x4c0] sm:$0xff]
    %v392 = vld [vmem:[#allocation5 + $0x4c8] sm:$0xff]
    %v393 = vld [vmem:[#allocation5 + $0x4d0] sm:$0xff]
    %v394 = vld [vmem:[#allocation5 + $0x4d8] sm:$0xff]
    %v395 = vld [vmem:[#allocation5 + $0x4e0] sm:$0xff]
    %v396 = vld [vmem:[#allocation5 + $0x4e8] sm:$0xff]
    %v397 = vld [vmem:[#allocation5 + $0x4f0] sm:$0xff]
    %v398 = vld [vmem:[#allocation5 + $0x4f8] sm:$0xff]
    %v399 = vld [vmem:[#allocation5 + $0x500] sm:$0xff]
    %v400 = vld [vmem:[#allocation5 + $0x508] sm:$0xff]
    %v401 = vld [vmem:[#allocation5 + $0x510] sm:$0xff]
    %v402 = vld [vmem:[#allocation5 + $0x518] sm:$0xff]
    %v403 = vld [vmem:[#allocation5 + $0x520] sm:$0xff]
    %v404 = vld [vmem:[#allocation5 + $0x528] sm:$0xff]
    %v405 = vld [vmem:[#allocation5 + $0x530] sm:$0xff]
    %v406 = vld [vmem:[#allocation5 + $0x538] sm:$0xff]
    %v407 = vld [vmem:[#allocation5 + $0x540] sm:$0xff]
    %v408 = vld [vmem:[#allocation5 + $0x548] sm:$0xff]
    %v409 = vld [vmem:[#allocation5 + $0x550] sm:$0xff]
    %v410 = vld [vmem:[#allocation5 + $0x558] sm:$0xff]
    %v411 = vld [vmem:[#allocation5 + $0x560] sm:$0xff]
    %v412 = vld [vmem:[#allocation5 + $0x568] sm:$0xff]
    %v413 = vld [vmem:[#allocation5 + $0x570] sm:$0xff]
    %v414 = vld [vmem:[#allocation5 + $0x578] sm:$0xff]
    %v415 = vld [vmem:[#allocation5 + $0x580] sm:$0xff]
    %v416 = vld [vmem:[#allocation5 + $0x588] sm:$0xff]
    %v417 = vld [vmem:[#allocation5 + $0x590] sm:$0xff]
    %v418 = vld [vmem:[#allocation5 + $0x598] sm:$0xff]
    %v419 = vld [vmem:[#allocation5 + $0x5a0] sm:$0xff]
    %v420 = vld [vmem:[#allocation5 + $0x5a8] sm:$0xff]
    %v421 = vld [vmem:[#allocation5 + $0x5b0] sm:$0xff]
    %v422 = vld [vmem:[#allocation5 + $0x5b8] sm:$0xff]
    %v423 = vld [vmem:[#allocation5 + $0x5c0] sm:$0xff]
    %v424 = vld [vmem:[#allocation5 + $0x5c8] sm:$0xff]
    %v425 = vld [vmem:[#allocation5 + $0x5d0] sm:$0xff]
    %v426 = vld [vmem:[#allocation5 + $0x5d8] sm:$0xff]
    %v427 = vld [vmem:[#allocation5 + $0x5e0] sm:$0xff]
    %v428 = vld [vmem:[#allocation5 + $0x5e8] sm:$0xff]
    %v429 = vld [vmem:[#allocation5 + $0x5f0] sm:$0xff]
    %v430 = vld [vmem:[#allocation5 + $0x5f8] sm:$0xff]
    %v623 = vunpack.c.l.b16 %v239
    %v624 = vunpack.c.h.b16 %v239
    %v625 = vunpack.c.l.b16 %v240
    %v626 = vunpack.c.h.b16 %v240
    %v627 = vunpack.c.l.b16 %v241
    %v628 = vunpack.c.h.b16 %v241
    %v629 = vunpack.c.l.b16 %v242
    %v630 = vunpack.c.h.b16 %v242
    %v631 = vunpack.c.l.b16 %v243
    %v632 = vunpack.c.h.b16 %v243
    %v633 = vunpack.c.l.b16 %v244
    %v634 = vunpack.c.h.b16 %v244
    %v635 = vunpack.c.l.b16 %v245
    %v636 = vunpack.c.h.b16 %v245
    %v637 = vunpack.c.l.b16 %v246
    %v638 = vunpack.c.h.b16 %v246
    %v639 = vunpack.c.l.b16 %v247
    %v640 = vunpack.c.h.b16 %v247
    %v641 = vunpack.c.l.b16 %v248
    %v642 = vunpack.c.h.b16 %v248
    %v643 = vunpack.c.l.b16 %v249
    %v644 = vunpack.c.h.b16 %v249
    %v645 = vunpack.c.l.b16 %v250
    %v646 = vunpack.c.h.b16 %v250
    %v647 = vunpack.c.l.b16 %v251
    %v648 = vunpack.c.h.b16 %v251
    %v649 = vunpack.c.l.b16 %v252
    %v650 = vunpack.c.h.b16 %v252
    %v651 = vunpack.c.l.b16 %v253
    %v652 = vunpack.c.h.b16 %v253
    %v653 = vunpack.c.l.b16 %v254
    %v654 = vunpack.c.h.b16 %v254
    %v655 = vunpack.c.l.b16 %v255
    %v656 = vunpack.c.h.b16 %v255
    %v657 = vunpack.c.l.b16 %v256
    %v658 = vunpack.c.h.b16 %v256
    %v659 = vunpack.c.l.b16 %v257
    %v660 = vunpack.c.h.b16 %v257
    %v661 = vunpack.c.l.b16 %v258
    %v662 = vunpack.c.h.b16 %v258
    %v663 = vunpack.c.l.b16 %v259
    %v664 = vunpack.c.h.b16 %v259
    %v665 = vunpack.c.l.b16 %v260
    %v666 = vunpack.c.h.b16 %v260
    %v667 = vunpack.c.l.b16 %v261
    %v668 = vunpack.c.h.b16 %v261
    %v669 = vunpack.c.l.b16 %v262
    %v670 = vunpack.c.h.b16 %v262
    %v671 = vunpack.c.l.b16 %v263
    %v672 = vunpack.c.h.b16 %v263
    %v673 = vunpack.c.l.b16 %v264
    %v674 = vunpack.c.h.b16 %v264
    %v675 = vunpack.c.l.b16 %v265
    %v676 = vunpack.c.h.b16 %v265
    %v677 = vunpack.c.l.b16 %v266
    %v678 = vunpack.c.h.b16 %v266
    %v679 = vunpack.c.l.b16 %v267
    %v680 = vunpack.c.h.b16 %v267
    %v681 = vunpack.c.l.b16 %v268
    %v682 = vunpack.c.h.b16 %v268
    %v683 = vunpack.c.l.b16 %v269
    %v684 = vunpack.c.h.b16 %v269
    %v685 = vunpack.c.l.b16 %v270
    %v686 = vunpack.c.h.b16 %v270
    %v687 = vunpack.c.l.b16 %v271
    %v688 = vunpack.c.h.b16 %v271
    %v689 = vunpack.c.l.b16 %v272
    %v690 = vunpack.c.h.b16 %v272
    %v691 = vunpack.c.l.b16 %v273
    %v692 = vunpack.c.h.b16 %v273
    %v693 = vunpack.c.l.b16 %v274
    %v694 = vunpack.c.h.b16 %v274
    %v695 = vunpack.c.l.b16 %v275
    %v696 = vunpack.c.h.b16 %v275
    %v697 = vunpack.c.l.b16 %v276
    %v698 = vunpack.c.h.b16 %v276
    %v699 = vunpack.c.l.b16 %v277
    %v700 = vunpack.c.h.b16 %v277
    %v701 = vunpack.c.l.b16 %v278
    %v702 = vunpack.c.h.b16 %v278
    %v703 = vunpack.c.l.b16 %v279
    %v704 = vunpack.c.h.b16 %v279
    %v705 = vunpack.c.l.b16 %v280
    %v706 = vunpack.c.h.b16 %v280
    %v707 = vunpack.c.l.b16 %v281
    %v708 = vunpack.c.h.b16 %v281
    %v709 = vunpack.c.l.b16 %v282
    %v710 = vunpack.c.h.b16 %v282
    %v711 = vunpack.c.l.b16 %v283
    %v712 = vunpack.c.h.b16 %v283
    %v713 = vunpack.c.l.b16 %v284
    %v714 = vunpack.c.h.b16 %v284
    %v715 = vunpack.c.l.b16 %v285
    %v716 = vunpack.c.h.b16 %v285
    %v717 = vunpack.c.l.b16 %v286
    %v718 = vunpack.c.h.b16 %v286
    %v719 = vunpack.c.l.b16 %v287
    %v720 = vunpack.c.h.b16 %v287
    %v721 = vunpack.c.l.b16 %v288
    %v722 = vunpack.c.h.b16 %v288
    %v723 = vunpack.c.l.b16 %v289
    %v724 = vunpack.c.h.b16 %v289
    %v725 = vunpack.c.l.b16 %v290
    %v726 = vunpack.c.h.b16 %v290
    %v727 = vunpack.c.l.b16 %v291
    %v728 = vunpack.c.h.b16 %v291
    %v729 = vunpack.c.l.b16 %v292
    %v730 = vunpack.c.h.b16 %v292
    %v731 = vunpack.c.l.b16 %v293
    %v732 = vunpack.c.h.b16 %v293
    %v733 = vunpack.c.l.b16 %v294
    %v734 = vunpack.c.h.b16 %v294
    %v735 = vunpack.c.l.b16 %v295
    %v736 = vunpack.c.h.b16 %v295
    %v737 = vunpack.c.l.b16 %v296
    %v738 = vunpack.c.h.b16 %v296
    %v739 = vunpack.c.l.b16 %v297
    %v740 = vunpack.c.h.b16 %v297
    %v741 = vunpack.c.l.b16 %v298
    %v742 = vunpack.c.h.b16 %v298
    %v743 = vunpack.c.l.b16 %v299
    %v744 = vunpack.c.h.b16 %v299
    %v745 = vunpack.c.l.b16 %v300
    %v746 = vunpack.c.h.b16 %v300
    %v747 = vunpack.c.l.b16 %v301
    %v748 = vunpack.c.h.b16 %v301
    %v749 = vunpack.c.l.b16 %v302
    %v750 = vunpack.c.h.b16 %v302
    %v751 = vunpack.c.l.b16 %v303
    %v752 = vunpack.c.h.b16 %v303
    %v753 = vunpack.c.l.b16 %v304
    %v754 = vunpack.c.h.b16 %v304
    %v755 = vunpack.c.l.b16 %v305
    %v756 = vunpack.c.h.b16 %v305
    %v757 = vunpack.c.l.b16 %v306
    %v758 = vunpack.c.h.b16 %v306
    %v759 = vunpack.c.l.b16 %v307
    %v760 = vunpack.c.h.b16 %v307
    %v761 = vunpack.c.l.b16 %v308
    %v762 = vunpack.c.h.b16 %v308
    %v763 = vunpack.c.l.b16 %v309
    %v764 = vunpack.c.h.b16 %v309
    %v765 = vunpack.c.l.b16 %v310
    %v766 = vunpack.c.h.b16 %v310
    %v767 = vunpack.c.l.b16 %v311
    %v768 = vunpack.c.h.b16 %v311
    %v769 = vunpack.c.l.b16 %v312
    %v770 = vunpack.c.h.b16 %v312
    %v771 = vunpack.c.l.b16 %v313
    %v772 = vunpack.c.h.b16 %v313
    %v773 = vunpack.c.l.b16 %v314
    %v774 = vunpack.c.h.b16 %v314
    %v775 = vunpack.c.l.b16 %v315
    %v776 = vunpack.c.h.b16 %v315
    %v777 = vunpack.c.l.b16 %v316
    %v778 = vunpack.c.h.b16 %v316
    %v779 = vunpack.c.l.b16 %v317
    %v780 = vunpack.c.h.b16 %v317
    %v781 = vunpack.c.l.b16 %v318
    %v782 = vunpack.c.h.b16 %v318
    %v783 = vunpack.c.l.b16 %v319
    %v784 = vunpack.c.h.b16 %v319
    %v785 = vunpack.c.l.b16 %v320
    %v786 = vunpack.c.h.b16 %v320
    %v787 = vunpack.c.l.b16 %v321
    %v788 = vunpack.c.h.b16 %v321
    %v789 = vunpack.c.l.b16 %v322
    %v790 = vunpack.c.h.b16 %v322
    %v791 = vunpack.c.l.b16 %v323
    %v792 = vunpack.c.h.b16 %v323
    %v793 = vunpack.c.l.b16 %v324
    %v794 = vunpack.c.h.b16 %v324
    %v795 = vunpack.c.l.b16 %v325
    %v796 = vunpack.c.h.b16 %v325
    %v797 = vunpack.c.l.b16 %v326
    %v798 = vunpack.c.h.b16 %v326
    %v799 = vunpack.c.l.b16 %v327
    %v800 = vunpack.c.h.b16 %v327
    %v801 = vunpack.c.l.b16 %v328
    %v802 = vunpack.c.h.b16 %v328
    %v803 = vunpack.c.l.b16 %v329
    %v804 = vunpack.c.h.b16 %v329
    %v805 = vunpack.c.l.b16 %v330
    %v806 = vunpack.c.h.b16 %v330
    %v807 = vunpack.c.l.b16 %v331
    %v808 = vunpack.c.h.b16 %v331
    %v809 = vunpack.c.l.b16 %v332
    %v810 = vunpack.c.h.b16 %v332
    %v811 = vunpack.c.l.b16 %v333
    %v812 = vunpack.c.h.b16 %v333
    %v813 = vunpack.c.l.b16 %v334
    %v814 = vunpack.c.h.b16 %v334
    %v815 = vunpack.c.l.b16 %v335
    %v816 = vunpack.c.h.b16 %v335
    %v817 = vunpack.c.l.b16 %v336
    %v818 = vunpack.c.h.b16 %v336
    %v819 = vunpack.c.l.b16 %v337
    %v820 = vunpack.c.h.b16 %v337
    %v821 = vunpack.c.l.b16 %v338
    %v822 = vunpack.c.h.b16 %v338
    %v823 = vunpack.c.l.b16 %v339
    %v824 = vunpack.c.h.b16 %v339
    %v825 = vunpack.c.l.b16 %v340
    %v826 = vunpack.c.h.b16 %v340
    %v827 = vunpack.c.l.b16 %v341
    %v828 = vunpack.c.h.b16 %v341
    %v829 = vunpack.c.l.b16 %v342
    %v830 = vunpack.c.h.b16 %v342
    %v831 = vunpack.c.l.b16 %v343
    %v832 = vunpack.c.h.b16 %v343
    %v833 = vunpack.c.l.b16 %v344
    %v834 = vunpack.c.h.b16 %v344
    %v835 = vunpack.c.l.b16 %v345
    %v836 = vunpack.c.h.b16 %v345
    %v837 = vunpack.c.l.b16 %v346
    %v838 = vunpack.c.h.b16 %v346
    %v839 = vunpack.c.l.b16 %v347
    %v840 = vunpack.c.h.b16 %v347
    %v841 = vunpack.c.l.b16 %v348
    %v842 = vunpack.c.h.b16 %v348
    %v843 = vunpack.c.l.b16 %v349
    %v844 = vunpack.c.h.b16 %v349
    %v845 = vunpack.c.l.b16 %v350
    %v846 = vunpack.c.h.b16 %v350
    %v847 = vunpack.c.l.b16 %v351
    %v848 = vunpack.c.h.b16 %v351
    %v849 = vunpack.c.l.b16 %v352
    %v850 = vunpack.c.h.b16 %v352
    %v851 = vunpack.c.l.b16 %v353
    %v852 = vunpack.c.h.b16 %v353
    %v853 = vunpack.c.l.b16 %v354
    %v854 = vunpack.c.h.b16 %v354
    %v855 = vunpack.c.l.b16 %v355
    %v856 = vunpack.c.h.b16 %v355
    %v857 = vunpack.c.l.b16 %v356
    %v858 = vunpack.c.h.b16 %v356
    %v859 = vunpack.c.l.b16 %v357
    %v860 = vunpack.c.h.b16 %v357
    %v861 = vunpack.c.l.b16 %v358
    %v862 = vunpack.c.h.b16 %v358
    %v863 = vunpack.c.l.b16 %v359
    %v864 = vunpack.c.h.b16 %v359
    %v865 = vunpack.c.l.b16 %v360
    %v866 = vunpack.c.h.b16 %v360
    %v867 = vunpack.c.l.b16 %v361
    %v868 = vunpack.c.h.b16 %v361
    %v869 = vunpack.c.l.b16 %v362
    %v870 = vunpack.c.h.b16 %v362
    %v871 = vunpack.c.l.b16 %v363
    %v872 = vunpack.c.h.b16 %v363
    %v873 = vunpack.c.l.b16 %v364
    %v874 = vunpack.c.h.b16 %v364
    %v875 = vunpack.c.l.b16 %v365
    %v876 = vunpack.c.h.b16 %v365
    %v877 = vunpack.c.l.b16 %v366
    %v878 = vunpack.c.h.b16 %v366
    %v879 = vunpack.c.l.b16 %v367
    %v880 = vunpack.c.h.b16 %v367
    %v881 = vunpack.c.l.b16 %v368
    %v882 = vunpack.c.h.b16 %v368
    %v883 = vunpack.c.l.b16 %v369
    %v884 = vunpack.c.h.b16 %v369
    %v885 = vunpack.c.l.b16 %v370
    %v886 = vunpack.c.h.b16 %v370
    %v887 = vunpack.c.l.b16 %v371
    %v888 = vunpack.c.h.b16 %v371
    %v889 = vunpack.c.l.b16 %v372
    %v890 = vunpack.c.h.b16 %v372
    %v891 = vunpack.c.l.b16 %v373
    %v892 = vunpack.c.h.b16 %v373
    %v893 = vunpack.c.l.b16 %v374
    %v894 = vunpack.c.h.b16 %v374
    %v895 = vunpack.c.l.b16 %v375
    %v896 = vunpack.c.h.b16 %v375
    %v897 = vunpack.c.l.b16 %v376
    %v898 = vunpack.c.h.b16 %v376
    %v899 = vunpack.c.l.b16 %v377
    %v900 = vunpack.c.h.b16 %v377
    %v901 = vunpack.c.l.b16 %v378
    %v902 = vunpack.c.h.b16 %v378
    %v903 = vunpack.c.l.b16 %v379
    %v904 = vunpack.c.h.b16 %v379
    %v905 = vunpack.c.l.b16 %v380
    %v906 = vunpack.c.h.b16 %v380
    %v907 = vunpack.c.l.b16 %v381
    %v908 = vunpack.c.h.b16 %v381
    %v909 = vunpack.c.l.b16 %v382
    %v910 = vunpack.c.h.b16 %v382
    %v911 = vunpack.c.l.b16 %v383
    %v912 = vunpack.c.h.b16 %v383
    %v913 = vunpack.c.l.b16 %v384
    %v914 = vunpack.c.h.b16 %v384
    %v915 = vunpack.c.l.b16 %v385
    %v916 = vunpack.c.h.b16 %v385
    %v917 = vunpack.c.l.b16 %v386
    %v918 = vunpack.c.h.b16 %v386
    %v919 = vunpack.c.l.b16 %v387
    %v920 = vunpack.c.h.b16 %v387
    %v921 = vunpack.c.l.b16 %v388
    %v922 = vunpack.c.h.b16 %v388
    %v923 = vunpack.c.l.b16 %v389
    %v924 = vunpack.c.h.b16 %v389
    %v925 = vunpack.c.l.b16 %v390
    %v926 = vunpack.c.h.b16 %v390
    %v927 = vunpack.c.l.b16 %v391
    %v928 = vunpack.c.h.b16 %v391
    %v929 = vunpack.c.l.b16 %v392
    %v930 = vunpack.c.h.b16 %v392
    %v931 = vunpack.c.l.b16 %v393
    %v932 = vunpack.c.h.b16 %v393
    %v933 = vunpack.c.l.b16 %v394
    %v934 = vunpack.c.h.b16 %v394
    %v935 = vunpack.c.l.b16 %v395
    %v936 = vunpack.c.h.b16 %v395
    %v937 = vunpack.c.l.b16 %v396
    %v938 = vunpack.c.h.b16 %v396
    %v939 = vunpack.c.l.b16 %v397
    %v940 = vunpack.c.h.b16 %v397
    %v941 = vunpack.c.l.b16 %v398
    %v942 = vunpack.c.h.b16 %v398
    %v943 = vunpack.c.l.b16 %v399
    %v944 = vunpack.c.h.b16 %v399
    %v945 = vunpack.c.l.b16 %v400
    %v946 = vunpack.c.h.b16 %v400
    %v947 = vunpack.c.l.b16 %v401
    %v948 = vunpack.c.h.b16 %v401
    %v949 = vunpack.c.l.b16 %v402
    %v950 = vunpack.c.h.b16 %v402
    %v951 = vunpack.c.l.b16 %v403
    %v952 = vunpack.c.h.b16 %v403
    %v953 = vunpack.c.l.b16 %v404
    %v954 = vunpack.c.h.b16 %v404
    %v955 = vunpack.c.l.b16 %v405
    %v956 = vunpack.c.h.b16 %v405
    %v957 = vunpack.c.l.b16 %v406
    %v958 = vunpack.c.h.b16 %v406
    %v959 = vunpack.c.l.b16 %v407
    %v960 = vunpack.c.h.b16 %v407
    %v961 = vunpack.c.l.b16 %v408
    %v962 = vunpack.c.h.b16 %v408
    %v963 = vunpack.c.l.b16 %v409
    %v964 = vunpack.c.h.b16 %v409
    %v965 = vunpack.c.l.b16 %v410
    %v966 = vunpack.c.h.b16 %v410
    %v967 = vunpack.c.l.b16 %v411
    %v968 = vunpack.c.h.b16 %v411
    %v969 = vunpack.c.l.b16 %v412
    %v970 = vunpack.c.h.b16 %v412
    %v971 = vunpack.c.l.b16 %v413
    %v972 = vunpack.c.h.b16 %v413
    %v973 = vunpack.c.l.b16 %v414
    %v974 = vunpack.c.h.b16 %v414
    %v975 = vunpack.c.l.b16 %v415
    %v976 = vunpack.c.h.b16 %v415
    %v977 = vunpack.c.l.b16 %v416
    %v978 = vunpack.c.h.b16 %v416
    %v979 = vunpack.c.l.b16 %v417
    %v980 = vunpack.c.h.b16 %v417
    %v981 = vunpack.c.l.b16 %v418
    %v982 = vunpack.c.h.b16 %v418
    %v983 = vunpack.c.l.b16 %v419
    %v984 = vunpack.c.h.b16 %v419
    %v985 = vunpack.c.l.b16 %v420
    %v986 = vunpack.c.h.b16 %v420
    %v987 = vunpack.c.l.b16 %v421
    %v988 = vunpack.c.h.b16 %v421
    %v989 = vunpack.c.l.b16 %v422
    %v990 = vunpack.c.h.b16 %v422
    %v991 = vunpack.c.l.b16 %v423
    %v992 = vunpack.c.h.b16 %v423
    %v993 = vunpack.c.l.b16 %v424
    %v994 = vunpack.c.h.b16 %v424
    %v995 = vunpack.c.l.b16 %v425
    %v996 = vunpack.c.h.b16 %v425
    %v997 = vunpack.c.l.b16 %v426
    %v998 = vunpack.c.h.b16 %v426
    %v999 = vunpack.c.l.b16 %v427
    %v1000 = vunpack.c.h.b16 %v427
    %v1001 = vunpack.c.l.b16 %v428
    %v1002 = vunpack.c.h.b16 %v428
    %v1003 = vunpack.c.l.b16 %v429
    %v1004 = vunpack.c.h.b16 %v429
    %v1005 = vunpack.c.l.b16 %v430
    %v1006 = vunpack.c.h.b16 %v430
    %v1007 = vpack.c.b16 %v635, %v623
    %v1008 = vpack.c.b16 %v636, %v624
    %v1009 = vpack.c.b16 %v637, %v625
    %v1010 = vpack.c.b16 %v638, %v626
    %v1011 = vpack.c.b16 %v639, %v627
    %v1012 = vpack.c.b16 %v640, %v628
    %v1013 = vpack.c.b16 %v641, %v629
    %v1014 = vpack.c.b16 %v642, %v630
    %v1015 = vpack.c.b16 %v643, %v631
    %v1016 = vpack.c.b16 %v644, %v632
    %v1017 = vpack.c.b16 %v645, %v633
    %v1018 = vpack.c.b16 %v646, %v634
    %v1019 = vpack.c.b16 %v659, %v647
    %v1020 = vpack.c.b16 %v660, %v648
    %v1021 = vpack.c.b16 %v661, %v649
    %v1022 = vpack.c.b16 %v662, %v650
    %v1023 = vpack.c.b16 %v663, %v651
    %v1024 = vpack.c.b16 %v664, %v652
    %v1025 = vpack.c.b16 %v665, %v653
    %v1026 = vpack.c.b16 %v666, %v654
    %v1027 = vpack.c.b16 %v667, %v655
    %v1028 = vpack.c.b16 %v668, %v656
    %v1029 = vpack.c.b16 %v669, %v657
    %v1030 = vpack.c.b16 %v670, %v658
    %v1031 = vpack.c.b16 %v683, %v671
    %v1032 = vpack.c.b16 %v684, %v672
    %v1033 = vpack.c.b16 %v685, %v673
    %v1034 = vpack.c.b16 %v686, %v674
    %v1035 = vpack.c.b16 %v687, %v675
    %v1036 = vpack.c.b16 %v688, %v676
    %v1037 = vpack.c.b16 %v689, %v677
    %v1038 = vpack.c.b16 %v690, %v678
    %v1039 = vpack.c.b16 %v691, %v679
    %v1040 = vpack.c.b16 %v692, %v680
    %v1041 = vpack.c.b16 %v693, %v681
    %v1042 = vpack.c.b16 %v694, %v682
    %v1043 = vpack.c.b16 %v707, %v695
    %v1044 = vpack.c.b16 %v708, %v696
    %v1045 = vpack.c.b16 %v709, %v697
    %v1046 = vpack.c.b16 %v710, %v698
    %v1047 = vpack.c.b16 %v711, %v699
    %v1048 = vpack.c.b16 %v712, %v700
    %v1049 = vpack.c.b16 %v713, %v701
    %v1050 = vpack.c.b16 %v714, %v702
    %v1051 = vpack.c.b16 %v715, %v703
    %v1052 = vpack.c.b16 %v716, %v704
    %v1053 = vpack.c.b16 %v717, %v705
    %v1054 = vpack.c.b16 %v718, %v706
    %v1055 = vpack.c.b16 %v731, %v719
    %v1056 = vpack.c.b16 %v732, %v720
    %v1057 = vpack.c.b16 %v733, %v721
    %v1058 = vpack.c.b16 %v734, %v722
    %v1059 = vpack.c.b16 %v735, %v723
    %v1060 = vpack.c.b16 %v736, %v724
    %v1061 = vpack.c.b16 %v737, %v725
    %v1062 = vpack.c.b16 %v738, %v726
    %v1063 = vpack.c.b16 %v739, %v727
    %v1064 = vpack.c.b16 %v740, %v728
    %v1065 = vpack.c.b16 %v741, %v729
    %v1066 = vpack.c.b16 %v742, %v730
    %v1067 = vpack.c.b16 %v755, %v743
    %v1068 = vpack.c.b16 %v756, %v744
    %v1069 = vpack.c.b16 %v757, %v745
    %v1070 = vpack.c.b16 %v758, %v746
    %v1071 = vpack.c.b16 %v759, %v747
    %v1072 = vpack.c.b16 %v760, %v748
    %v1073 = vpack.c.b16 %v761, %v749
    %v1074 = vpack.c.b16 %v762, %v750
    %v1075 = vpack.c.b16 %v763, %v751
    %v1076 = vpack.c.b16 %v764, %v752
    %v1077 = vpack.c.b16 %v765, %v753
    %v1078 = vpack.c.b16 %v766, %v754
    %v1079 = vpack.c.b16 %v779, %v767
    %v1080 = vpack.c.b16 %v780, %v768
    %v1081 = vpack.c.b16 %v781, %v769
    %v1082 = vpack.c.b16 %v782, %v770
    %v1083 = vpack.c.b16 %v783, %v771
    %v1084 = vpack.c.b16 %v784, %v772
    %v1085 = vpack.c.b16 %v785, %v773
    %v1086 = vpack.c.b16 %v786, %v774
    %v1087 = vpack.c.b16 %v787, %v775
    %v1088 = vpack.c.b16 %v788, %v776
    %v1089 = vpack.c.b16 %v789, %v777
    %v1090 = vpack.c.b16 %v790, %v778
    %v1091 = vpack.c.b16 %v803, %v791
    %v1092 = vpack.c.b16 %v804, %v792
    %v1093 = vpack.c.b16 %v805, %v793
    %v1094 = vpack.c.b16 %v806, %v794
    %v1095 = vpack.c.b16 %v807, %v795
    %v1096 = vpack.c.b16 %v808, %v796
    %v1097 = vpack.c.b16 %v809, %v797
    %v1098 = vpack.c.b16 %v810, %v798
    %v1099 = vpack.c.b16 %v811, %v799
    %v1100 = vpack.c.b16 %v812, %v800
    %v1101 = vpack.c.b16 %v813, %v801
    %v1102 = vpack.c.b16 %v814, %v802
    %v1103 = vpack.c.b16 %v827, %v815
    %v1104 = vpack.c.b16 %v828, %v816
    %v1105 = vpack.c.b16 %v829, %v817
    %v1106 = vpack.c.b16 %v830, %v818
    %v1107 = vpack.c.b16 %v831, %v819
    %v1108 = vpack.c.b16 %v832, %v820
    %v1109 = vpack.c.b16 %v833, %v821
    %v1110 = vpack.c.b16 %v834, %v822
    %v1111 = vpack.c.b16 %v835, %v823
    %v1112 = vpack.c.b16 %v836, %v824
    %v1113 = vpack.c.b16 %v837, %v825
    %v1114 = vpack.c.b16 %v838, %v826
    %v1115 = vpack.c.b16 %v851, %v839
    %v1116 = vpack.c.b16 %v852, %v840
    %v1117 = vpack.c.b16 %v853, %v841
    %v1118 = vpack.c.b16 %v854, %v842
    %v1119 = vpack.c.b16 %v855, %v843
    %v1120 = vpack.c.b16 %v856, %v844
    %v1121 = vpack.c.b16 %v857, %v845
    %v1122 = vpack.c.b16 %v858, %v846
    %v1123 = vpack.c.b16 %v859, %v847
    %v1124 = vpack.c.b16 %v860, %v848
    %v1125 = vpack.c.b16 %v861, %v849
    %v1126 = vpack.c.b16 %v862, %v850
    %v1127 = vpack.c.b16 %v875, %v863
    %v1128 = vpack.c.b16 %v876, %v864
    %v1129 = vpack.c.b16 %v877, %v865
    %v1130 = vpack.c.b16 %v878, %v866
    %v1131 = vpack.c.b16 %v879, %v867
    %v1132 = vpack.c.b16 %v880, %v868
    %v1133 = vpack.c.b16 %v881, %v869
    %v1134 = vpack.c.b16 %v882, %v870
    %v1135 = vpack.c.b16 %v883, %v871
    %v1136 = vpack.c.b16 %v884, %v872
    %v1137 = vpack.c.b16 %v885, %v873
    %v1138 = vpack.c.b16 %v886, %v874
    %v1139 = vpack.c.b16 %v899, %v887
    %v1140 = vpack.c.b16 %v900, %v888
    %v1141 = vpack.c.b16 %v901, %v889
    %v1142 = vpack.c.b16 %v902, %v890
    %v1143 = vpack.c.b16 %v903, %v891
    %v1144 = vpack.c.b16 %v904, %v892
    %v1145 = vpack.c.b16 %v905, %v893
    %v1146 = vpack.c.b16 %v906, %v894
    %v1147 = vpack.c.b16 %v907, %v895
    %v1148 = vpack.c.b16 %v908, %v896
    %v1149 = vpack.c.b16 %v909, %v897
    %v1150 = vpack.c.b16 %v910, %v898
    %v1151 = vpack.c.b16 %v923, %v911
    %v1152 = vpack.c.b16 %v924, %v912
    %v1153 = vpack.c.b16 %v925, %v913
    %v1154 = vpack.c.b16 %v926, %v914
    %v1155 = vpack.c.b16 %v927, %v915
    %v1156 = vpack.c.b16 %v928, %v916
    %v1157 = vpack.c.b16 %v929, %v917
    %v1158 = vpack.c.b16 %v930, %v918
    %v1159 = vpack.c.b16 %v931, %v919
    %v1160 = vpack.c.b16 %v932, %v920
    %v1161 = vpack.c.b16 %v933, %v921
    %v1162 = vpack.c.b16 %v934, %v922
    %v1163 = vpack.c.b16 %v947, %v935
    %v1164 = vpack.c.b16 %v948, %v936
    %v1165 = vpack.c.b16 %v949, %v937
    %v1166 = vpack.c.b16 %v950, %v938
    %v1167 = vpack.c.b16 %v951, %v939
    %v1168 = vpack.c.b16 %v952, %v940
    %v1169 = vpack.c.b16 %v953, %v941
    %v1170 = vpack.c.b16 %v954, %v942
    %v1171 = vpack.c.b16 %v955, %v943
    %v1172 = vpack.c.b16 %v956, %v944
    %v1173 = vpack.c.b16 %v957, %v945
    %v1174 = vpack.c.b16 %v958, %v946
    %v1175 = vpack.c.b16 %v971, %v959
    %v1176 = vpack.c.b16 %v972, %v960
    %v1177 = vpack.c.b16 %v973, %v961
    %v1178 = vpack.c.b16 %v974, %v962
    %v1179 = vpack.c.b16 %v975, %v963
    %v1180 = vpack.c.b16 %v976, %v964
    %v1181 = vpack.c.b16 %v977, %v965
    %v1182 = vpack.c.b16 %v978, %v966
    %v1183 = vpack.c.b16 %v979, %v967
    %v1184 = vpack.c.b16 %v980, %v968
    %v1185 = vpack.c.b16 %v981, %v969
    %v1186 = vpack.c.b16 %v982, %v970
    %v1187 = vpack.c.b16 %v995, %v983
    %v1188 = vpack.c.b16 %v996, %v984
    %v1189 = vpack.c.b16 %v997, %v985
    %v1190 = vpack.c.b16 %v998, %v986
    %v1191 = vpack.c.b16 %v999, %v987
    %v1192 = vpack.c.b16 %v1000, %v988
    %v1193 = vpack.c.b16 %v1001, %v989
    %v1194 = vpack.c.b16 %v1002, %v990
    %v1195 = vpack.c.b16 %v1003, %v991
    %v1196 = vpack.c.b16 %v1004, %v992
    %v1197 = vpack.c.b16 %v1005, %v993
    %v1198 = vpack.c.b16 %v1006, %v994
    %1391 = vmatpush.bf16.msra.mxu0 %v1091
    %1392 = vmatpush.bf16.msra.mxu0 %v1079
    %1393 = vmatpush.bf16.msra.mxu0 %v1067
    %1394 = vmatpush.bf16.msra.mxu0 %v1055
    %1395 = vmatpush.bf16.msra.mxu0 %v1043
    %1396 = vmatpush.bf16.msra.mxu0 %v1031
    %1397 = vmatpush.bf16.msra.mxu0 %v1019
    %1398 = vmatpush.bf16.msra.mxu0 %v1007
    %1399 = vmatmul.bf16.gmra.mxu0 %v175
    %v1400 = vpop.f32.mrf.mxu0
    %v1401 = vadd.f32 0.0, %v1400
    %v1402 = vpop.f32.mrf.mxu0
    %v1403 = vadd.f32 0.0, %v1402
    %1404 = vmatmul.bf16.gmra.mxu0 %v177
    %v1405 = vpop.f32.mrf.mxu0
    %v1406 = vadd.f32 0.0, %v1405
    %v1407 = vpop.f32.mrf.mxu0
    %v1408 = vadd.f32 0.0, %v1407
    %1409 = vmatmul.bf16.gmra.mxu0 %v179
    %v1410 = vpop.f32.mrf.mxu0
    %v1411 = vadd.f32 0.0, %v1410
    %v1412 = vpop.f32.mrf.mxu0
    %v1413 = vadd.f32 0.0, %v1412
    %1414 = vmatmul.bf16.gmra.mxu0 %v181
    %v1415 = vpop.f32.mrf.mxu0
    %v1416 = vadd.f32 0.0, %v1415
    %v1417 = vpop.f32.mrf.mxu0
    %v1418 = vadd.f32 0.0, %v1417
    %1419 = vmatmul.bf16.gmra.mxu0 %v183
    %v1420 = vpop.f32.mrf.mxu0
    %v1421 = vadd.f32 0.0, %v1420
    %v1422 = vpop.f32.mrf.mxu0
    %v1423 = vadd.f32 0.0, %v1422
    %1424 = vmatmul.bf16.gmra.mxu0 %v185
    %v1425 = vpop.f32.mrf.mxu0
    %v1426 = vadd.f32 0.0, %v1425
    %v1427 = vpop.f32.mrf.mxu0
    %v1428 = vadd.f32 0.0, %v1427
    %1429 = vmatmul.bf16.gmra.mxu0 %v187
    %v1430 = vpop.f32.mrf.mxu0
    %v1431 = vadd.f32 0.0, %v1430
    %v1432 = vpop.f32.mrf.mxu0
    %v1433 = vadd.f32 0.0, %v1432
    %1434 = vmatmul.bf16.gmra.mxu0 %v189
    %v1435 = vpop.f32.mrf.mxu0
    %v1436 = vadd.f32 0.0, %v1435
    %v1437 = vpop.f32.mrf.mxu0
    %v1438 = vadd.f32 0.0, %v1437
    %1439 = vmatmul.bf16.gmra.mxu0 %v191
    %v1440 = vpop.f32.mrf.mxu0
    %v1441 = vadd.f32 0.0, %v1440
    %v1442 = vpop.f32.mrf.mxu0
    %v1443 = vadd.f32 0.0, %v1442
    %1444 = vmatmul.bf16.gmra.mxu0 %v193
    %v1445 = vpop.f32.mrf.mxu0
    %v1446 = vadd.f32 0.0, %v1445
    %v1447 = vpop.f32.mrf.mxu0
    %v1448 = vadd.f32 0.0, %v1447
    %1449 = vmatmul.bf16.gmra.mxu0 %v195
    %v1450 = vpop.f32.mrf.mxu0
    %v1451 = vadd.f32 0.0, %v1450
    %v1452 = vpop.f32.mrf.mxu0
    %v1453 = vadd.f32 0.0, %v1452
    %1454 = vmatmul.bf16.gmra.mxu0 %v197
    %v1455 = vpop.f32.mrf.mxu0
    %v1456 = vadd.f32 0.0, %v1455
    %v1457 = vpop.f32.mrf.mxu0
    %v1458 = vadd.f32 0.0, %v1457
    %1459 = vmatmul.bf16.gmra.mxu0 %v199
    %v1460 = vpop.f32.mrf.mxu0
    %v1461 = vadd.f32 0.0, %v1460
    %v1462 = vpop.f32.mrf.mxu0
    %v1463 = vadd.f32 0.0, %v1462
    %1464 = vmatmul.bf16.gmra.mxu0 %v201
    %v1465 = vpop.f32.mrf.mxu0
    %v1466 = vadd.f32 0.0, %v1465
    %v1467 = vpop.f32.mrf.mxu0
    %v1468 = vadd.f32 0.0, %v1467
    %1469 = vmatmul.bf16.gmra.mxu0 %v203
    %v1470 = vpop.f32.mrf.mxu0
    %v1471 = vadd.f32 0.0, %v1470
    %v1472 = vpop.f32.mrf.mxu0
    %v1473 = vadd.f32 0.0, %v1472
    %1474 = vmatmul.bf16.gmra.mxu0 %v205
    %v1475 = vpop.f32.mrf.mxu0
    %v1476 = vadd.f32 0.0, %v1475
    %v1477 = vpop.f32.mrf.mxu0
    %v1478 = vadd.f32 0.0, %v1477
    %1479 = vmatmul.bf16.gmra.mxu0 %v207
    %v1480 = vpop.f32.mrf.mxu0
    %v1481 = vadd.f32 0.0, %v1480
    %v1482 = vpop.f32.mrf.mxu0
    %v1483 = vadd.f32 0.0, %v1482
    %1484 = vmatmul.bf16.gmra.mxu0 %v209
    %v1485 = vpop.f32.mrf.mxu0
    %v1486 = vadd.f32 0.0, %v1485
    %v1487 = vpop.f32.mrf.mxu0
    %v1488 = vadd.f32 0.0, %v1487
    %1489 = vmatmul.bf16.gmra.mxu0 %v211
    %v1490 = vpop.f32.mrf.mxu0
    %v1491 = vadd.f32 0.0, %v1490
    %v1492 = vpop.f32.mrf.mxu0
    %v1493 = vadd.f32 0.0, %v1492
    %1494 = vmatmul.bf16.gmra.mxu0 %v213
    %v1495 = vpop.f32.mrf.mxu0
    %v1496 = vadd.f32 0.0, %v1495
    %v1497 = vpop.f32.mrf.mxu0
    %v1498 = vadd.f32 0.0, %v1497
    %1499 = vmatmul.bf16.gmra.mxu0 %v215
    %v1500 = vpop.f32.mrf.mxu0
    %v1501 = vadd.f32 0.0, %v1500
    %v1502 = vpop.f32.mrf.mxu0
    %v1503 = vadd.f32 0.0, %v1502
    %1504 = vmatmul.bf16.gmra.mxu0 %v217
    %v1505 = vpop.f32.mrf.mxu0
    %v1506 = vadd.f32 0.0, %v1505
    %v1507 = vpop.f32.mrf.mxu0
    %v1508 = vadd.f32 0.0, %v1507
    %1509 = vmatmul.bf16.gmra.mxu0 %v219
    %v1510 = vpop.f32.mrf.mxu0
    %v1511 = vadd.f32 0.0, %v1510
    %v1512 = vpop.f32.mrf.mxu0
    %v1513 = vadd.f32 0.0, %v1512
    %1514 = vmatmul.bf16.gmra.mxu0 %v221
    %v1515 = vpop.f32.mrf.mxu0
    %v1516 = vadd.f32 0.0, %v1515
    %v1517 = vpop.f32.mrf.mxu0
    %v1518 = vadd.f32 0.0, %v1517
    %1519 = vmatmul.bf16.gmra.mxu0 %v223
    %v1520 = vpop.f32.mrf.mxu0
    %v1521 = vadd.f32 0.0, %v1520
    %v1522 = vpop.f32.mrf.mxu0
    %v1523 = vadd.f32 0.0, %v1522
    %1524 = vmatmul.bf16.gmra.mxu0 %v225
    %v1525 = vpop.f32.mrf.mxu0
    %v1526 = vadd.f32 0.0, %v1525
    %v1527 = vpop.f32.mrf.mxu0
    %v1528 = vadd.f32 0.0, %v1527
    %1529 = vmatmul.bf16.gmra.mxu0 %v227
    %v1530 = vpop.f32.mrf.mxu0
    %v1531 = vadd.f32 0.0, %v1530
    %v1532 = vpop.f32.mrf.mxu0
    %v1533 = vadd.f32 0.0, %v1532
    %1534 = vmatmul.bf16.gmra.mxu0 %v229
    %v1535 = vpop.f32.mrf.mxu0
    %v1536 = vadd.f32 0.0, %v1535
    %v1537 = vpop.f32.mrf.mxu0
    %v1538 = vadd.f32 0.0, %v1537
    %1539 = vmatmul.bf16.gmra.mxu0 %v231
    %v1540 = vpop.f32.mrf.mxu0
    %v1541 = vadd.f32 0.0, %v1540
    %v1542 = vpop.f32.mrf.mxu0
    %v1543 = vadd.f32 0.0, %v1542
    %1544 = vmatmul.bf16.gmra.mxu0 %v233
    %v1545 = vpop.f32.mrf.mxu0
    %v1546 = vadd.f32 0.0, %v1545
    %v1547 = vpop.f32.mrf.mxu0
    %v1548 = vadd.f32 0.0, %v1547
    %1549 = vmatmul.bf16.gmra.mxu0 %v235
    %v1550 = vpop.f32.mrf.mxu0
    %v1551 = vadd.f32 0.0, %v1550
    %v1552 = vpop.f32.mrf.mxu0
    %v1553 = vadd.f32 0.0, %v1552
    %1554 = vmatmul.bf16.gmra.mxu0 %v237
    %v1555 = vpop.f32.mrf.mxu0
    %v1556 = vadd.f32 0.0, %v1555
    %v1557 = vpop.f32.mrf.mxu0
    %v1558 = vadd.f32 0.0, %v1557
    %1559 = vdwg.mxu0
    %1560 = vmatpush.bf16.msra.mxu0 %v1187
    %1561 = vmatpush.bf16.msra.mxu0 %v1175
    %1562 = vmatpush.bf16.msra.mxu0 %v1163
    %1563 = vmatpush.bf16.msra.mxu0 %v1151
    %1564 = vmatpush.bf16.msra.mxu0 %v1139
    %1565 = vmatpush.bf16.msra.mxu0 %v1127
    %1566 = vmatpush.bf16.msra.mxu0 %v1115
    %1567 = vmatpush.bf16.msra.mxu0 %v1103
    %1568 = vmatmul.bf16.gmra.mxu0 %v176
    %v1569 = vpop.f32.mrf.mxu0
    %v1570 = vadd.f32 %v1401, %v1569
    %v1571 = vpop.f32.mrf.mxu0
    %v1572 = vadd.f32 %v1403, %v1571
    %1573 = vmatmul.bf16.gmra.mxu0 %v178
    %v1574 = vpop.f32.mrf.mxu0
    %v1575 = vadd.f32 %v1406, %v1574
    %v1576 = vpop.f32.mrf.mxu0
    %v1577 = vadd.f32 %v1408, %v1576
    %1578 = vmatmul.bf16.gmra.mxu0 %v180
    %v1579 = vpop.f32.mrf.mxu0
    %v1580 = vadd.f32 %v1411, %v1579
    %v1581 = vpop.f32.mrf.mxu0
    %v1582 = vadd.f32 %v1413, %v1581
    %1583 = vmatmul.bf16.gmra.mxu0 %v182
    %v1584 = vpop.f32.mrf.mxu0
    %v1585 = vadd.f32 %v1416, %v1584
    %v1586 = vpop.f32.mrf.mxu0
    %v1587 = vadd.f32 %v1418, %v1586
    %1588 = vmatmul.bf16.gmra.mxu0 %v184
    %v1589 = vpop.f32.mrf.mxu0
    %v1590 = vadd.f32 %v1421, %v1589
    %v1591 = vpop.f32.mrf.mxu0
    %v1592 = vadd.f32 %v1423, %v1591
    %1593 = vmatmul.bf16.gmra.mxu0 %v186
    %v1594 = vpop.f32.mrf.mxu0
    %v1595 = vadd.f32 %v1426, %v1594
    %v1596 = vpop.f32.mrf.mxu0
    %v1597 = vadd.f32 %v1428, %v1596
    %1598 = vmatmul.bf16.gmra.mxu0 %v188
    %v1599 = vpop.f32.mrf.mxu0
    %v1600 = vadd.f32 %v1431, %v1599
    %v1601 = vpop.f32.mrf.mxu0
    %v1602 = vadd.f32 %v1433, %v1601
    %1603 = vmatmul.bf16.gmra.mxu0 %v190
    %v1604 = vpop.f32.mrf.mxu0
    %v1605 = vadd.f32 %v1436, %v1604
    %v1606 = vpop.f32.mrf.mxu0
    %v1607 = vadd.f32 %v1438, %v1606
    %1608 = vmatmul.bf16.gmra.mxu0 %v192
    %v1609 = vpop.f32.mrf.mxu0
    %v1610 = vadd.f32 %v1441, %v1609
    %v1611 = vpop.f32.mrf.mxu0
    %v1612 = vadd.f32 %v1443, %v1611
    %1613 = vmatmul.bf16.gmra.mxu0 %v194
    %v1614 = vpop.f32.mrf.mxu0
    %v1615 = vadd.f32 %v1446, %v1614
    %v1616 = vpop.f32.mrf.mxu0
    %v1617 = vadd.f32 %v1448, %v1616
    %1618 = vmatmul.bf16.gmra.mxu0 %v196
    %v1619 = vpop.f32.mrf.mxu0
    %v1620 = vadd.f32 %v1451, %v1619
    %v1621 = vpop.f32.mrf.mxu0
    %v1622 = vadd.f32 %v1453, %v1621
    %1623 = vmatmul.bf16.gmra.mxu0 %v198
    %v1624 = vpop.f32.mrf.mxu0
    %v1625 = vadd.f32 %v1456, %v1624
    %v1626 = vpop.f32.mrf.mxu0
    %v1627 = vadd.f32 %v1458, %v1626
    %1628 = vmatmul.bf16.gmra.mxu0 %v200
    %v1629 = vpop.f32.mrf.mxu0
    %v1630 = vadd.f32 %v1461, %v1629
    %v1631 = vpop.f32.mrf.mxu0
    %v1632 = vadd.f32 %v1463, %v1631
    %1633 = vmatmul.bf16.gmra.mxu0 %v202
    %v1634 = vpop.f32.mrf.mxu0
    %v1635 = vadd.f32 %v1466, %v1634
    %v1636 = vpop.f32.mrf.mxu0
    %v1637 = vadd.f32 %v1468, %v1636
    %1638 = vmatmul.bf16.gmra.mxu0 %v204
    %v1639 = vpop.f32.mrf.mxu0
    %v1640 = vadd.f32 %v1471, %v1639
    %v1641 = vpop.f32.mrf.mxu0
    %v1642 = vadd.f32 %v1473, %v1641
    %1643 = vmatmul.bf16.gmra.mxu0 %v206
    %v1644 = vpop.f32.mrf.mxu0
    %v1645 = vadd.f32 %v1476, %v1644
    %v1646 = vpop.f32.mrf.mxu0
    %v1647 = vadd.f32 %v1478, %v1646
    %1648 = vmatmul.bf16.gmra.mxu0 %v208
    %v1649 = vpop.f32.mrf.mxu0
    %v1650 = vadd.f32 %v1481, %v1649
    %v1651 = vpop.f32.mrf.mxu0
    %v1652 = vadd.f32 %v1483, %v1651
    %1653 = vmatmul.bf16.gmra.mxu0 %v210
    %v1654 = vpop.f32.mrf.mxu0
    %v1655 = vadd.f32 %v1486, %v1654
    %v1656 = vpop.f32.mrf.mxu0
    %v1657 = vadd.f32 %v1488, %v1656
    %1658 = vmatmul.bf16.gmra.mxu0 %v212
    %v1659 = vpop.f32.mrf.mxu0
    %v1660 = vadd.f32 %v1491, %v1659
    %v1661 = vpop.f32.mrf.mxu0
    %v1662 = vadd.f32 %v1493, %v1661
    %1663 = vmatmul.bf16.gmra.mxu0 %v214
    %v1664 = vpop.f32.mrf.mxu0
    %v1665 = vadd.f32 %v1496, %v1664
    %v1666 = vpop.f32.mrf.mxu0
    %v1667 = vadd.f32 %v1498, %v1666
    %1668 = vmatmul.bf16.gmra.mxu0 %v216
    %v1669 = vpop.f32.mrf.mxu0
    %v1670 = vadd.f32 %v1501, %v1669
    %v1671 = vpop.f32.mrf.mxu0
    %v1672 = vadd.f32 %v1503, %v1671
    %1673 = vmatmul.bf16.gmra.mxu0 %v218
    %v1674 = vpop.f32.mrf.mxu0
    %v1675 = vadd.f32 %v1506, %v1674
    %v1676 = vpop.f32.mrf.mxu0
    %v1677 = vadd.f32 %v1508, %v1676
    %1678 = vmatmul.bf16.gmra.mxu0 %v220
    %v1679 = vpop.f32.mrf.mxu0
    %v1680 = vadd.f32 %v1511, %v1679
    %v1681 = vpop.f32.mrf.mxu0
    %v1682 = vadd.f32 %v1513, %v1681
    %1683 = vmatmul.bf16.gmra.mxu0 %v222
    %v1684 = vpop.f32.mrf.mxu0
    %v1685 = vadd.f32 %v1516, %v1684
    %v1686 = vpop.f32.mrf.mxu0
    %v1687 = vadd.f32 %v1518, %v1686
    %1688 = vmatmul.bf16.gmra.mxu0 %v224
    %v1689 = vpop.f32.mrf.mxu0
    %v1690 = vadd.f32 %v1521, %v1689
    %v1691 = vpop.f32.mrf.mxu0
    %v1692 = vadd.f32 %v1523, %v1691
    %1693 = vmatmul.bf16.gmra.mxu0 %v226
    %v1694 = vpop.f32.mrf.mxu0
    %v1695 = vadd.f32 %v1526, %v1694
    %v1696 = vpop.f32.mrf.mxu0
    %v1697 = vadd.f32 %v1528, %v1696
    %1698 = vmatmul.bf16.gmra.mxu0 %v228
    %v1699 = vpop.f32.mrf.mxu0
    %v1700 = vadd.f32 %v1531, %v1699
    %v1701 = vpop.f32.mrf.mxu0
    %v1702 = vadd.f32 %v1533, %v1701
    %1703 = vmatmul.bf16.gmra.mxu0 %v230
    %v1704 = vpop.f32.mrf.mxu0
    %v1705 = vadd.f32 %v1536, %v1704
    %v1706 = vpop.f32.mrf.mxu0
    %v1707 = vadd.f32 %v1538, %v1706
    %1708 = vmatmul.bf16.gmra.mxu0 %v232
    %v1709 = vpop.f32.mrf.mxu0
    %v1710 = vadd.f32 %v1541, %v1709
    %v1711 = vpop.f32.mrf.mxu0
    %v1712 = vadd.f32 %v1543, %v1711
    %1713 = vmatmul.bf16.gmra.mxu0 %v234
    %v1714 = vpop.f32.mrf.mxu0
    %v1715 = vadd.f32 %v1546, %v1714
    %v1716 = vpop.f32.mrf.mxu0
    %v1717 = vadd.f32 %v1548, %v1716
    %1718 = vmatmul.bf16.gmra.mxu0 %v236
    %v1719 = vpop.f32.mrf.mxu0
    %v1720 = vadd.f32 %v1551, %v1719
    %v1721 = vpop.f32.mrf.mxu0
    %v1722 = vadd.f32 %v1553, %v1721
    %1723 = vmatmul.bf16.gmra.mxu0 %v238
    %v1724 = vpop.f32.mrf.mxu0
    %v1725 = vadd.f32 %v1556, %v1724
    %v1726 = vpop.f32.mrf.mxu0
    %v1727 = vadd.f32 %v1558, %v1726
    %1728 = vdwg.mxu0
    %1729 = vmatpush.bf16.msra.mxu0 %v1092
    %1730 = vmatpush.bf16.msra.mxu0 %v1080
    %1731 = vmatpush.bf16.msra.mxu0 %v1068
    %1732 = vmatpush.bf16.msra.mxu0 %v1056
    %1733 = vmatpush.bf16.msra.mxu0 %v1044
    %1734 = vmatpush.bf16.msra.mxu0 %v1032
    %1735 = vmatpush.bf16.msra.mxu0 %v1020
    %1736 = vmatpush.bf16.msra.mxu0 %v1008
    %1737 = vmatmul.bf16.gmra.mxu0 %v175
    %v1738 = vpop.f32.mrf.mxu0
    %v1739 = vadd.f32 0.0, %v1738
    %v1740 = vpop.f32.mrf.mxu0
    %v1741 = vadd.f32 0.0, %v1740
    %1742 = vmatmul.bf16.gmra.mxu0 %v177
    %v1743 = vpop.f32.mrf.mxu0
    %v1744 = vadd.f32 0.0, %v1743
    %v1745 = vpop.f32.mrf.mxu0
    %v1746 = vadd.f32 0.0, %v1745
    %1747 = vmatmul.bf16.gmra.mxu0 %v179
    %v1748 = vpop.f32.mrf.mxu0
    %v1749 = vadd.f32 0.0, %v1748
    %v1750 = vpop.f32.mrf.mxu0
    %v1751 = vadd.f32 0.0, %v1750
    %1752 = vmatmul.bf16.gmra.mxu0 %v181
    %v1753 = vpop.f32.mrf.mxu0
    %v1754 = vadd.f32 0.0, %v1753
    %v1755 = vpop.f32.mrf.mxu0
    %v1756 = vadd.f32 0.0, %v1755
    %1757 = vmatmul.bf16.gmra.mxu0 %v183
    %v1758 = vpop.f32.mrf.mxu0
    %v1759 = vadd.f32 0.0, %v1758
    %v1760 = vpop.f32.mrf.mxu0
    %v1761 = vadd.f32 0.0, %v1760
    %1762 = vmatmul.bf16.gmra.mxu0 %v185
    %v1763 = vpop.f32.mrf.mxu0
    %v1764 = vadd.f32 0.0, %v1763
    %v1765 = vpop.f32.mrf.mxu0
    %v1766 = vadd.f32 0.0, %v1765
    %1767 = vmatmul.bf16.gmra.mxu0 %v187
    %v1768 = vpop.f32.mrf.mxu0
    %v1769 = vadd.f32 0.0, %v1768
    %v1770 = vpop.f32.mrf.mxu0
    %v1771 = vadd.f32 0.0, %v1770
    %1772 = vmatmul.bf16.gmra.mxu0 %v189
    %v1773 = vpop.f32.mrf.mxu0
    %v1774 = vadd.f32 0.0, %v1773
    %v1775 = vpop.f32.mrf.mxu0
    %v1776 = vadd.f32 0.0, %v1775
    %1777 = vmatmul.bf16.gmra.mxu0 %v191
    %v1778 = vpop.f32.mrf.mxu0
    %v1779 = vadd.f32 0.0, %v1778
    %v1780 = vpop.f32.mrf.mxu0
    %v1781 = vadd.f32 0.0, %v1780
    %1782 = vmatmul.bf16.gmra.mxu0 %v193
    %v1783 = vpop.f32.mrf.mxu0
    %v1784 = vadd.f32 0.0, %v1783
    %v1785 = vpop.f32.mrf.mxu0
    %v1786 = vadd.f32 0.0, %v1785
    %1787 = vmatmul.bf16.gmra.mxu0 %v195
    %v1788 = vpop.f32.mrf.mxu0
    %v1789 = vadd.f32 0.0, %v1788
    %v1790 = vpop.f32.mrf.mxu0
    %v1791 = vadd.f32 0.0, %v1790
    %1792 = vmatmul.bf16.gmra.mxu0 %v197
    %v1793 = vpop.f32.mrf.mxu0
    %v1794 = vadd.f32 0.0, %v1793
    %v1795 = vpop.f32.mrf.mxu0
    %v1796 = vadd.f32 0.0, %v1795
    %1797 = vmatmul.bf16.gmra.mxu0 %v199
    %v1798 = vpop.f32.mrf.mxu0
    %v1799 = vadd.f32 0.0, %v1798
    %v1800 = vpop.f32.mrf.mxu0
    %v1801 = vadd.f32 0.0, %v1800
    %1802 = vmatmul.bf16.gmra.mxu0 %v201
    %v1803 = vpop.f32.mrf.mxu0
    %v1804 = vadd.f32 0.0, %v1803
    %v1805 = vpop.f32.mrf.mxu0
    %v1806 = vadd.f32 0.0, %v1805
    %1807 = vmatmul.bf16.gmra.mxu0 %v203
    %v1808 = vpop.f32.mrf.mxu0
    %v1809 = vadd.f32 0.0, %v1808
    %v1810 = vpop.f32.mrf.mxu0
    %v1811 = vadd.f32 0.0, %v1810
    %1812 = vmatmul.bf16.gmra.mxu0 %v205
    %v1813 = vpop.f32.mrf.mxu0
    %v1814 = vadd.f32 0.0, %v1813
    %v1815 = vpop.f32.mrf.mxu0
    %v1816 = vadd.f32 0.0, %v1815
    %1817 = vmatmul.bf16.gmra.mxu0 %v207
    %v1818 = vpop.f32.mrf.mxu0
    %v1819 = vadd.f32 0.0, %v1818
    %v1820 = vpop.f32.mrf.mxu0
    %v1821 = vadd.f32 0.0, %v1820
    %1822 = vmatmul.bf16.gmra.mxu0 %v209
    %v1823 = vpop.f32.mrf.mxu0
    %v1824 = vadd.f32 0.0, %v1823
    %v1825 = vpop.f32.mrf.mxu0
    %v1826 = vadd.f32 0.0, %v1825
    %1827 = vmatmul.bf16.gmra.mxu0 %v211
    %v1828 = vpop.f32.mrf.mxu0
    %v1829 = vadd.f32 0.0, %v1828
    %v1830 = vpop.f32.mrf.mxu0
    %v1831 = vadd.f32 0.0, %v1830
    %1832 = vmatmul.bf16.gmra.mxu0 %v213
    %v1833 = vpop.f32.mrf.mxu0
    %v1834 = vadd.f32 0.0, %v1833
    %v1835 = vpop.f32.mrf.mxu0
    %v1836 = vadd.f32 0.0, %v1835
    %1837 = vmatmul.bf16.gmra.mxu0 %v215
    %v1838 = vpop.f32.mrf.mxu0
    %v1839 = vadd.f32 0.0, %v1838
    %v1840 = vpop.f32.mrf.mxu0
    %v1841 = vadd.f32 0.0, %v1840
    %1842 = vmatmul.bf16.gmra.mxu0 %v217
    %v1843 = vpop.f32.mrf.mxu0
    %v1844 = vadd.f32 0.0, %v1843
    %v1845 = vpop.f32.mrf.mxu0
    %v1846 = vadd.f32 0.0, %v1845
    %1847 = vmatmul.bf16.gmra.mxu0 %v219
    %v1848 = vpop.f32.mrf.mxu0
    %v1849 = vadd.f32 0.0, %v1848
    %v1850 = vpop.f32.mrf.mxu0
    %v1851 = vadd.f32 0.0, %v1850
    %1852 = vmatmul.bf16.gmra.mxu0 %v221
    %v1853 = vpop.f32.mrf.mxu0
    %v1854 = vadd.f32 0.0, %v1853
    %v1855 = vpop.f32.mrf.mxu0
    %v1856 = vadd.f32 0.0, %v1855
    %1857 = vmatmul.bf16.gmra.mxu0 %v223
    %v1858 = vpop.f32.mrf.mxu0
    %v1859 = vadd.f32 0.0, %v1858
    %v1860 = vpop.f32.mrf.mxu0
    %v1861 = vadd.f32 0.0, %v1860
    %1862 = vmatmul.bf16.gmra.mxu0 %v225
    %v1863 = vpop.f32.mrf.mxu0
    %v1864 = vadd.f32 0.0, %v1863
    %v1865 = vpop.f32.mrf.mxu0
    %v1866 = vadd.f32 0.0, %v1865
    %1867 = vmatmul.bf16.gmra.mxu0 %v227
    %v1868 = vpop.f32.mrf.mxu0
    %v1869 = vadd.f32 0.0, %v1868
    %v1870 = vpop.f32.mrf.mxu0
    %v1871 = vadd.f32 0.0, %v1870
    %1872 = vmatmul.bf16.gmra.mxu0 %v229
    %v1873 = vpop.f32.mrf.mxu0
    %v1874 = vadd.f32 0.0, %v1873
    %v1875 = vpop.f32.mrf.mxu0
    %v1876 = vadd.f32 0.0, %v1875
    %1877 = vmatmul.bf16.gmra.mxu0 %v231
    %v1878 = vpop.f32.mrf.mxu0
    %v1879 = vadd.f32 0.0, %v1878
    %v1880 = vpop.f32.mrf.mxu0
    %v1881 = vadd.f32 0.0, %v1880
    %1882 = vmatmul.bf16.gmra.mxu0 %v233
    %v1883 = vpop.f32.mrf.mxu0
    %v1884 = vadd.f32 0.0, %v1883
    %v1885 = vpop.f32.mrf.mxu0
    %v1886 = vadd.f32 0.0, %v1885
    %1887 = vmatmul.bf16.gmra.mxu0 %v235
    %v1888 = vpop.f32.mrf.mxu0
    %v1889 = vadd.f32 0.0, %v1888
    %v1890 = vpop.f32.mrf.mxu0
    %v1891 = vadd.f32 0.0, %v1890
    %1892 = vmatmul.bf16.gmra.mxu0 %v237
    %v1893 = vpop.f32.mrf.mxu0
    %v1894 = vadd.f32 0.0, %v1893
    %v1895 = vpop.f32.mrf.mxu0
    %v1896 = vadd.f32 0.0, %v1895
    %1897 = vdwg.mxu0
    %1898 = vmatpush.bf16.msra.mxu0 %v1188
    %1899 = vmatpush.bf16.msra.mxu0 %v1176
    %1900 = vmatpush.bf16.msra.mxu0 %v1164
    %1901 = vmatpush.bf16.msra.mxu0 %v1152
    %1902 = vmatpush.bf16.msra.mxu0 %v1140
    %1903 = vmatpush.bf16.msra.mxu0 %v1128
    %1904 = vmatpush.bf16.msra.mxu0 %v1116
    %1905 = vmatpush.bf16.msra.mxu0 %v1104
    %1906 = vmatmul.bf16.gmra.mxu0 %v176
    %v1907 = vpop.f32.mrf.mxu0
    %v1908 = vadd.f32 %v1739, %v1907
    %v1909 = vpop.f32.mrf.mxu0
    %v1910 = vadd.f32 %v1741, %v1909
    %1911 = vmatmul.bf16.gmra.mxu0 %v178
    %v1912 = vpop.f32.mrf.mxu0
    %v1913 = vadd.f32 %v1744, %v1912
    %v1914 = vpop.f32.mrf.mxu0
    %v1915 = vadd.f32 %v1746, %v1914
    %1916 = vmatmul.bf16.gmra.mxu0 %v180
    %v1917 = vpop.f32.mrf.mxu0
    %v1918 = vadd.f32 %v1749, %v1917
    %v1919 = vpop.f32.mrf.mxu0
    %v1920 = vadd.f32 %v1751, %v1919
    %1921 = vmatmul.bf16.gmra.mxu0 %v182
    %v1922 = vpop.f32.mrf.mxu0
    %v1923 = vadd.f32 %v1754, %v1922
    %v1924 = vpop.f32.mrf.mxu0
    %v1925 = vadd.f32 %v1756, %v1924
    %1926 = vmatmul.bf16.gmra.mxu0 %v184
    %v1927 = vpop.f32.mrf.mxu0
    %v1928 = vadd.f32 %v1759, %v1927
    %v1929 = vpop.f32.mrf.mxu0
    %v1930 = vadd.f32 %v1761, %v1929
    %1931 = vmatmul.bf16.gmra.mxu0 %v186
    %v1932 = vpop.f32.mrf.mxu0
    %v1933 = vadd.f32 %v1764, %v1932
    %v1934 = vpop.f32.mrf.mxu0
    %v1935 = vadd.f32 %v1766, %v1934
    %1936 = vmatmul.bf16.gmra.mxu0 %v188
    %v1937 = vpop.f32.mrf.mxu0
    %v1938 = vadd.f32 %v1769, %v1937
    %v1939 = vpop.f32.mrf.mxu0
    %v1940 = vadd.f32 %v1771, %v1939
    %1941 = vmatmul.bf16.gmra.mxu0 %v190
    %v1942 = vpop.f32.mrf.mxu0
    %v1943 = vadd.f32 %v1774, %v1942
    %v1944 = vpop.f32.mrf.mxu0
    %v1945 = vadd.f32 %v1776, %v1944
    %1946 = vmatmul.bf16.gmra.mxu0 %v192
    %v1947 = vpop.f32.mrf.mxu0
    %v1948 = vadd.f32 %v1779, %v1947
    %v1949 = vpop.f32.mrf.mxu0
    %v1950 = vadd.f32 %v1781, %v1949
    %1951 = vmatmul.bf16.gmra.mxu0 %v194
    %v1952 = vpop.f32.mrf.mxu0
    %v1953 = vadd.f32 %v1784, %v1952
    %v1954 = vpop.f32.mrf.mxu0
    %v1955 = vadd.f32 %v1786, %v1954
    %1956 = vmatmul.bf16.gmra.mxu0 %v196
    %v1957 = vpop.f32.mrf.mxu0
    %v1958 = vadd.f32 %v1789, %v1957
    %v1959 = vpop.f32.mrf.mxu0
    %v1960 = vadd.f32 %v1791, %v1959
    %1961 = vmatmul.bf16.gmra.mxu0 %v198
    %v1962 = vpop.f32.mrf.mxu0
    %v1963 = vadd.f32 %v1794, %v1962
    %v1964 = vpop.f32.mrf.mxu0
    %v1965 = vadd.f32 %v1796, %v1964
    %1966 = vmatmul.bf16.gmra.mxu0 %v200
    %v1967 = vpop.f32.mrf.mxu0
    %v1968 = vadd.f32 %v1799, %v1967
    %v1969 = vpop.f32.mrf.mxu0
    %v1970 = vadd.f32 %v1801, %v1969
    %1971 = vmatmul.bf16.gmra.mxu0 %v202
    %v1972 = vpop.f32.mrf.mxu0
    %v1973 = vadd.f32 %v1804, %v1972
    %v1974 = vpop.f32.mrf.mxu0
    %v1975 = vadd.f32 %v1806, %v1974
    %1976 = vmatmul.bf16.gmra.mxu0 %v204
    %v1977 = vpop.f32.mrf.mxu0
    %v1978 = vadd.f32 %v1809, %v1977
    %v1979 = vpop.f32.mrf.mxu0
    %v1980 = vadd.f32 %v1811, %v1979
    %1981 = vmatmul.bf16.gmra.mxu0 %v206
    %v1982 = vpop.f32.mrf.mxu0
    %v1983 = vadd.f32 %v1814, %v1982
    %v1984 = vpop.f32.mrf.mxu0
    %v1985 = vadd.f32 %v1816, %v1984
    %1986 = vmatmul.bf16.gmra.mxu0 %v208
    %v1987 = vpop.f32.mrf.mxu0
    %v1988 = vadd.f32 %v1819, %v1987
    %v1989 = vpop.f32.mrf.mxu0
    %v1990 = vadd.f32 %v1821, %v1989
    %1991 = vmatmul.bf16.gmra.mxu0 %v210
    %v1992 = vpop.f32.mrf.mxu0
    %v1993 = vadd.f32 %v1824, %v1992
    %v1994 = vpop.f32.mrf.mxu0
    %v1995 = vadd.f32 %v1826, %v1994
    %1996 = vmatmul.bf16.gmra.mxu0 %v212
    %v1997 = vpop.f32.mrf.mxu0
    %v1998 = vadd.f32 %v1829, %v1997
    %v1999 = vpop.f32.mrf.mxu0
    %v2000 = vadd.f32 %v1831, %v1999
    %2001 = vmatmul.bf16.gmra.mxu0 %v214
    %v2002 = vpop.f32.mrf.mxu0
    %v2003 = vadd.f32 %v1834, %v2002
    %v2004 = vpop.f32.mrf.mxu0
    %v2005 = vadd.f32 %v1836, %v2004
    %2006 = vmatmul.bf16.gmra.mxu0 %v216
    %v2007 = vpop.f32.mrf.mxu0
    %v2008 = vadd.f32 %v1839, %v2007
    %v2009 = vpop.f32.mrf.mxu0
    %v2010 = vadd.f32 %v1841, %v2009
    %2011 = vmatmul.bf16.gmra.mxu0 %v218
    %v2012 = vpop.f32.mrf.mxu0
    %v2013 = vadd.f32 %v1844, %v2012
    %v2014 = vpop.f32.mrf.mxu0
    %v2015 = vadd.f32 %v1846, %v2014
    %2016 = vmatmul.bf16.gmra.mxu0 %v220
    %v2017 = vpop.f32.mrf.mxu0
    %v2018 = vadd.f32 %v1849, %v2017
    %v2019 = vpop.f32.mrf.mxu0
    %v2020 = vadd.f32 %v1851, %v2019
    %2021 = vmatmul.bf16.gmra.mxu0 %v222
    %v2022 = vpop.f32.mrf.mxu0
    %v2023 = vadd.f32 %v1854, %v2022
    %v2024 = vpop.f32.mrf.mxu0
    %v2025 = vadd.f32 %v1856, %v2024
    %2026 = vmatmul.bf16.gmra.mxu0 %v224
    %v2027 = vpop.f32.mrf.mxu0
    %v2028 = vadd.f32 %v1859, %v2027
    %v2029 = vpop.f32.mrf.mxu0
    %v2030 = vadd.f32 %v1861, %v2029
    %2031 = vmatmul.bf16.gmra.mxu0 %v226
    %v2032 = vpop.f32.mrf.mxu0
    %v2033 = vadd.f32 %v1864, %v2032
    %v2034 = vpop.f32.mrf.mxu0
    %v2035 = vadd.f32 %v1866, %v2034
    %2036 = vmatmul.bf16.gmra.mxu0 %v228
    %v2037 = vpop.f32.mrf.mxu0
    %v2038 = vadd.f32 %v1869, %v2037
    %v2039 = vpop.f32.mrf.mxu0
    %v2040 = vadd.f32 %v1871, %v2039
    %2041 = vmatmul.bf16.gmra.mxu0 %v230
    %v2042 = vpop.f32.mrf.mxu0
    %v2043 = vadd.f32 %v1874, %v2042
    %v2044 = vpop.f32.mrf.mxu0
    %v2045 = vadd.f32 %v1876, %v2044
    %2046 = vmatmul.bf16.gmra.mxu0 %v232
    %v2047 = vpop.f32.mrf.mxu0
    %v2048 = vadd.f32 %v1879, %v2047
    %v2049 = vpop.f32.mrf.mxu0
    %v2050 = vadd.f32 %v1881, %v2049
    %2051 = vmatmul.bf16.gmra.mxu0 %v234
    %v2052 = vpop.f32.mrf.mxu0
    %v2053 = vadd.f32 %v1884, %v2052
    %v2054 = vpop.f32.mrf.mxu0
    %v2055 = vadd.f32 %v1886, %v2054
    %2056 = vmatmul.bf16.gmra.mxu0 %v236
    %v2057 = vpop.f32.mrf.mxu0
    %v2058 = vadd.f32 %v1889, %v2057
    %v2059 = vpop.f32.mrf.mxu0
    %v2060 = vadd.f32 %v1891, %v2059
    %2061 = vmatmul.bf16.gmra.mxu0 %v238
    %v2062 = vpop.f32.mrf.mxu0
    %v2063 = vadd.f32 %v1894, %v2062
    %v2064 = vpop.f32.mrf.mxu0
    %v2065 = vadd.f32 %v1896, %v2064
    %2066 = vdwg.mxu0
    %2067 = vmatpush.bf16.msra.mxu0 %v1093
    %2068 = vmatpush.bf16.msra.mxu0 %v1081
    %2069 = vmatpush.bf16.msra.mxu0 %v1069
    %2070 = vmatpush.bf16.msra.mxu0 %v1057
    %2071 = vmatpush.bf16.msra.mxu0 %v1045
    %2072 = vmatpush.bf16.msra.mxu0 %v1033
    %2073 = vmatpush.bf16.msra.mxu0 %v1021
    %2074 = vmatpush.bf16.msra.mxu0 %v1009
    %2075 = vmatmul.bf16.gmra.mxu0 %v175
    %v2076 = vpop.f32.mrf.mxu0
    %v2077 = vadd.f32 0.0, %v2076
    %v2078 = vpop.f32.mrf.mxu0
    %v2079 = vadd.f32 0.0, %v2078
    %2080 = vmatmul.bf16.gmra.mxu0 %v177
    %v2081 = vpop.f32.mrf.mxu0
    %v2082 = vadd.f32 0.0, %v2081
    %v2083 = vpop.f32.mrf.mxu0
    %v2084 = vadd.f32 0.0, %v2083
    %2085 = vmatmul.bf16.gmra.mxu0 %v179
    %v2086 = vpop.f32.mrf.mxu0
    %v2087 = vadd.f32 0.0, %v2086
    %v2088 = vpop.f32.mrf.mxu0
    %v2089 = vadd.f32 0.0, %v2088
    %2090 = vmatmul.bf16.gmra.mxu0 %v181
    %v2091 = vpop.f32.mrf.mxu0
    %v2092 = vadd.f32 0.0, %v2091
    %v2093 = vpop.f32.mrf.mxu0
    %v2094 = vadd.f32 0.0, %v2093
    %2095 = vmatmul.bf16.gmra.mxu0 %v183
    %v2096 = vpop.f32.mrf.mxu0
    %v2097 = vadd.f32 0.0, %v2096
    %v2098 = vpop.f32.mrf.mxu0
    %v2099 = vadd.f32 0.0, %v2098
    %2100 = vmatmul.bf16.gmra.mxu0 %v185
    %v2101 = vpop.f32.mrf.mxu0
    %v2102 = vadd.f32 0.0, %v2101
    %v2103 = vpop.f32.mrf.mxu0
    %v2104 = vadd.f32 0.0, %v2103
    %2105 = vmatmul.bf16.gmra.mxu0 %v187
    %v2106 = vpop.f32.mrf.mxu0
    %v2107 = vadd.f32 0.0, %v2106
    %v2108 = vpop.f32.mrf.mxu0
    %v2109 = vadd.f32 0.0, %v2108
    %2110 = vmatmul.bf16.gmra.mxu0 %v189
    %v2111 = vpop.f32.mrf.mxu0
    %v2112 = vadd.f32 0.0, %v2111
    %v2113 = vpop.f32.mrf.mxu0
    %v2114 = vadd.f32 0.0, %v2113
    %2115 = vmatmul.bf16.gmra.mxu0 %v191
    %v2116 = vpop.f32.mrf.mxu0
    %v2117 = vadd.f32 0.0, %v2116
    %v2118 = vpop.f32.mrf.mxu0
    %v2119 = vadd.f32 0.0, %v2118
    %2120 = vmatmul.bf16.gmra.mxu0 %v193
    %v2121 = vpop.f32.mrf.mxu0
    %v2122 = vadd.f32 0.0, %v2121
    %v2123 = vpop.f32.mrf.mxu0
    %v2124 = vadd.f32 0.0, %v2123
    %2125 = vmatmul.bf16.gmra.mxu0 %v195
    %v2126 = vpop.f32.mrf.mxu0
    %v2127 = vadd.f32 0.0, %v2126
    %v2128 = vpop.f32.mrf.mxu0
    %v2129 = vadd.f32 0.0, %v2128
    %2130 = vmatmul.bf16.gmra.mxu0 %v197
    %v2131 = vpop.f32.mrf.mxu0
    %v2132 = vadd.f32 0.0, %v2131
    %v2133 = vpop.f32.mrf.mxu0
    %v2134 = vadd.f32 0.0, %v2133
    %2135 = vmatmul.bf16.gmra.mxu0 %v199
    %v2136 = vpop.f32.mrf.mxu0
    %v2137 = vadd.f32 0.0, %v2136
    %v2138 = vpop.f32.mrf.mxu0
    %v2139 = vadd.f32 0.0, %v2138
    %2140 = vmatmul.bf16.gmra.mxu0 %v201
    %v2141 = vpop.f32.mrf.mxu0
    %v2142 = vadd.f32 0.0, %v2141
    %v2143 = vpop.f32.mrf.mxu0
    %v2144 = vadd.f32 0.0, %v2143
    %2145 = vmatmul.bf16.gmra.mxu0 %v203
    %v2146 = vpop.f32.mrf.mxu0
    %v2147 = vadd.f32 0.0, %v2146
    %v2148 = vpop.f32.mrf.mxu0
    %v2149 = vadd.f32 0.0, %v2148
    %2150 = vmatmul.bf16.gmra.mxu0 %v205
    %v2151 = vpop.f32.mrf.mxu0
    %v2152 = vadd.f32 0.0, %v2151
    %v2153 = vpop.f32.mrf.mxu0
    %v2154 = vadd.f32 0.0, %v2153
    %2155 = vmatmul.bf16.gmra.mxu0 %v207
    %v2156 = vpop.f32.mrf.mxu0
    %v2157 = vadd.f32 0.0, %v2156
    %v2158 = vpop.f32.mrf.mxu0
    %v2159 = vadd.f32 0.0, %v2158
    %2160 = vmatmul.bf16.gmra.mxu0 %v209
    %v2161 = vpop.f32.mrf.mxu0
    %v2162 = vadd.f32 0.0, %v2161
    %v2163 = vpop.f32.mrf.mxu0
    %v2164 = vadd.f32 0.0, %v2163
    %2165 = vmatmul.bf16.gmra.mxu0 %v211
    %v2166 = vpop.f32.mrf.mxu0
    %v2167 = vadd.f32 0.0, %v2166
    %v2168 = vpop.f32.mrf.mxu0
    %v2169 = vadd.f32 0.0, %v2168
    %2170 = vmatmul.bf16.gmra.mxu0 %v213
    %v2171 = vpop.f32.mrf.mxu0
    %v2172 = vadd.f32 0.0, %v2171
    %v2173 = vpop.f32.mrf.mxu0
    %v2174 = vadd.f32 0.0, %v2173
    %2175 = vmatmul.bf16.gmra.mxu0 %v215
    %v2176 = vpop.f32.mrf.mxu0
    %v2177 = vadd.f32 0.0, %v2176
    %v2178 = vpop.f32.mrf.mxu0
    %v2179 = vadd.f32 0.0, %v2178
    %2180 = vmatmul.bf16.gmra.mxu0 %v217
    %v2181 = vpop.f32.mrf.mxu0
    %v2182 = vadd.f32 0.0, %v2181
    %v2183 = vpop.f32.mrf.mxu0
    %v2184 = vadd.f32 0.0, %v2183
    %2185 = vmatmul.bf16.gmra.mxu0 %v219
    %v2186 = vpop.f32.mrf.mxu0
    %v2187 = vadd.f32 0.0, %v2186
    %v2188 = vpop.f32.mrf.mxu0
    %v2189 = vadd.f32 0.0, %v2188
    %2190 = vmatmul.bf16.gmra.mxu0 %v221
    %v2191 = vpop.f32.mrf.mxu0
    %v2192 = vadd.f32 0.0, %v2191
    %v2193 = vpop.f32.mrf.mxu0
    %v2194 = vadd.f32 0.0, %v2193
    %2195 = vmatmul.bf16.gmra.mxu0 %v223
    %v2196 = vpop.f32.mrf.mxu0
    %v2197 = vadd.f32 0.0, %v2196
    %v2198 = vpop.f32.mrf.mxu0
    %v2199 = vadd.f32 0.0, %v2198
    %2200 = vmatmul.bf16.gmra.mxu0 %v225
    %v2201 = vpop.f32.mrf.mxu0
    %v2202 = vadd.f32 0.0, %v2201
    %v2203 = vpop.f32.mrf.mxu0
    %v2204 = vadd.f32 0.0, %v2203
    %2205 = vmatmul.bf16.gmra.mxu0 %v227
    %v2206 = vpop.f32.mrf.mxu0
    %v2207 = vadd.f32 0.0, %v2206
    %v2208 = vpop.f32.mrf.mxu0
    %v2209 = vadd.f32 0.0, %v2208
    %2210 = vmatmul.bf16.gmra.mxu0 %v229
    %v2211 = vpop.f32.mrf.mxu0
    %v2212 = vadd.f32 0.0, %v2211
    %v2213 = vpop.f32.mrf.mxu0
    %v2214 = vadd.f32 0.0, %v2213
    %2215 = vmatmul.bf16.gmra.mxu0 %v231
    %v2216 = vpop.f32.mrf.mxu0
    %v2217 = vadd.f32 0.0, %v2216
    %v2218 = vpop.f32.mrf.mxu0
    %v2219 = vadd.f32 0.0, %v2218
    %2220 = vmatmul.bf16.gmra.mxu0 %v233
    %v2221 = vpop.f32.mrf.mxu0
    %v2222 = vadd.f32 0.0, %v2221
    %v2223 = vpop.f32.mrf.mxu0
    %v2224 = vadd.f32 0.0, %v2223
    %2225 = vmatmul.bf16.gmra.mxu0 %v235
    %v2226 = vpop.f32.mrf.mxu0
    %v2227 = vadd.f32 0.0, %v2226
    %v2228 = vpop.f32.mrf.mxu0
    %v2229 = vadd.f32 0.0, %v2228
    %2230 = vmatmul.bf16.gmra.mxu0 %v237
    %v2231 = vpop.f32.mrf.mxu0
    %v2232 = vadd.f32 0.0, %v2231
    %v2233 = vpop.f32.mrf.mxu0
    %v2234 = vadd.f32 0.0, %v2233
    %2235 = vdwg.mxu0
    %2236 = vmatpush.bf16.msra.mxu0 %v1189
    %2237 = vmatpush.bf16.msra.mxu0 %v1177
    %2238 = vmatpush.bf16.msra.mxu0 %v1165
    %2239 = vmatpush.bf16.msra.mxu0 %v1153
    %2240 = vmatpush.bf16.msra.mxu0 %v1141
    %2241 = vmatpush.bf16.msra.mxu0 %v1129
    %2242 = vmatpush.bf16.msra.mxu0 %v1117
    %2243 = vmatpush.bf16.msra.mxu0 %v1105
    %2244 = vmatmul.bf16.gmra.mxu0 %v176
    %v2245 = vpop.f32.mrf.mxu0
    %v2246 = vadd.f32 %v2077, %v2245
    %v2247 = vpop.f32.mrf.mxu0
    %v2248 = vadd.f32 %v2079, %v2247
    %2249 = vmatmul.bf16.gmra.mxu0 %v178
    %v2250 = vpop.f32.mrf.mxu0
    %v2251 = vadd.f32 %v2082, %v2250
    %v2252 = vpop.f32.mrf.mxu0
    %v2253 = vadd.f32 %v2084, %v2252
    %2254 = vmatmul.bf16.gmra.mxu0 %v180
    %v2255 = vpop.f32.mrf.mxu0
    %v2256 = vadd.f32 %v2087, %v2255
    %v2257 = vpop.f32.mrf.mxu0
    %v2258 = vadd.f32 %v2089, %v2257
    %2259 = vmatmul.bf16.gmra.mxu0 %v182
    %v2260 = vpop.f32.mrf.mxu0
    %v2261 = vadd.f32 %v2092, %v2260
    %v2262 = vpop.f32.mrf.mxu0
    %v2263 = vadd.f32 %v2094, %v2262
    %2264 = vmatmul.bf16.gmra.mxu0 %v184
    %v2265 = vpop.f32.mrf.mxu0
    %v2266 = vadd.f32 %v2097, %v2265
    %v2267 = vpop.f32.mrf.mxu0
    %v2268 = vadd.f32 %v2099, %v2267
    %2269 = vmatmul.bf16.gmra.mxu0 %v186
    %v2270 = vpop.f32.mrf.mxu0
    %v2271 = vadd.f32 %v2102, %v2270
    %v2272 = vpop.f32.mrf.mxu0
    %v2273 = vadd.f32 %v2104, %v2272
    %2274 = vmatmul.bf16.gmra.mxu0 %v188
    %v2275 = vpop.f32.mrf.mxu0
    %v2276 = vadd.f32 %v2107, %v2275
    %v2277 = vpop.f32.mrf.mxu0
    %v2278 = vadd.f32 %v2109, %v2277
    %2279 = vmatmul.bf16.gmra.mxu0 %v190
    %v2280 = vpop.f32.mrf.mxu0
    %v2281 = vadd.f32 %v2112, %v2280
    %v2282 = vpop.f32.mrf.mxu0
    %v2283 = vadd.f32 %v2114, %v2282
    %2284 = vmatmul.bf16.gmra.mxu0 %v192
    %v2285 = vpop.f32.mrf.mxu0
    %v2286 = vadd.f32 %v2117, %v2285
    %v2287 = vpop.f32.mrf.mxu0
    %v2288 = vadd.f32 %v2119, %v2287
    %2289 = vmatmul.bf16.gmra.mxu0 %v194
    %v2290 = vpop.f32.mrf.mxu0
    %v2291 = vadd.f32 %v2122, %v2290
    %v2292 = vpop.f32.mrf.mxu0
    %v2293 = vadd.f32 %v2124, %v2292
    %2294 = vmatmul.bf16.gmra.mxu0 %v196
    %v2295 = vpop.f32.mrf.mxu0
    %v2296 = vadd.f32 %v2127, %v2295
    %v2297 = vpop.f32.mrf.mxu0
    %v2298 = vadd.f32 %v2129, %v2297
    %2299 = vmatmul.bf16.gmra.mxu0 %v198
    %v2300 = vpop.f32.mrf.mxu0
    %v2301 = vadd.f32 %v2132, %v2300
    %v2302 = vpop.f32.mrf.mxu0
    %v2303 = vadd.f32 %v2134, %v2302
    %2304 = vmatmul.bf16.gmra.mxu0 %v200
    %v2305 = vpop.f32.mrf.mxu0
    %v2306 = vadd.f32 %v2137, %v2305
    %v2307 = vpop.f32.mrf.mxu0
    %v2308 = vadd.f32 %v2139, %v2307
    %2309 = vmatmul.bf16.gmra.mxu0 %v202
    %v2310 = vpop.f32.mrf.mxu0
    %v2311 = vadd.f32 %v2142, %v2310
    %v2312 = vpop.f32.mrf.mxu0
    %v2313 = vadd.f32 %v2144, %v2312
    %2314 = vmatmul.bf16.gmra.mxu0 %v204
    %v2315 = vpop.f32.mrf.mxu0
    %v2316 = vadd.f32 %v2147, %v2315
    %v2317 = vpop.f32.mrf.mxu0
    %v2318 = vadd.f32 %v2149, %v2317
    %2319 = vmatmul.bf16.gmra.mxu0 %v206
    %v2320 = vpop.f32.mrf.mxu0
    %v2321 = vadd.f32 %v2152, %v2320
    %v2322 = vpop.f32.mrf.mxu0
    %v2323 = vadd.f32 %v2154, %v2322
    %2324 = vmatmul.bf16.gmra.mxu0 %v208
    %v2325 = vpop.f32.mrf.mxu0
    %v2326 = vadd.f32 %v2157, %v2325
    %v2327 = vpop.f32.mrf.mxu0
    %v2328 = vadd.f32 %v2159, %v2327
    %2329 = vmatmul.bf16.gmra.mxu0 %v210
    %v2330 = vpop.f32.mrf.mxu0
    %v2331 = vadd.f32 %v2162, %v2330
    %v2332 = vpop.f32.mrf.mxu0
    %v2333 = vadd.f32 %v2164, %v2332
    %2334 = vmatmul.bf16.gmra.mxu0 %v212
    %v2335 = vpop.f32.mrf.mxu0
    %v2336 = vadd.f32 %v2167, %v2335
    %v2337 = vpop.f32.mrf.mxu0
    %v2338 = vadd.f32 %v2169, %v2337
    %2339 = vmatmul.bf16.gmra.mxu0 %v214
    %v2340 = vpop.f32.mrf.mxu0
    %v2341 = vadd.f32 %v2172, %v2340
    %v2342 = vpop.f32.mrf.mxu0
    %v2343 = vadd.f32 %v2174, %v2342
    %2344 = vmatmul.bf16.gmra.mxu0 %v216
    %v2345 = vpop.f32.mrf.mxu0
    %v2346 = vadd.f32 %v2177, %v2345
    %v2347 = vpop.f32.mrf.mxu0
    %v2348 = vadd.f32 %v2179, %v2347
    %2349 = vmatmul.bf16.gmra.mxu0 %v218
    %v2350 = vpop.f32.mrf.mxu0
    %v2351 = vadd.f32 %v2182, %v2350
    %v2352 = vpop.f32.mrf.mxu0
    %v2353 = vadd.f32 %v2184, %v2352
    %2354 = vmatmul.bf16.gmra.mxu0 %v220
    %v2355 = vpop.f32.mrf.mxu0
    %v2356 = vadd.f32 %v2187, %v2355
    %v2357 = vpop.f32.mrf.mxu0
    %v2358 = vadd.f32 %v2189, %v2357
    %2359 = vmatmul.bf16.gmra.mxu0 %v222
    %v2360 = vpop.f32.mrf.mxu0
    %v2361 = vadd.f32 %v2192, %v2360
    %v2362 = vpop.f32.mrf.mxu0
    %v2363 = vadd.f32 %v2194, %v2362
    %2364 = vmatmul.bf16.gmra.mxu0 %v224
    %v2365 = vpop.f32.mrf.mxu0
    %v2366 = vadd.f32 %v2197, %v2365
    %v2367 = vpop.f32.mrf.mxu0
    %v2368 = vadd.f32 %v2199, %v2367
    %2369 = vmatmul.bf16.gmra.mxu0 %v226
    %v2370 = vpop.f32.mrf.mxu0
    %v2371 = vadd.f32 %v2202, %v2370
    %v2372 = vpop.f32.mrf.mxu0
    %v2373 = vadd.f32 %v2204, %v2372
    %2374 = vmatmul.bf16.gmra.mxu0 %v228
    %v2375 = vpop.f32.mrf.mxu0
    %v2376 = vadd.f32 %v2207, %v2375
    %v2377 = vpop.f32.mrf.mxu0
    %v2378 = vadd.f32 %v2209, %v2377
    %2379 = vmatmul.bf16.gmra.mxu0 %v230
    %v2380 = vpop.f32.mrf.mxu0
    %v2381 = vadd.f32 %v2212, %v2380
    %v2382 = vpop.f32.mrf.mxu0
    %v2383 = vadd.f32 %v2214, %v2382
    %2384 = vmatmul.bf16.gmra.mxu0 %v232
    %v2385 = vpop.f32.mrf.mxu0
    %v2386 = vadd.f32 %v2217, %v2385
    %v2387 = vpop.f32.mrf.mxu0
    %v2388 = vadd.f32 %v2219, %v2387
    %2389 = vmatmul.bf16.gmra.mxu0 %v234
    %v2390 = vpop.f32.mrf.mxu0
    %v2391 = vadd.f32 %v2222, %v2390
    %v2392 = vpop.f32.mrf.mxu0
    %v2393 = vadd.f32 %v2224, %v2392
    %2394 = vmatmul.bf16.gmra.mxu0 %v236
    %v2395 = vpop.f32.mrf.mxu0
    %v2396 = vadd.f32 %v2227, %v2395
    %v2397 = vpop.f32.mrf.mxu0
    %v2398 = vadd.f32 %v2229, %v2397
    %2399 = vmatmul.bf16.gmra.mxu0 %v238
    %v2400 = vpop.f32.mrf.mxu0
    %v2401 = vadd.f32 %v2232, %v2400
    %v2402 = vpop.f32.mrf.mxu0
    %v2403 = vadd.f32 %v2234, %v2402
    %2404 = vdwg.mxu0
    %2405 = vmatpush.bf16.msra.mxu0 %v1094
    %2406 = vmatpush.bf16.msra.mxu0 %v1082
    %2407 = vmatpush.bf16.msra.mxu0 %v1070
    %2408 = vmatpush.bf16.msra.mxu0 %v1058
    %2409 = vmatpush.bf16.msra.mxu0 %v1046
    %2410 = vmatpush.bf16.msra.mxu0 %v1034
    %2411 = vmatpush.bf16.msra.mxu0 %v1022
    %2412 = vmatpush.bf16.msra.mxu0 %v1010
    %2413 = vmatmul.bf16.gmra.mxu0 %v175
    %v2414 = vpop.f32.mrf.mxu0
    %v2415 = vadd.f32 0.0, %v2414
    %v2416 = vpop.f32.mrf.mxu0
    %v2417 = vadd.f32 0.0, %v2416
    %2418 = vmatmul.bf16.gmra.mxu0 %v177
    %v2419 = vpop.f32.mrf.mxu0
    %v2420 = vadd.f32 0.0, %v2419
    %v2421 = vpop.f32.mrf.mxu0
    %v2422 = vadd.f32 0.0, %v2421
    %2423 = vmatmul.bf16.gmra.mxu0 %v179
    %v2424 = vpop.f32.mrf.mxu0
    %v2425 = vadd.f32 0.0, %v2424
    %v2426 = vpop.f32.mrf.mxu0
    %v2427 = vadd.f32 0.0, %v2426
    %2428 = vmatmul.bf16.gmra.mxu0 %v181
    %v2429 = vpop.f32.mrf.mxu0
    %v2430 = vadd.f32 0.0, %v2429
    %v2431 = vpop.f32.mrf.mxu0
    %v2432 = vadd.f32 0.0, %v2431
    %2433 = vmatmul.bf16.gmra.mxu0 %v183
    %v2434 = vpop.f32.mrf.mxu0
    %v2435 = vadd.f32 0.0, %v2434
    %v2436 = vpop.f32.mrf.mxu0
    %v2437 = vadd.f32 0.0, %v2436
    %2438 = vmatmul.bf16.gmra.mxu0 %v185
    %v2439 = vpop.f32.mrf.mxu0
    %v2440 = vadd.f32 0.0, %v2439
    %v2441 = vpop.f32.mrf.mxu0
    %v2442 = vadd.f32 0.0, %v2441
    %2443 = vmatmul.bf16.gmra.mxu0 %v187
    %v2444 = vpop.f32.mrf.mxu0
    %v2445 = vadd.f32 0.0, %v2444
    %v2446 = vpop.f32.mrf.mxu0
    %v2447 = vadd.f32 0.0, %v2446
    %2448 = vmatmul.bf16.gmra.mxu0 %v189
    %v2449 = vpop.f32.mrf.mxu0
    %v2450 = vadd.f32 0.0, %v2449
    %v2451 = vpop.f32.mrf.mxu0
    %v2452 = vadd.f32 0.0, %v2451
    %2453 = vmatmul.bf16.gmra.mxu0 %v191
    %v2454 = vpop.f32.mrf.mxu0
    %v2455 = vadd.f32 0.0, %v2454
    %v2456 = vpop.f32.mrf.mxu0
    %v2457 = vadd.f32 0.0, %v2456
    %2458 = vmatmul.bf16.gmra.mxu0 %v193
    %v2459 = vpop.f32.mrf.mxu0
    %v2460 = vadd.f32 0.0, %v2459
    %v2461 = vpop.f32.mrf.mxu0
    %v2462 = vadd.f32 0.0, %v2461
    %2463 = vmatmul.bf16.gmra.mxu0 %v195
    %v2464 = vpop.f32.mrf.mxu0
    %v2465 = vadd.f32 0.0, %v2464
    %v2466 = vpop.f32.mrf.mxu0
    %v2467 = vadd.f32 0.0, %v2466
    %2468 = vmatmul.bf16.gmra.mxu0 %v197
    %v2469 = vpop.f32.mrf.mxu0
    %v2470 = vadd.f32 0.0, %v2469
    %v2471 = vpop.f32.mrf.mxu0
    %v2472 = vadd.f32 0.0, %v2471
    %2473 = vmatmul.bf16.gmra.mxu0 %v199
    %v2474 = vpop.f32.mrf.mxu0
    %v2475 = vadd.f32 0.0, %v2474
    %v2476 = vpop.f32.mrf.mxu0
    %v2477 = vadd.f32 0.0, %v2476
    %2478 = vmatmul.bf16.gmra.mxu0 %v201
    %v2479 = vpop.f32.mrf.mxu0
    %v2480 = vadd.f32 0.0, %v2479
    %v2481 = vpop.f32.mrf.mxu0
    %v2482 = vadd.f32 0.0, %v2481
    %2483 = vmatmul.bf16.gmra.mxu0 %v203
    %v2484 = vpop.f32.mrf.mxu0
    %v2485 = vadd.f32 0.0, %v2484
    %v2486 = vpop.f32.mrf.mxu0
    %v2487 = vadd.f32 0.0, %v2486
    %2488 = vmatmul.bf16.gmra.mxu0 %v205
    %v2489 = vpop.f32.mrf.mxu0
    %v2490 = vadd.f32 0.0, %v2489
    %v2491 = vpop.f32.mrf.mxu0
    %v2492 = vadd.f32 0.0, %v2491
    %2493 = vmatmul.bf16.gmra.mxu0 %v207
    %v2494 = vpop.f32.mrf.mxu0
    %v2495 = vadd.f32 0.0, %v2494
    %v2496 = vpop.f32.mrf.mxu0
    %v2497 = vadd.f32 0.0, %v2496
    %2498 = vmatmul.bf16.gmra.mxu0 %v209
    %v2499 = vpop.f32.mrf.mxu0
    %v2500 = vadd.f32 0.0, %v2499
    %v2501 = vpop.f32.mrf.mxu0
    %v2502 = vadd.f32 0.0, %v2501
    %2503 = vmatmul.bf16.gmra.mxu0 %v211
    %v2504 = vpop.f32.mrf.mxu0
    %v2505 = vadd.f32 0.0, %v2504
    %v2506 = vpop.f32.mrf.mxu0
    %v2507 = vadd.f32 0.0, %v2506
    %2508 = vmatmul.bf16.gmra.mxu0 %v213
    %v2509 = vpop.f32.mrf.mxu0
    %v2510 = vadd.f32 0.0, %v2509
    %v2511 = vpop.f32.mrf.mxu0
    %v2512 = vadd.f32 0.0, %v2511
    %2513 = vmatmul.bf16.gmra.mxu0 %v215
    %v2514 = vpop.f32.mrf.mxu0
    %v2515 = vadd.f32 0.0, %v2514
    %v2516 = vpop.f32.mrf.mxu0
    %v2517 = vadd.f32 0.0, %v2516
    %2518 = vmatmul.bf16.gmra.mxu0 %v217
    %v2519 = vpop.f32.mrf.mxu0
    %v2520 = vadd.f32 0.0, %v2519
    %v2521 = vpop.f32.mrf.mxu0
    %v2522 = vadd.f32 0.0, %v2521
    %2523 = vmatmul.bf16.gmra.mxu0 %v219
    %v2524 = vpop.f32.mrf.mxu0
    %v2525 = vadd.f32 0.0, %v2524
    %v2526 = vpop.f32.mrf.mxu0
    %v2527 = vadd.f32 0.0, %v2526
    %2528 = vmatmul.bf16.gmra.mxu0 %v221
    %v2529 = vpop.f32.mrf.mxu0
    %v2530 = vadd.f32 0.0, %v2529
    %v2531 = vpop.f32.mrf.mxu0
    %v2532 = vadd.f32 0.0, %v2531
    %2533 = vmatmul.bf16.gmra.mxu0 %v223
    %v2534 = vpop.f32.mrf.mxu0
    %v2535 = vadd.f32 0.0, %v2534
    %v2536 = vpop.f32.mrf.mxu0
    %v2537 = vadd.f32 0.0, %v2536
    %2538 = vmatmul.bf16.gmra.mxu0 %v225
    %v2539 = vpop.f32.mrf.mxu0
    %v2540 = vadd.f32 0.0, %v2539
    %v2541 = vpop.f32.mrf.mxu0
    %v2542 = vadd.f32 0.0, %v2541
    %2543 = vmatmul.bf16.gmra.mxu0 %v227
    %v2544 = vpop.f32.mrf.mxu0
    %v2545 = vadd.f32 0.0, %v2544
    %v2546 = vpop.f32.mrf.mxu0
    %v2547 = vadd.f32 0.0, %v2546
    %2548 = vmatmul.bf16.gmra.mxu0 %v229
    %v2549 = vpop.f32.mrf.mxu0
    %v2550 = vadd.f32 0.0, %v2549
    %v2551 = vpop.f32.mrf.mxu0
    %v2552 = vadd.f32 0.0, %v2551
    %2553 = vmatmul.bf16.gmra.mxu0 %v231
    %v2554 = vpop.f32.mrf.mxu0
    %v2555 = vadd.f32 0.0, %v2554
    %v2556 = vpop.f32.mrf.mxu0
    %v2557 = vadd.f32 0.0, %v2556
    %2558 = vmatmul.bf16.gmra.mxu0 %v233
    %v2559 = vpop.f32.mrf.mxu0
    %v2560 = vadd.f32 0.0, %v2559
    %v2561 = vpop.f32.mrf.mxu0
    %v2562 = vadd.f32 0.0, %v2561
    %2563 = vmatmul.bf16.gmra.mxu0 %v235
    %v2564 = vpop.f32.mrf.mxu0
    %v2565 = vadd.f32 0.0, %v2564
    %v2566 = vpop.f32.mrf.mxu0
    %v2567 = vadd.f32 0.0, %v2566
    %2568 = vmatmul.bf16.gmra.mxu0 %v237
    %v2569 = vpop.f32.mrf.mxu0
    %v2570 = vadd.f32 0.0, %v2569
    %v2571 = vpop.f32.mrf.mxu0
    %v2572 = vadd.f32 0.0, %v2571
    %2573 = vdwg.mxu0
    %2574 = vmatpush.bf16.msra.mxu0 %v1190
    %2575 = vmatpush.bf16.msra.mxu0 %v1178
    %2576 = vmatpush.bf16.msra.mxu0 %v1166
    %2577 = vmatpush.bf16.msra.mxu0 %v1154
    %2578 = vmatpush.bf16.msra.mxu0 %v1142
    %2579 = vmatpush.bf16.msra.mxu0 %v1130
    %2580 = vmatpush.bf16.msra.mxu0 %v1118
    %2581 = vmatpush.bf16.msra.mxu0 %v1106
    %2582 = vmatmul.bf16.gmra.mxu0 %v176
    %v2583 = vpop.f32.mrf.mxu0
    %v2584 = vadd.f32 %v2415, %v2583
    %v2585 = vpop.f32.mrf.mxu0
    %v2586 = vadd.f32 %v2417, %v2585
    %2587 = vmatmul.bf16.gmra.mxu0 %v178
    %v2588 = vpop.f32.mrf.mxu0
    %v2589 = vadd.f32 %v2420, %v2588
    %v2590 = vpop.f32.mrf.mxu0
    %v2591 = vadd.f32 %v2422, %v2590
    %2592 = vmatmul.bf16.gmra.mxu0 %v180
    %v2593 = vpop.f32.mrf.mxu0
    %v2594 = vadd.f32 %v2425, %v2593
    %v2595 = vpop.f32.mrf.mxu0
    %v2596 = vadd.f32 %v2427, %v2595
    %2597 = vmatmul.bf16.gmra.mxu0 %v182
    %v2598 = vpop.f32.mrf.mxu0
    %v2599 = vadd.f32 %v2430, %v2598
    %v2600 = vpop.f32.mrf.mxu0
    %v2601 = vadd.f32 %v2432, %v2600
    %2602 = vmatmul.bf16.gmra.mxu0 %v184
    %v2603 = vpop.f32.mrf.mxu0
    %v2604 = vadd.f32 %v2435, %v2603
    %v2605 = vpop.f32.mrf.mxu0
    %v2606 = vadd.f32 %v2437, %v2605
    %2607 = vmatmul.bf16.gmra.mxu0 %v186
    %v2608 = vpop.f32.mrf.mxu0
    %v2609 = vadd.f32 %v2440, %v2608
    %v2610 = vpop.f32.mrf.mxu0
    %v2611 = vadd.f32 %v2442, %v2610
    %2612 = vmatmul.bf16.gmra.mxu0 %v188
    %v2613 = vpop.f32.mrf.mxu0
    %v2614 = vadd.f32 %v2445, %v2613
    %v2615 = vpop.f32.mrf.mxu0
    %v2616 = vadd.f32 %v2447, %v2615
    %2617 = vmatmul.bf16.gmra.mxu0 %v190
    %v2618 = vpop.f32.mrf.mxu0
    %v2619 = vadd.f32 %v2450, %v2618
    %v2620 = vpop.f32.mrf.mxu0
    %v2621 = vadd.f32 %v2452, %v2620
    %2622 = vmatmul.bf16.gmra.mxu0 %v192
    %v2623 = vpop.f32.mrf.mxu0
    %v2624 = vadd.f32 %v2455, %v2623
    %v2625 = vpop.f32.mrf.mxu0
    %v2626 = vadd.f32 %v2457, %v2625
    %2627 = vmatmul.bf16.gmra.mxu0 %v194
    %v2628 = vpop.f32.mrf.mxu0
    %v2629 = vadd.f32 %v2460, %v2628
    %v2630 = vpop.f32.mrf.mxu0
    %v2631 = vadd.f32 %v2462, %v2630
    %2632 = vmatmul.bf16.gmra.mxu0 %v196
    %v2633 = vpop.f32.mrf.mxu0
    %v2634 = vadd.f32 %v2465, %v2633
    %v2635 = vpop.f32.mrf.mxu0
    %v2636 = vadd.f32 %v2467, %v2635
    %2637 = vmatmul.bf16.gmra.mxu0 %v198
    %v2638 = vpop.f32.mrf.mxu0
    %v2639 = vadd.f32 %v2470, %v2638
    %v2640 = vpop.f32.mrf.mxu0
    %v2641 = vadd.f32 %v2472, %v2640
    %2642 = vmatmul.bf16.gmra.mxu0 %v200
    %v2643 = vpop.f32.mrf.mxu0
    %v2644 = vadd.f32 %v2475, %v2643
    %v2645 = vpop.f32.mrf.mxu0
    %v2646 = vadd.f32 %v2477, %v2645
    %2647 = vmatmul.bf16.gmra.mxu0 %v202
    %v2648 = vpop.f32.mrf.mxu0
    %v2649 = vadd.f32 %v2480, %v2648
    %v2650 = vpop.f32.mrf.mxu0
    %v2651 = vadd.f32 %v2482, %v2650
    %2652 = vmatmul.bf16.gmra.mxu0 %v204
    %v2653 = vpop.f32.mrf.mxu0
    %v2654 = vadd.f32 %v2485, %v2653
    %v2655 = vpop.f32.mrf.mxu0
    %v2656 = vadd.f32 %v2487, %v2655
    %2657 = vmatmul.bf16.gmra.mxu0 %v206
    %v2658 = vpop.f32.mrf.mxu0
    %v2659 = vadd.f32 %v2490, %v2658
    %v2660 = vpop.f32.mrf.mxu0
    %v2661 = vadd.f32 %v2492, %v2660
    %2662 = vmatmul.bf16.gmra.mxu0 %v208
    %v2663 = vpop.f32.mrf.mxu0
    %v2664 = vadd.f32 %v2495, %v2663
    %v2665 = vpop.f32.mrf.mxu0
    %v2666 = vadd.f32 %v2497, %v2665
    %2667 = vmatmul.bf16.gmra.mxu0 %v210
    %v2668 = vpop.f32.mrf.mxu0
    %v2669 = vadd.f32 %v2500, %v2668
    %v2670 = vpop.f32.mrf.mxu0
    %v2671 = vadd.f32 %v2502, %v2670
    %2672 = vmatmul.bf16.gmra.mxu0 %v212
    %v2673 = vpop.f32.mrf.mxu0
    %v2674 = vadd.f32 %v2505, %v2673
    %v2675 = vpop.f32.mrf.mxu0
    %v2676 = vadd.f32 %v2507, %v2675
    %2677 = vmatmul.bf16.gmra.mxu0 %v214
    %v2678 = vpop.f32.mrf.mxu0
    %v2679 = vadd.f32 %v2510, %v2678
    %v2680 = vpop.f32.mrf.mxu0
    %v2681 = vadd.f32 %v2512, %v2680
    %2682 = vmatmul.bf16.gmra.mxu0 %v216
    %v2683 = vpop.f32.mrf.mxu0
    %v2684 = vadd.f32 %v2515, %v2683
    %v2685 = vpop.f32.mrf.mxu0
    %v2686 = vadd.f32 %v2517, %v2685
    %2687 = vmatmul.bf16.gmra.mxu0 %v218
    %v2688 = vpop.f32.mrf.mxu0
    %v2689 = vadd.f32 %v2520, %v2688
    %v2690 = vpop.f32.mrf.mxu0
    %v2691 = vadd.f32 %v2522, %v2690
    %2692 = vmatmul.bf16.gmra.mxu0 %v220
    %v2693 = vpop.f32.mrf.mxu0
    %v2694 = vadd.f32 %v2525, %v2693
    %v2695 = vpop.f32.mrf.mxu0
    %v2696 = vadd.f32 %v2527, %v2695
    %2697 = vmatmul.bf16.gmra.mxu0 %v222
    %v2698 = vpop.f32.mrf.mxu0
    %v2699 = vadd.f32 %v2530, %v2698
    %v2700 = vpop.f32.mrf.mxu0
    %v2701 = vadd.f32 %v2532, %v2700
    %2702 = vmatmul.bf16.gmra.mxu0 %v224
    %v2703 = vpop.f32.mrf.mxu0
    %v2704 = vadd.f32 %v2535, %v2703
    %v2705 = vpop.f32.mrf.mxu0
    %v2706 = vadd.f32 %v2537, %v2705
    %2707 = vmatmul.bf16.gmra.mxu0 %v226
    %v2708 = vpop.f32.mrf.mxu0
    %v2709 = vadd.f32 %v2540, %v2708
    %v2710 = vpop.f32.mrf.mxu0
    %v2711 = vadd.f32 %v2542, %v2710
    %2712 = vmatmul.bf16.gmra.mxu0 %v228
    %v2713 = vpop.f32.mrf.mxu0
    %v2714 = vadd.f32 %v2545, %v2713
    %v2715 = vpop.f32.mrf.mxu0
    %v2716 = vadd.f32 %v2547, %v2715
    %2717 = vmatmul.bf16.gmra.mxu0 %v230
    %v2718 = vpop.f32.mrf.mxu0
    %v2719 = vadd.f32 %v2550, %v2718
    %v2720 = vpop.f32.mrf.mxu0
    %v2721 = vadd.f32 %v2552, %v2720
    %2722 = vmatmul.bf16.gmra.mxu0 %v232
    %v2723 = vpop.f32.mrf.mxu0
    %v2724 = vadd.f32 %v2555, %v2723
    %v2725 = vpop.f32.mrf.mxu0
    %v2726 = vadd.f32 %v2557, %v2725
    %2727 = vmatmul.bf16.gmra.mxu0 %v234
    %v2728 = vpop.f32.mrf.mxu0
    %v2729 = vadd.f32 %v2560, %v2728
    %v2730 = vpop.f32.mrf.mxu0
    %v2731 = vadd.f32 %v2562, %v2730
    %2732 = vmatmul.bf16.gmra.mxu0 %v236
    %v2733 = vpop.f32.mrf.mxu0
    %v2734 = vadd.f32 %v2565, %v2733
    %v2735 = vpop.f32.mrf.mxu0
    %v2736 = vadd.f32 %v2567, %v2735
    %2737 = vmatmul.bf16.gmra.mxu0 %v238
    %v2738 = vpop.f32.mrf.mxu0
    %v2739 = vadd.f32 %v2570, %v2738
    %v2740 = vpop.f32.mrf.mxu0
    %v2741 = vadd.f32 %v2572, %v2740
    %2742 = vdwg.mxu0
    %2743 = vmatpush.bf16.msra.mxu0 %v1095
    %2744 = vmatpush.bf16.msra.mxu0 %v1083
    %2745 = vmatpush.bf16.msra.mxu0 %v1071
    %2746 = vmatpush.bf16.msra.mxu0 %v1059
    %2747 = vmatpush.bf16.msra.mxu0 %v1047
    %2748 = vmatpush.bf16.msra.mxu0 %v1035
    %2749 = vmatpush.bf16.msra.mxu0 %v1023
    %2750 = vmatpush.bf16.msra.mxu0 %v1011
    %2751 = vmatmul.bf16.gmra.mxu0 %v175
    %v2752 = vpop.f32.mrf.mxu0
    %v2753 = vadd.f32 0.0, %v2752
    %v2754 = vpop.f32.mrf.mxu0
    %v2755 = vadd.f32 0.0, %v2754
    %2756 = vmatmul.bf16.gmra.mxu0 %v177
    %v2757 = vpop.f32.mrf.mxu0
    %v2758 = vadd.f32 0.0, %v2757
    %v2759 = vpop.f32.mrf.mxu0
    %v2760 = vadd.f32 0.0, %v2759
    %2761 = vmatmul.bf16.gmra.mxu0 %v179
    %v2762 = vpop.f32.mrf.mxu0
    %v2763 = vadd.f32 0.0, %v2762
    %v2764 = vpop.f32.mrf.mxu0
    %v2765 = vadd.f32 0.0, %v2764
    %2766 = vmatmul.bf16.gmra.mxu0 %v181
    %v2767 = vpop.f32.mrf.mxu0
    %v2768 = vadd.f32 0.0, %v2767
    %v2769 = vpop.f32.mrf.mxu0
    %v2770 = vadd.f32 0.0, %v2769
    %2771 = vmatmul.bf16.gmra.mxu0 %v183
    %v2772 = vpop.f32.mrf.mxu0
    %v2773 = vadd.f32 0.0, %v2772
    %v2774 = vpop.f32.mrf.mxu0
    %v2775 = vadd.f32 0.0, %v2774
    %2776 = vmatmul.bf16.gmra.mxu0 %v185
    %v2777 = vpop.f32.mrf.mxu0
    %v2778 = vadd.f32 0.0, %v2777
    %v2779 = vpop.f32.mrf.mxu0
    %v2780 = vadd.f32 0.0, %v2779
    %2781 = vmatmul.bf16.gmra.mxu0 %v187
    %v2782 = vpop.f32.mrf.mxu0
    %v2783 = vadd.f32 0.0, %v2782
    %v2784 = vpop.f32.mrf.mxu0
    %v2785 = vadd.f32 0.0, %v2784
    %2786 = vmatmul.bf16.gmra.mxu0 %v189
    %v2787 = vpop.f32.mrf.mxu0
    %v2788 = vadd.f32 0.0, %v2787
    %v2789 = vpop.f32.mrf.mxu0
    %v2790 = vadd.f32 0.0, %v2789
    %2791 = vmatmul.bf16.gmra.mxu0 %v191
    %v2792 = vpop.f32.mrf.mxu0
    %v2793 = vadd.f32 0.0, %v2792
    %v2794 = vpop.f32.mrf.mxu0
    %v2795 = vadd.f32 0.0, %v2794
    %2796 = vmatmul.bf16.gmra.mxu0 %v193
    %v2797 = vpop.f32.mrf.mxu0
    %v2798 = vadd.f32 0.0, %v2797
    %v2799 = vpop.f32.mrf.mxu0
    %v2800 = vadd.f32 0.0, %v2799
    %2801 = vmatmul.bf16.gmra.mxu0 %v195
    %v2802 = vpop.f32.mrf.mxu0
    %v2803 = vadd.f32 0.0, %v2802
    %v2804 = vpop.f32.mrf.mxu0
    %v2805 = vadd.f32 0.0, %v2804
    %2806 = vmatmul.bf16.gmra.mxu0 %v197
    %v2807 = vpop.f32.mrf.mxu0
    %v2808 = vadd.f32 0.0, %v2807
    %v2809 = vpop.f32.mrf.mxu0
    %v2810 = vadd.f32 0.0, %v2809
    %2811 = vmatmul.bf16.gmra.mxu0 %v199
    %v2812 = vpop.f32.mrf.mxu0
    %v2813 = vadd.f32 0.0, %v2812
    %v2814 = vpop.f32.mrf.mxu0
    %v2815 = vadd.f32 0.0, %v2814
    %2816 = vmatmul.bf16.gmra.mxu0 %v201
    %v2817 = vpop.f32.mrf.mxu0
    %v2818 = vadd.f32 0.0, %v2817
    %v2819 = vpop.f32.mrf.mxu0
    %v2820 = vadd.f32 0.0, %v2819
    %2821 = vmatmul.bf16.gmra.mxu0 %v203
    %v2822 = vpop.f32.mrf.mxu0
    %v2823 = vadd.f32 0.0, %v2822
    %v2824 = vpop.f32.mrf.mxu0
    %v2825 = vadd.f32 0.0, %v2824
    %2826 = vmatmul.bf16.gmra.mxu0 %v205
    %v2827 = vpop.f32.mrf.mxu0
    %v2828 = vadd.f32 0.0, %v2827
    %v2829 = vpop.f32.mrf.mxu0
    %v2830 = vadd.f32 0.0, %v2829
    %2831 = vmatmul.bf16.gmra.mxu0 %v207
    %v2832 = vpop.f32.mrf.mxu0
    %v2833 = vadd.f32 0.0, %v2832
    %v2834 = vpop.f32.mrf.mxu0
    %v2835 = vadd.f32 0.0, %v2834
    %2836 = vmatmul.bf16.gmra.mxu0 %v209
    %v2837 = vpop.f32.mrf.mxu0
    %v2838 = vadd.f32 0.0, %v2837
    %v2839 = vpop.f32.mrf.mxu0
    %v2840 = vadd.f32 0.0, %v2839
    %2841 = vmatmul.bf16.gmra.mxu0 %v211
    %v2842 = vpop.f32.mrf.mxu0
    %v2843 = vadd.f32 0.0, %v2842
    %v2844 = vpop.f32.mrf.mxu0
    %v2845 = vadd.f32 0.0, %v2844
    %2846 = vmatmul.bf16.gmra.mxu0 %v213
    %v2847 = vpop.f32.mrf.mxu0
    %v2848 = vadd.f32 0.0, %v2847
    %v2849 = vpop.f32.mrf.mxu0
    %v2850 = vadd.f32 0.0, %v2849
    %2851 = vmatmul.bf16.gmra.mxu0 %v215
    %v2852 = vpop.f32.mrf.mxu0
    %v2853 = vadd.f32 0.0, %v2852
    %v2854 = vpop.f32.mrf.mxu0
    %v2855 = vadd.f32 0.0, %v2854
    %2856 = vmatmul.bf16.gmra.mxu0 %v217
    %v2857 = vpop.f32.mrf.mxu0
    %v2858 = vadd.f32 0.0, %v2857
    %v2859 = vpop.f32.mrf.mxu0
    %v2860 = vadd.f32 0.0, %v2859
    %2861 = vmatmul.bf16.gmra.mxu0 %v219
    %v2862 = vpop.f32.mrf.mxu0
    %v2863 = vadd.f32 0.0, %v2862
    %v2864 = vpop.f32.mrf.mxu0
    %v2865 = vadd.f32 0.0, %v2864
    %2866 = vmatmul.bf16.gmra.mxu0 %v221
    %v2867 = vpop.f32.mrf.mxu0
    %v2868 = vadd.f32 0.0, %v2867
    %v2869 = vpop.f32.mrf.mxu0
    %v2870 = vadd.f32 0.0, %v2869
    %2871 = vmatmul.bf16.gmra.mxu0 %v223
    %v2872 = vpop.f32.mrf.mxu0
    %v2873 = vadd.f32 0.0, %v2872
    %v2874 = vpop.f32.mrf.mxu0
    %v2875 = vadd.f32 0.0, %v2874
    %2876 = vmatmul.bf16.gmra.mxu0 %v225
    %v2877 = vpop.f32.mrf.mxu0
    %v2878 = vadd.f32 0.0, %v2877
    %v2879 = vpop.f32.mrf.mxu0
    %v2880 = vadd.f32 0.0, %v2879
    %2881 = vmatmul.bf16.gmra.mxu0 %v227
    %v2882 = vpop.f32.mrf.mxu0
    %v2883 = vadd.f32 0.0, %v2882
    %v2884 = vpop.f32.mrf.mxu0
    %v2885 = vadd.f32 0.0, %v2884
    %2886 = vmatmul.bf16.gmra.mxu0 %v229
    %v2887 = vpop.f32.mrf.mxu0
    %v2888 = vadd.f32 0.0, %v2887
    %v2889 = vpop.f32.mrf.mxu0
    %v2890 = vadd.f32 0.0, %v2889
    %2891 = vmatmul.bf16.gmra.mxu0 %v231
    %v2892 = vpop.f32.mrf.mxu0
    %v2893 = vadd.f32 0.0, %v2892
    %v2894 = vpop.f32.mrf.mxu0
    %v2895 = vadd.f32 0.0, %v2894
    %2896 = vmatmul.bf16.gmra.mxu0 %v233
    %v2897 = vpop.f32.mrf.mxu0
    %v2898 = vadd.f32 0.0, %v2897
    %v2899 = vpop.f32.mrf.mxu0
    %v2900 = vadd.f32 0.0, %v2899
    %2901 = vmatmul.bf16.gmra.mxu0 %v235
    %v2902 = vpop.f32.mrf.mxu0
    %v2903 = vadd.f32 0.0, %v2902
    %v2904 = vpop.f32.mrf.mxu0
    %v2905 = vadd.f32 0.0, %v2904
    %2906 = vmatmul.bf16.gmra.mxu0 %v237
    %v2907 = vpop.f32.mrf.mxu0
    %v2908 = vadd.f32 0.0, %v2907
    %v2909 = vpop.f32.mrf.mxu0
    %v2910 = vadd.f32 0.0, %v2909
    %2911 = vdwg.mxu0
    %2912 = vmatpush.bf16.msra.mxu0 %v1191
    %2913 = vmatpush.bf16.msra.mxu0 %v1179
    %2914 = vmatpush.bf16.msra.mxu0 %v1167
    %2915 = vmatpush.bf16.msra.mxu0 %v1155
    %2916 = vmatpush.bf16.msra.mxu0 %v1143
    %2917 = vmatpush.bf16.msra.mxu0 %v1131
    %2918 = vmatpush.bf16.msra.mxu0 %v1119
    %2919 = vmatpush.bf16.msra.mxu0 %v1107
    %2920 = vmatmul.bf16.gmra.mxu0 %v176
    %v2921 = vpop.f32.mrf.mxu0
    %v2922 = vadd.f32 %v2753, %v2921
    %v2923 = vpop.f32.mrf.mxu0
    %v2924 = vadd.f32 %v2755, %v2923
    %2925 = vmatmul.bf16.gmra.mxu0 %v178
    %v2926 = vpop.f32.mrf.mxu0
    %v2927 = vadd.f32 %v2758, %v2926
    %v2928 = vpop.f32.mrf.mxu0
    %v2929 = vadd.f32 %v2760, %v2928
    %2930 = vmatmul.bf16.gmra.mxu0 %v180
    %v2931 = vpop.f32.mrf.mxu0
    %v2932 = vadd.f32 %v2763, %v2931
    %v2933 = vpop.f32.mrf.mxu0
    %v2934 = vadd.f32 %v2765, %v2933
    %2935 = vmatmul.bf16.gmra.mxu0 %v182
    %v2936 = vpop.f32.mrf.mxu0
    %v2937 = vadd.f32 %v2768, %v2936
    %v2938 = vpop.f32.mrf.mxu0
    %v2939 = vadd.f32 %v2770, %v2938
    %2940 = vmatmul.bf16.gmra.mxu0 %v184
    %v2941 = vpop.f32.mrf.mxu0
    %v2942 = vadd.f32 %v2773, %v2941
    %v2943 = vpop.f32.mrf.mxu0
    %v2944 = vadd.f32 %v2775, %v2943
    %2945 = vmatmul.bf16.gmra.mxu0 %v186
    %v2946 = vpop.f32.mrf.mxu0
    %v2947 = vadd.f32 %v2778, %v2946
    %v2948 = vpop.f32.mrf.mxu0
    %v2949 = vadd.f32 %v2780, %v2948
    %2950 = vmatmul.bf16.gmra.mxu0 %v188
    %v2951 = vpop.f32.mrf.mxu0
    %v2952 = vadd.f32 %v2783, %v2951
    %v2953 = vpop.f32.mrf.mxu0
    %v2954 = vadd.f32 %v2785, %v2953
    %2955 = vmatmul.bf16.gmra.mxu0 %v190
    %v2956 = vpop.f32.mrf.mxu0
    %v2957 = vadd.f32 %v2788, %v2956
    %v2958 = vpop.f32.mrf.mxu0
    %v2959 = vadd.f32 %v2790, %v2958
    %2960 = vmatmul.bf16.gmra.mxu0 %v192
    %v2961 = vpop.f32.mrf.mxu0
    %v2962 = vadd.f32 %v2793, %v2961
    %v2963 = vpop.f32.mrf.mxu0
    %v2964 = vadd.f32 %v2795, %v2963
    %2965 = vmatmul.bf16.gmra.mxu0 %v194
    %v2966 = vpop.f32.mrf.mxu0
    %v2967 = vadd.f32 %v2798, %v2966
    %v2968 = vpop.f32.mrf.mxu0
    %v2969 = vadd.f32 %v2800, %v2968
    %2970 = vmatmul.bf16.gmra.mxu0 %v196
    %v2971 = vpop.f32.mrf.mxu0
    %v2972 = vadd.f32 %v2803, %v2971
    %v2973 = vpop.f32.mrf.mxu0
    %v2974 = vadd.f32 %v2805, %v2973
    %2975 = vmatmul.bf16.gmra.mxu0 %v198
    %v2976 = vpop.f32.mrf.mxu0
    %v2977 = vadd.f32 %v2808, %v2976
    %v2978 = vpop.f32.mrf.mxu0
    %v2979 = vadd.f32 %v2810, %v2978
    %2980 = vmatmul.bf16.gmra.mxu0 %v200
    %v2981 = vpop.f32.mrf.mxu0
    %v2982 = vadd.f32 %v2813, %v2981
    %v2983 = vpop.f32.mrf.mxu0
    %v2984 = vadd.f32 %v2815, %v2983
    %2985 = vmatmul.bf16.gmra.mxu0 %v202
    %v2986 = vpop.f32.mrf.mxu0
    %v2987 = vadd.f32 %v2818, %v2986
    %v2988 = vpop.f32.mrf.mxu0
    %v2989 = vadd.f32 %v2820, %v2988
    %2990 = vmatmul.bf16.gmra.mxu0 %v204
    %v2991 = vpop.f32.mrf.mxu0
    %v2992 = vadd.f32 %v2823, %v2991
    %v2993 = vpop.f32.mrf.mxu0
    %v2994 = vadd.f32 %v2825, %v2993
    %2995 = vmatmul.bf16.gmra.mxu0 %v206
    %v2996 = vpop.f32.mrf.mxu0
    %v2997 = vadd.f32 %v2828, %v2996
    %v2998 = vpop.f32.mrf.mxu0
    %v2999 = vadd.f32 %v2830, %v2998
    %3000 = vmatmul.bf16.gmra.mxu0 %v208
    %v3001 = vpop.f32.mrf.mxu0
    %v3002 = vadd.f32 %v2833, %v3001
    %v3003 = vpop.f32.mrf.mxu0
    %v3004 = vadd.f32 %v2835, %v3003
    %3005 = vmatmul.bf16.gmra.mxu0 %v210
    %v3006 = vpop.f32.mrf.mxu0
    %v3007 = vadd.f32 %v2838, %v3006
    %v3008 = vpop.f32.mrf.mxu0
    %v3009 = vadd.f32 %v2840, %v3008
    %3010 = vmatmul.bf16.gmra.mxu0 %v212
    %v3011 = vpop.f32.mrf.mxu0
    %v3012 = vadd.f32 %v2843, %v3011
    %v3013 = vpop.f32.mrf.mxu0
    %v3014 = vadd.f32 %v2845, %v3013
    %3015 = vmatmul.bf16.gmra.mxu0 %v214
    %v3016 = vpop.f32.mrf.mxu0
    %v3017 = vadd.f32 %v2848, %v3016
    %v3018 = vpop.f32.mrf.mxu0
    %v3019 = vadd.f32 %v2850, %v3018
    %3020 = vmatmul.bf16.gmra.mxu0 %v216
    %v3021 = vpop.f32.mrf.mxu0
    %v3022 = vadd.f32 %v2853, %v3021
    %v3023 = vpop.f32.mrf.mxu0
    %v3024 = vadd.f32 %v2855, %v3023
    %3025 = vmatmul.bf16.gmra.mxu0 %v218
    %v3026 = vpop.f32.mrf.mxu0
    %v3027 = vadd.f32 %v2858, %v3026
    %v3028 = vpop.f32.mrf.mxu0
    %v3029 = vadd.f32 %v2860, %v3028
    %3030 = vmatmul.bf16.gmra.mxu0 %v220
    %v3031 = vpop.f32.mrf.mxu0
    %v3032 = vadd.f32 %v2863, %v3031
    %v3033 = vpop.f32.mrf.mxu0
    %v3034 = vadd.f32 %v2865, %v3033
    %3035 = vmatmul.bf16.gmra.mxu0 %v222
    %v3036 = vpop.f32.mrf.mxu0
    %v3037 = vadd.f32 %v2868, %v3036
    %v3038 = vpop.f32.mrf.mxu0
    %v3039 = vadd.f32 %v2870, %v3038
    %3040 = vmatmul.bf16.gmra.mxu0 %v224
    %v3041 = vpop.f32.mrf.mxu0
    %v3042 = vadd.f32 %v2873, %v3041
    %v3043 = vpop.f32.mrf.mxu0
    %v3044 = vadd.f32 %v2875, %v3043
    %3045 = vmatmul.bf16.gmra.mxu0 %v226
    %v3046 = vpop.f32.mrf.mxu0
    %v3047 = vadd.f32 %v2878, %v3046
    %v3048 = vpop.f32.mrf.mxu0
    %v3049 = vadd.f32 %v2880, %v3048
    %3050 = vmatmul.bf16.gmra.mxu0 %v228
    %v3051 = vpop.f32.mrf.mxu0
    %v3052 = vadd.f32 %v2883, %v3051
    %v3053 = vpop.f32.mrf.mxu0
    %v3054 = vadd.f32 %v2885, %v3053
    %3055 = vmatmul.bf16.gmra.mxu0 %v230
    %v3056 = vpop.f32.mrf.mxu0
    %v3057 = vadd.f32 %v2888, %v3056
    %v3058 = vpop.f32.mrf.mxu0
    %v3059 = vadd.f32 %v2890, %v3058
    %3060 = vmatmul.bf16.gmra.mxu0 %v232
    %v3061 = vpop.f32.mrf.mxu0
    %v3062 = vadd.f32 %v2893, %v3061
    %v3063 = vpop.f32.mrf.mxu0
    %v3064 = vadd.f32 %v2895, %v3063
    %3065 = vmatmul.bf16.gmra.mxu0 %v234
    %v3066 = vpop.f32.mrf.mxu0
    %v3067 = vadd.f32 %v2898, %v3066
    %v3068 = vpop.f32.mrf.mxu0
    %v3069 = vadd.f32 %v2900, %v3068
    %3070 = vmatmul.bf16.gmra.mxu0 %v236
    %v3071 = vpop.f32.mrf.mxu0
    %v3072 = vadd.f32 %v2903, %v3071
    %v3073 = vpop.f32.mrf.mxu0
    %v3074 = vadd.f32 %v2905, %v3073
    %3075 = vmatmul.bf16.gmra.mxu0 %v238
    %v3076 = vpop.f32.mrf.mxu0
    %v3077 = vadd.f32 %v2908, %v3076
    %v3078 = vpop.f32.mrf.mxu0
    %v3079 = vadd.f32 %v2910, %v3078
    %3080 = vdwg.mxu0
    %3081 = vmatpush.bf16.msra.mxu0 %v1096
    %3082 = vmatpush.bf16.msra.mxu0 %v1084
    %3083 = vmatpush.bf16.msra.mxu0 %v1072
    %3084 = vmatpush.bf16.msra.mxu0 %v1060
    %3085 = vmatpush.bf16.msra.mxu0 %v1048
    %3086 = vmatpush.bf16.msra.mxu0 %v1036
    %3087 = vmatpush.bf16.msra.mxu0 %v1024
    %3088 = vmatpush.bf16.msra.mxu0 %v1012
    %3089 = vmatmul.bf16.gmra.mxu0 %v175
    %v3090 = vpop.f32.mrf.mxu0
    %v3091 = vadd.f32 0.0, %v3090
    %v3092 = vpop.f32.mrf.mxu0
    %v3093 = vadd.f32 0.0, %v3092
    %3094 = vmatmul.bf16.gmra.mxu0 %v177
    %v3095 = vpop.f32.mrf.mxu0
    %v3096 = vadd.f32 0.0, %v3095
    %v3097 = vpop.f32.mrf.mxu0
    %v3098 = vadd.f32 0.0, %v3097
    %3099 = vmatmul.bf16.gmra.mxu0 %v179
    %v3100 = vpop.f32.mrf.mxu0
    %v3101 = vadd.f32 0.0, %v3100
    %v3102 = vpop.f32.mrf.mxu0
    %v3103 = vadd.f32 0.0, %v3102
    %3104 = vmatmul.bf16.gmra.mxu0 %v181
    %v3105 = vpop.f32.mrf.mxu0
    %v3106 = vadd.f32 0.0, %v3105
    %v3107 = vpop.f32.mrf.mxu0
    %v3108 = vadd.f32 0.0, %v3107
    %3109 = vmatmul.bf16.gmra.mxu0 %v183
    %v3110 = vpop.f32.mrf.mxu0
    %v3111 = vadd.f32 0.0, %v3110
    %v3112 = vpop.f32.mrf.mxu0
    %v3113 = vadd.f32 0.0, %v3112
    %3114 = vmatmul.bf16.gmra.mxu0 %v185
    %v3115 = vpop.f32.mrf.mxu0
    %v3116 = vadd.f32 0.0, %v3115
    %v3117 = vpop.f32.mrf.mxu0
    %v3118 = vadd.f32 0.0, %v3117
    %3119 = vmatmul.bf16.gmra.mxu0 %v187
    %v3120 = vpop.f32.mrf.mxu0
    %v3121 = vadd.f32 0.0, %v3120
    %v3122 = vpop.f32.mrf.mxu0
    %v3123 = vadd.f32 0.0, %v3122
    %3124 = vmatmul.bf16.gmra.mxu0 %v189
    %v3125 = vpop.f32.mrf.mxu0
    %v3126 = vadd.f32 0.0, %v3125
    %v3127 = vpop.f32.mrf.mxu0
    %v3128 = vadd.f32 0.0, %v3127
    %3129 = vmatmul.bf16.gmra.mxu0 %v191
    %v3130 = vpop.f32.mrf.mxu0
    %v3131 = vadd.f32 0.0, %v3130
    %v3132 = vpop.f32.mrf.mxu0
    %v3133 = vadd.f32 0.0, %v3132
    %3134 = vmatmul.bf16.gmra.mxu0 %v193
    %v3135 = vpop.f32.mrf.mxu0
    %v3136 = vadd.f32 0.0, %v3135
    %v3137 = vpop.f32.mrf.mxu0
    %v3138 = vadd.f32 0.0, %v3137
    %3139 = vmatmul.bf16.gmra.mxu0 %v195
    %v3140 = vpop.f32.mrf.mxu0
    %v3141 = vadd.f32 0.0, %v3140
    %v3142 = vpop.f32.mrf.mxu0
    %v3143 = vadd.f32 0.0, %v3142
    %3144 = vmatmul.bf16.gmra.mxu0 %v197
    %v3145 = vpop.f32.mrf.mxu0
    %v3146 = vadd.f32 0.0, %v3145
    %v3147 = vpop.f32.mrf.mxu0
    %v3148 = vadd.f32 0.0, %v3147
    %3149 = vmatmul.bf16.gmra.mxu0 %v199
    %v3150 = vpop.f32.mrf.mxu0
    %v3151 = vadd.f32 0.0, %v3150
    %v3152 = vpop.f32.mrf.mxu0
    %v3153 = vadd.f32 0.0, %v3152
    %3154 = vmatmul.bf16.gmra.mxu0 %v201
    %v3155 = vpop.f32.mrf.mxu0
    %v3156 = vadd.f32 0.0, %v3155
    %v3157 = vpop.f32.mrf.mxu0
    %v3158 = vadd.f32 0.0, %v3157
    %3159 = vmatmul.bf16.gmra.mxu0 %v203
    %v3160 = vpop.f32.mrf.mxu0
    %v3161 = vadd.f32 0.0, %v3160
    %v3162 = vpop.f32.mrf.mxu0
    %v3163 = vadd.f32 0.0, %v3162
    %3164 = vmatmul.bf16.gmra.mxu0 %v205
    %v3165 = vpop.f32.mrf.mxu0
    %v3166 = vadd.f32 0.0, %v3165
    %v3167 = vpop.f32.mrf.mxu0
    %v3168 = vadd.f32 0.0, %v3167
    %3169 = vmatmul.bf16.gmra.mxu0 %v207
    %v3170 = vpop.f32.mrf.mxu0
    %v3171 = vadd.f32 0.0, %v3170
    %v3172 = vpop.f32.mrf.mxu0
    %v3173 = vadd.f32 0.0, %v3172
    %3174 = vmatmul.bf16.gmra.mxu0 %v209
    %v3175 = vpop.f32.mrf.mxu0
    %v3176 = vadd.f32 0.0, %v3175
    %v3177 = vpop.f32.mrf.mxu0
    %v3178 = vadd.f32 0.0, %v3177
    %3179 = vmatmul.bf16.gmra.mxu0 %v211
    %v3180 = vpop.f32.mrf.mxu0
    %v3181 = vadd.f32 0.0, %v3180
    %v3182 = vpop.f32.mrf.mxu0
    %v3183 = vadd.f32 0.0, %v3182
    %3184 = vmatmul.bf16.gmra.mxu0 %v213
    %v3185 = vpop.f32.mrf.mxu0
    %v3186 = vadd.f32 0.0, %v3185
    %v3187 = vpop.f32.mrf.mxu0
    %v3188 = vadd.f32 0.0, %v3187
    %3189 = vmatmul.bf16.gmra.mxu0 %v215
    %v3190 = vpop.f32.mrf.mxu0
    %v3191 = vadd.f32 0.0, %v3190
    %v3192 = vpop.f32.mrf.mxu0
    %v3193 = vadd.f32 0.0, %v3192
    %3194 = vmatmul.bf16.gmra.mxu0 %v217
    %v3195 = vpop.f32.mrf.mxu0
    %v3196 = vadd.f32 0.0, %v3195
    %v3197 = vpop.f32.mrf.mxu0
    %v3198 = vadd.f32 0.0, %v3197
    %3199 = vmatmul.bf16.gmra.mxu0 %v219
    %v3200 = vpop.f32.mrf.mxu0
    %v3201 = vadd.f32 0.0, %v3200
    %v3202 = vpop.f32.mrf.mxu0
    %v3203 = vadd.f32 0.0, %v3202
    %3204 = vmatmul.bf16.gmra.mxu0 %v221
    %v3205 = vpop.f32.mrf.mxu0
    %v3206 = vadd.f32 0.0, %v3205
    %v3207 = vpop.f32.mrf.mxu0
    %v3208 = vadd.f32 0.0, %v3207
    %3209 = vmatmul.bf16.gmra.mxu0 %v223
    %v3210 = vpop.f32.mrf.mxu0
    %v3211 = vadd.f32 0.0, %v3210
    %v3212 = vpop.f32.mrf.mxu0
    %v3213 = vadd.f32 0.0, %v3212
    %3214 = vmatmul.bf16.gmra.mxu0 %v225
    %v3215 = vpop.f32.mrf.mxu0
    %v3216 = vadd.f32 0.0, %v3215
    %v3217 = vpop.f32.mrf.mxu0
    %v3218 = vadd.f32 0.0, %v3217
    %3219 = vmatmul.bf16.gmra.mxu0 %v227
    %v3220 = vpop.f32.mrf.mxu0
    %v3221 = vadd.f32 0.0, %v3220
    %v3222 = vpop.f32.mrf.mxu0
    %v3223 = vadd.f32 0.0, %v3222
    %3224 = vmatmul.bf16.gmra.mxu0 %v229
    %v3225 = vpop.f32.mrf.mxu0
    %v3226 = vadd.f32 0.0, %v3225
    %v3227 = vpop.f32.mrf.mxu0
    %v3228 = vadd.f32 0.0, %v3227
    %3229 = vmatmul.bf16.gmra.mxu0 %v231
    %v3230 = vpop.f32.mrf.mxu0
    %v3231 = vadd.f32 0.0, %v3230
    %v3232 = vpop.f32.mrf.mxu0
    %v3233 = vadd.f32 0.0, %v3232
    %3234 = vmatmul.bf16.gmra.mxu0 %v233
    %v3235 = vpop.f32.mrf.mxu0
    %v3236 = vadd.f32 0.0, %v3235
    %v3237 = vpop.f32.mrf.mxu0
    %v3238 = vadd.f32 0.0, %v3237
    %3239 = vmatmul.bf16.gmra.mxu0 %v235
    %v3240 = vpop.f32.mrf.mxu0
    %v3241 = vadd.f32 0.0, %v3240
    %v3242 = vpop.f32.mrf.mxu0
    %v3243 = vadd.f32 0.0, %v3242
    %3244 = vmatmul.bf16.gmra.mxu0 %v237
    %v3245 = vpop.f32.mrf.mxu0
    %v3246 = vadd.f32 0.0, %v3245
    %v3247 = vpop.f32.mrf.mxu0
    %v3248 = vadd.f32 0.0, %v3247
    %3249 = vdwg.mxu0
    %3250 = vmatpush.bf16.msra.mxu0 %v1192
    %3251 = vmatpush.bf16.msra.mxu0 %v1180
    %3252 = vmatpush.bf16.msra.mxu0 %v1168
    %3253 = vmatpush.bf16.msra.mxu0 %v1156
    %3254 = vmatpush.bf16.msra.mxu0 %v1144
    %3255 = vmatpush.bf16.msra.mxu0 %v1132
    %3256 = vmatpush.bf16.msra.mxu0 %v1120
    %3257 = vmatpush.bf16.msra.mxu0 %v1108
    %3258 = vmatmul.bf16.gmra.mxu0 %v176
    %v3259 = vpop.f32.mrf.mxu0
    %v3260 = vadd.f32 %v3091, %v3259
    %v3261 = vpop.f32.mrf.mxu0
    %v3262 = vadd.f32 %v3093, %v3261
    %3263 = vmatmul.bf16.gmra.mxu0 %v178
    %v3264 = vpop.f32.mrf.mxu0
    %v3265 = vadd.f32 %v3096, %v3264
    %v3266 = vpop.f32.mrf.mxu0
    %v3267 = vadd.f32 %v3098, %v3266
    %3268 = vmatmul.bf16.gmra.mxu0 %v180
    %v3269 = vpop.f32.mrf.mxu0
    %v3270 = vadd.f32 %v3101, %v3269
    %v3271 = vpop.f32.mrf.mxu0
    %v3272 = vadd.f32 %v3103, %v3271
    %3273 = vmatmul.bf16.gmra.mxu0 %v182
    %v3274 = vpop.f32.mrf.mxu0
    %v3275 = vadd.f32 %v3106, %v3274
    %v3276 = vpop.f32.mrf.mxu0
    %v3277 = vadd.f32 %v3108, %v3276
    %3278 = vmatmul.bf16.gmra.mxu0 %v184
    %v3279 = vpop.f32.mrf.mxu0
    %v3280 = vadd.f32 %v3111, %v3279
    %v3281 = vpop.f32.mrf.mxu0
    %v3282 = vadd.f32 %v3113, %v3281
    %3283 = vmatmul.bf16.gmra.mxu0 %v186
    %v3284 = vpop.f32.mrf.mxu0
    %v3285 = vadd.f32 %v3116, %v3284
    %v3286 = vpop.f32.mrf.mxu0
    %v3287 = vadd.f32 %v3118, %v3286
    %3288 = vmatmul.bf16.gmra.mxu0 %v188
    %v3289 = vpop.f32.mrf.mxu0
    %v3290 = vadd.f32 %v3121, %v3289
    %v3291 = vpop.f32.mrf.mxu0
    %v3292 = vadd.f32 %v3123, %v3291
    %3293 = vmatmul.bf16.gmra.mxu0 %v190
    %v3294 = vpop.f32.mrf.mxu0
    %v3295 = vadd.f32 %v3126, %v3294
    %v3296 = vpop.f32.mrf.mxu0
    %v3297 = vadd.f32 %v3128, %v3296
    %3298 = vmatmul.bf16.gmra.mxu0 %v192
    %v3299 = vpop.f32.mrf.mxu0
    %v3300 = vadd.f32 %v3131, %v3299
    %v3301 = vpop.f32.mrf.mxu0
    %v3302 = vadd.f32 %v3133, %v3301
    %3303 = vmatmul.bf16.gmra.mxu0 %v194
    %v3304 = vpop.f32.mrf.mxu0
    %v3305 = vadd.f32 %v3136, %v3304
    %v3306 = vpop.f32.mrf.mxu0
    %v3307 = vadd.f32 %v3138, %v3306
    %3308 = vmatmul.bf16.gmra.mxu0 %v196
    %v3309 = vpop.f32.mrf.mxu0
    %v3310 = vadd.f32 %v3141, %v3309
    %v3311 = vpop.f32.mrf.mxu0
    %v3312 = vadd.f32 %v3143, %v3311
    %3313 = vmatmul.bf16.gmra.mxu0 %v198
    %v3314 = vpop.f32.mrf.mxu0
    %v3315 = vadd.f32 %v3146, %v3314
    %v3316 = vpop.f32.mrf.mxu0
    %v3317 = vadd.f32 %v3148, %v3316
    %3318 = vmatmul.bf16.gmra.mxu0 %v200
    %v3319 = vpop.f32.mrf.mxu0
    %v3320 = vadd.f32 %v3151, %v3319
    %v3321 = vpop.f32.mrf.mxu0
    %v3322 = vadd.f32 %v3153, %v3321
    %3323 = vmatmul.bf16.gmra.mxu0 %v202
    %v3324 = vpop.f32.mrf.mxu0
    %v3325 = vadd.f32 %v3156, %v3324
    %v3326 = vpop.f32.mrf.mxu0
    %v3327 = vadd.f32 %v3158, %v3326
    %3328 = vmatmul.bf16.gmra.mxu0 %v204
    %v3329 = vpop.f32.mrf.mxu0
    %v3330 = vadd.f32 %v3161, %v3329
    %v3331 = vpop.f32.mrf.mxu0
    %v3332 = vadd.f32 %v3163, %v3331
    %3333 = vmatmul.bf16.gmra.mxu0 %v206
    %v3334 = vpop.f32.mrf.mxu0
    %v3335 = vadd.f32 %v3166, %v3334
    %v3336 = vpop.f32.mrf.mxu0
    %v3337 = vadd.f32 %v3168, %v3336
    %3338 = vmatmul.bf16.gmra.mxu0 %v208
    %v3339 = vpop.f32.mrf.mxu0
    %v3340 = vadd.f32 %v3171, %v3339
    %v3341 = vpop.f32.mrf.mxu0
    %v3342 = vadd.f32 %v3173, %v3341
    %3343 = vmatmul.bf16.gmra.mxu0 %v210
    %v3344 = vpop.f32.mrf.mxu0
    %v3345 = vadd.f32 %v3176, %v3344
    %v3346 = vpop.f32.mrf.mxu0
    %v3347 = vadd.f32 %v3178, %v3346
    %3348 = vmatmul.bf16.gmra.mxu0 %v212
    %v3349 = vpop.f32.mrf.mxu0
    %v3350 = vadd.f32 %v3181, %v3349
    %v3351 = vpop.f32.mrf.mxu0
    %v3352 = vadd.f32 %v3183, %v3351
    %3353 = vmatmul.bf16.gmra.mxu0 %v214
    %v3354 = vpop.f32.mrf.mxu0
    %v3355 = vadd.f32 %v3186, %v3354
    %v3356 = vpop.f32.mrf.mxu0
    %v3357 = vadd.f32 %v3188, %v3356
    %3358 = vmatmul.bf16.gmra.mxu0 %v216
    %v3359 = vpop.f32.mrf.mxu0
    %v3360 = vadd.f32 %v3191, %v3359
    %v3361 = vpop.f32.mrf.mxu0
    %v3362 = vadd.f32 %v3193, %v3361
    %3363 = vmatmul.bf16.gmra.mxu0 %v218
    %v3364 = vpop.f32.mrf.mxu0
    %v3365 = vadd.f32 %v3196, %v3364
    %v3366 = vpop.f32.mrf.mxu0
    %v3367 = vadd.f32 %v3198, %v3366
    %3368 = vmatmul.bf16.gmra.mxu0 %v220
    %v3369 = vpop.f32.mrf.mxu0
    %v3370 = vadd.f32 %v3201, %v3369
    %v3371 = vpop.f32.mrf.mxu0
    %v3372 = vadd.f32 %v3203, %v3371
    %3373 = vmatmul.bf16.gmra.mxu0 %v222
    %v3374 = vpop.f32.mrf.mxu0
    %v3375 = vadd.f32 %v3206, %v3374
    %v3376 = vpop.f32.mrf.mxu0
    %v3377 = vadd.f32 %v3208, %v3376
    %3378 = vmatmul.bf16.gmra.mxu0 %v224
    %v3379 = vpop.f32.mrf.mxu0
    %v3380 = vadd.f32 %v3211, %v3379
    %v3381 = vpop.f32.mrf.mxu0
    %v3382 = vadd.f32 %v3213, %v3381
    %3383 = vmatmul.bf16.gmra.mxu0 %v226
    %v3384 = vpop.f32.mrf.mxu0
    %v3385 = vadd.f32 %v3216, %v3384
    %v3386 = vpop.f32.mrf.mxu0
    %v3387 = vadd.f32 %v3218, %v3386
    %3388 = vmatmul.bf16.gmra.mxu0 %v228
    %v3389 = vpop.f32.mrf.mxu0
    %v3390 = vadd.f32 %v3221, %v3389
    %v3391 = vpop.f32.mrf.mxu0
    %v3392 = vadd.f32 %v3223, %v3391
    %3393 = vmatmul.bf16.gmra.mxu0 %v230
    %v3394 = vpop.f32.mrf.mxu0
    %v3395 = vadd.f32 %v3226, %v3394
    %v3396 = vpop.f32.mrf.mxu0
    %v3397 = vadd.f32 %v3228, %v3396
    %3398 = vmatmul.bf16.gmra.mxu0 %v232
    %v3399 = vpop.f32.mrf.mxu0
    %v3400 = vadd.f32 %v3231, %v3399
    %v3401 = vpop.f32.mrf.mxu0
    %v3402 = vadd.f32 %v3233, %v3401
    %3403 = vmatmul.bf16.gmra.mxu0 %v234
    %v3404 = vpop.f32.mrf.mxu0
    %v3405 = vadd.f32 %v3236, %v3404
    %v3406 = vpop.f32.mrf.mxu0
    %v3407 = vadd.f32 %v3238, %v3406
    %3408 = vmatmul.bf16.gmra.mxu0 %v236
    %v3409 = vpop.f32.mrf.mxu0
    %v3410 = vadd.f32 %v3241, %v3409
    %v3411 = vpop.f32.mrf.mxu0
    %v3412 = vadd.f32 %v3243, %v3411
    %3413 = vmatmul.bf16.gmra.mxu0 %v238
    %v3414 = vpop.f32.mrf.mxu0
    %v3415 = vadd.f32 %v3246, %v3414
    %v3416 = vpop.f32.mrf.mxu0
    %v3417 = vadd.f32 %v3248, %v3416
    %3418 = vdwg.mxu0
    %3419 = vmatpush.bf16.msra.mxu0 %v1097
    %3420 = vmatpush.bf16.msra.mxu0 %v1085
    %3421 = vmatpush.bf16.msra.mxu0 %v1073
    %3422 = vmatpush.bf16.msra.mxu0 %v1061
    %3423 = vmatpush.bf16.msra.mxu0 %v1049
    %3424 = vmatpush.bf16.msra.mxu0 %v1037
    %3425 = vmatpush.bf16.msra.mxu0 %v1025
    %3426 = vmatpush.bf16.msra.mxu0 %v1013
    %3427 = vmatmul.bf16.gmra.mxu0 %v175
    %v3428 = vpop.f32.mrf.mxu0
    %v3429 = vadd.f32 0.0, %v3428
    %v3430 = vpop.f32.mrf.mxu0
    %v3431 = vadd.f32 0.0, %v3430
    %3432 = vmatmul.bf16.gmra.mxu0 %v177
    %v3433 = vpop.f32.mrf.mxu0
    %v3434 = vadd.f32 0.0, %v3433
    %v3435 = vpop.f32.mrf.mxu0
    %v3436 = vadd.f32 0.0, %v3435
    %3437 = vmatmul.bf16.gmra.mxu0 %v179
    %v3438 = vpop.f32.mrf.mxu0
    %v3439 = vadd.f32 0.0, %v3438
    %v3440 = vpop.f32.mrf.mxu0
    %v3441 = vadd.f32 0.0, %v3440
    %3442 = vmatmul.bf16.gmra.mxu0 %v181
    %v3443 = vpop.f32.mrf.mxu0
    %v3444 = vadd.f32 0.0, %v3443
    %v3445 = vpop.f32.mrf.mxu0
    %v3446 = vadd.f32 0.0, %v3445
    %3447 = vmatmul.bf16.gmra.mxu0 %v183
    %v3448 = vpop.f32.mrf.mxu0
    %v3449 = vadd.f32 0.0, %v3448
    %v3450 = vpop.f32.mrf.mxu0
    %v3451 = vadd.f32 0.0, %v3450
    %3452 = vmatmul.bf16.gmra.mxu0 %v185
    %v3453 = vpop.f32.mrf.mxu0
    %v3454 = vadd.f32 0.0, %v3453
    %v3455 = vpop.f32.mrf.mxu0
    %v3456 = vadd.f32 0.0, %v3455
    %3457 = vmatmul.bf16.gmra.mxu0 %v187
    %v3458 = vpop.f32.mrf.mxu0
    %v3459 = vadd.f32 0.0, %v3458
    %v3460 = vpop.f32.mrf.mxu0
    %v3461 = vadd.f32 0.0, %v3460
    %3462 = vmatmul.bf16.gmra.mxu0 %v189
    %v3463 = vpop.f32.mrf.mxu0
    %v3464 = vadd.f32 0.0, %v3463
    %v3465 = vpop.f32.mrf.mxu0
    %v3466 = vadd.f32 0.0, %v3465
    %3467 = vmatmul.bf16.gmra.mxu0 %v191
    %v3468 = vpop.f32.mrf.mxu0
    %v3469 = vadd.f32 0.0, %v3468
    %v3470 = vpop.f32.mrf.mxu0
    %v3471 = vadd.f32 0.0, %v3470
    %3472 = vmatmul.bf16.gmra.mxu0 %v193
    %v3473 = vpop.f32.mrf.mxu0
    %v3474 = vadd.f32 0.0, %v3473
    %v3475 = vpop.f32.mrf.mxu0
    %v3476 = vadd.f32 0.0, %v3475
    %3477 = vmatmul.bf16.gmra.mxu0 %v195
    %v3478 = vpop.f32.mrf.mxu0
    %v3479 = vadd.f32 0.0, %v3478
    %v3480 = vpop.f32.mrf.mxu0
    %v3481 = vadd.f32 0.0, %v3480
    %3482 = vmatmul.bf16.gmra.mxu0 %v197
    %v3483 = vpop.f32.mrf.mxu0
    %v3484 = vadd.f32 0.0, %v3483
    %v3485 = vpop.f32.mrf.mxu0
    %v3486 = vadd.f32 0.0, %v3485
    %3487 = vmatmul.bf16.gmra.mxu0 %v199
    %v3488 = vpop.f32.mrf.mxu0
    %v3489 = vadd.f32 0.0, %v3488
    %v3490 = vpop.f32.mrf.mxu0
    %v3491 = vadd.f32 0.0, %v3490
    %3492 = vmatmul.bf16.gmra.mxu0 %v201
    %v3493 = vpop.f32.mrf.mxu0
    %v3494 = vadd.f32 0.0, %v3493
    %v3495 = vpop.f32.mrf.mxu0
    %v3496 = vadd.f32 0.0, %v3495
    %3497 = vmatmul.bf16.gmra.mxu0 %v203
    %v3498 = vpop.f32.mrf.mxu0
    %v3499 = vadd.f32 0.0, %v3498
    %v3500 = vpop.f32.mrf.mxu0
    %v3501 = vadd.f32 0.0, %v3500
    %3502 = vmatmul.bf16.gmra.mxu0 %v205
    %v3503 = vpop.f32.mrf.mxu0
    %v3504 = vadd.f32 0.0, %v3503
    %v3505 = vpop.f32.mrf.mxu0
    %v3506 = vadd.f32 0.0, %v3505
    %3507 = vmatmul.bf16.gmra.mxu0 %v207
    %v3508 = vpop.f32.mrf.mxu0
    %v3509 = vadd.f32 0.0, %v3508
    %v3510 = vpop.f32.mrf.mxu0
    %v3511 = vadd.f32 0.0, %v3510
    %3512 = vmatmul.bf16.gmra.mxu0 %v209
    %v3513 = vpop.f32.mrf.mxu0
    %v3514 = vadd.f32 0.0, %v3513
    %v3515 = vpop.f32.mrf.mxu0
    %v3516 = vadd.f32 0.0, %v3515
    %3517 = vmatmul.bf16.gmra.mxu0 %v211
    %v3518 = vpop.f32.mrf.mxu0
    %v3519 = vadd.f32 0.0, %v3518
    %v3520 = vpop.f32.mrf.mxu0
    %v3521 = vadd.f32 0.0, %v3520
    %3522 = vmatmul.bf16.gmra.mxu0 %v213
    %v3523 = vpop.f32.mrf.mxu0
    %v3524 = vadd.f32 0.0, %v3523
    %v3525 = vpop.f32.mrf.mxu0
    %v3526 = vadd.f32 0.0, %v3525
    %3527 = vmatmul.bf16.gmra.mxu0 %v215
    %v3528 = vpop.f32.mrf.mxu0
    %v3529 = vadd.f32 0.0, %v3528
    %v3530 = vpop.f32.mrf.mxu0
    %v3531 = vadd.f32 0.0, %v3530
    %3532 = vmatmul.bf16.gmra.mxu0 %v217
    %v3533 = vpop.f32.mrf.mxu0
    %v3534 = vadd.f32 0.0, %v3533
    %v3535 = vpop.f32.mrf.mxu0
    %v3536 = vadd.f32 0.0, %v3535
    %3537 = vmatmul.bf16.gmra.mxu0 %v219
    %v3538 = vpop.f32.mrf.mxu0
    %v3539 = vadd.f32 0.0, %v3538
    %v3540 = vpop.f32.mrf.mxu0
    %v3541 = vadd.f32 0.0, %v3540
    %3542 = vmatmul.bf16.gmra.mxu0 %v221
    %v3543 = vpop.f32.mrf.mxu0
    %v3544 = vadd.f32 0.0, %v3543
    %v3545 = vpop.f32.mrf.mxu0
    %v3546 = vadd.f32 0.0, %v3545
    %3547 = vmatmul.bf16.gmra.mxu0 %v223
    %v3548 = vpop.f32.mrf.mxu0
    %v3549 = vadd.f32 0.0, %v3548
    %v3550 = vpop.f32.mrf.mxu0
    %v3551 = vadd.f32 0.0, %v3550
    %3552 = vmatmul.bf16.gmra.mxu0 %v225
    %v3553 = vpop.f32.mrf.mxu0
    %v3554 = vadd.f32 0.0, %v3553
    %v3555 = vpop.f32.mrf.mxu0
    %v3556 = vadd.f32 0.0, %v3555
    %3557 = vmatmul.bf16.gmra.mxu0 %v227
    %v3558 = vpop.f32.mrf.mxu0
    %v3559 = vadd.f32 0.0, %v3558
    %v3560 = vpop.f32.mrf.mxu0
    %v3561 = vadd.f32 0.0, %v3560
    %3562 = vmatmul.bf16.gmra.mxu0 %v229
    %v3563 = vpop.f32.mrf.mxu0
    %v3564 = vadd.f32 0.0, %v3563
    %v3565 = vpop.f32.mrf.mxu0
    %v3566 = vadd.f32 0.0, %v3565
    %3567 = vmatmul.bf16.gmra.mxu0 %v231
    %v3568 = vpop.f32.mrf.mxu0
    %v3569 = vadd.f32 0.0, %v3568
    %v3570 = vpop.f32.mrf.mxu0
    %v3571 = vadd.f32 0.0, %v3570
    %3572 = vmatmul.bf16.gmra.mxu0 %v233
    %v3573 = vpop.f32.mrf.mxu0
    %v3574 = vadd.f32 0.0, %v3573
    %v3575 = vpop.f32.mrf.mxu0
    %v3576 = vadd.f32 0.0, %v3575
    %3577 = vmatmul.bf16.gmra.mxu0 %v235
    %v3578 = vpop.f32.mrf.mxu0
    %v3579 = vadd.f32 0.0, %v3578
    %v3580 = vpop.f32.mrf.mxu0
    %v3581 = vadd.f32 0.0, %v3580
    %3582 = vmatmul.bf16.gmra.mxu0 %v237
    %v3583 = vpop.f32.mrf.mxu0
    %v3584 = vadd.f32 0.0, %v3583
    %v3585 = vpop.f32.mrf.mxu0
    %v3586 = vadd.f32 0.0, %v3585
    %3587 = vdwg.mxu0
    %3588 = vmatpush.bf16.msra.mxu0 %v1193
    %3589 = vmatpush.bf16.msra.mxu0 %v1181
    %3590 = vmatpush.bf16.msra.mxu0 %v1169
    %3591 = vmatpush.bf16.msra.mxu0 %v1157
    %3592 = vmatpush.bf16.msra.mxu0 %v1145
    %3593 = vmatpush.bf16.msra.mxu0 %v1133
    %3594 = vmatpush.bf16.msra.mxu0 %v1121
    %3595 = vmatpush.bf16.msra.mxu0 %v1109
    %3596 = vmatmul.bf16.gmra.mxu0 %v176
    %v3597 = vpop.f32.mrf.mxu0
    %v3598 = vadd.f32 %v3429, %v3597
    %v3599 = vpop.f32.mrf.mxu0
    %v3600 = vadd.f32 %v3431, %v3599
    %3601 = vmatmul.bf16.gmra.mxu0 %v178
    %v3602 = vpop.f32.mrf.mxu0
    %v3603 = vadd.f32 %v3434, %v3602
    %v3604 = vpop.f32.mrf.mxu0
    %v3605 = vadd.f32 %v3436, %v3604
    %3606 = vmatmul.bf16.gmra.mxu0 %v180
    %v3607 = vpop.f32.mrf.mxu0
    %v3608 = vadd.f32 %v3439, %v3607
    %v3609 = vpop.f32.mrf.mxu0
    %v3610 = vadd.f32 %v3441, %v3609
    %3611 = vmatmul.bf16.gmra.mxu0 %v182
    %v3612 = vpop.f32.mrf.mxu0
    %v3613 = vadd.f32 %v3444, %v3612
    %v3614 = vpop.f32.mrf.mxu0
    %v3615 = vadd.f32 %v3446, %v3614
    %3616 = vmatmul.bf16.gmra.mxu0 %v184
    %v3617 = vpop.f32.mrf.mxu0
    %v3618 = vadd.f32 %v3449, %v3617
    %v3619 = vpop.f32.mrf.mxu0
    %v3620 = vadd.f32 %v3451, %v3619
    %3621 = vmatmul.bf16.gmra.mxu0 %v186
    %v3622 = vpop.f32.mrf.mxu0
    %v3623 = vadd.f32 %v3454, %v3622
    %v3624 = vpop.f32.mrf.mxu0
    %v3625 = vadd.f32 %v3456, %v3624
    %3626 = vmatmul.bf16.gmra.mxu0 %v188
    %v3627 = vpop.f32.mrf.mxu0
    %v3628 = vadd.f32 %v3459, %v3627
    %v3629 = vpop.f32.mrf.mxu0
    %v3630 = vadd.f32 %v3461, %v3629
    %3631 = vmatmul.bf16.gmra.mxu0 %v190
    %v3632 = vpop.f32.mrf.mxu0
    %v3633 = vadd.f32 %v3464, %v3632
    %v3634 = vpop.f32.mrf.mxu0
    %v3635 = vadd.f32 %v3466, %v3634
    %3636 = vmatmul.bf16.gmra.mxu0 %v192
    %v3637 = vpop.f32.mrf.mxu0
    %v3638 = vadd.f32 %v3469, %v3637
    %v3639 = vpop.f32.mrf.mxu0
    %v3640 = vadd.f32 %v3471, %v3639
    %3641 = vmatmul.bf16.gmra.mxu0 %v194
    %v3642 = vpop.f32.mrf.mxu0
    %v3643 = vadd.f32 %v3474, %v3642
    %v3644 = vpop.f32.mrf.mxu0
    %v3645 = vadd.f32 %v3476, %v3644
    %3646 = vmatmul.bf16.gmra.mxu0 %v196
    %v3647 = vpop.f32.mrf.mxu0
    %v3648 = vadd.f32 %v3479, %v3647
    %v3649 = vpop.f32.mrf.mxu0
    %v3650 = vadd.f32 %v3481, %v3649
    %3651 = vmatmul.bf16.gmra.mxu0 %v198
    %v3652 = vpop.f32.mrf.mxu0
    %v3653 = vadd.f32 %v3484, %v3652
    %v3654 = vpop.f32.mrf.mxu0
    %v3655 = vadd.f32 %v3486, %v3654
    %3656 = vmatmul.bf16.gmra.mxu0 %v200
    %v3657 = vpop.f32.mrf.mxu0
    %v3658 = vadd.f32 %v3489, %v3657
    %v3659 = vpop.f32.mrf.mxu0
    %v3660 = vadd.f32 %v3491, %v3659
    %3661 = vmatmul.bf16.gmra.mxu0 %v202
    %v3662 = vpop.f32.mrf.mxu0
    %v3663 = vadd.f32 %v3494, %v3662
    %v3664 = vpop.f32.mrf.mxu0
    %v3665 = vadd.f32 %v3496, %v3664
    %3666 = vmatmul.bf16.gmra.mxu0 %v204
    %v3667 = vpop.f32.mrf.mxu0
    %v3668 = vadd.f32 %v3499, %v3667
    %v3669 = vpop.f32.mrf.mxu0
    %v3670 = vadd.f32 %v3501, %v3669
    %3671 = vmatmul.bf16.gmra.mxu0 %v206
    %v3672 = vpop.f32.mrf.mxu0
    %v3673 = vadd.f32 %v3504, %v3672
    %v3674 = vpop.f32.mrf.mxu0
    %v3675 = vadd.f32 %v3506, %v3674
    %3676 = vmatmul.bf16.gmra.mxu0 %v208
    %v3677 = vpop.f32.mrf.mxu0
    %v3678 = vadd.f32 %v3509, %v3677
    %v3679 = vpop.f32.mrf.mxu0
    %v3680 = vadd.f32 %v3511, %v3679
    %3681 = vmatmul.bf16.gmra.mxu0 %v210
    %v3682 = vpop.f32.mrf.mxu0
    %v3683 = vadd.f32 %v3514, %v3682
    %v3684 = vpop.f32.mrf.mxu0
    %v3685 = vadd.f32 %v3516, %v3684
    %3686 = vmatmul.bf16.gmra.mxu0 %v212
    %v3687 = vpop.f32.mrf.mxu0
    %v3688 = vadd.f32 %v3519, %v3687
    %v3689 = vpop.f32.mrf.mxu0
    %v3690 = vadd.f32 %v3521, %v3689
    %3691 = vmatmul.bf16.gmra.mxu0 %v214
    %v3692 = vpop.f32.mrf.mxu0
    %v3693 = vadd.f32 %v3524, %v3692
    %v3694 = vpop.f32.mrf.mxu0
    %v3695 = vadd.f32 %v3526, %v3694
    %3696 = vmatmul.bf16.gmra.mxu0 %v216
    %v3697 = vpop.f32.mrf.mxu0
    %v3698 = vadd.f32 %v3529, %v3697
    %v3699 = vpop.f32.mrf.mxu0
    %v3700 = vadd.f32 %v3531, %v3699
    %3701 = vmatmul.bf16.gmra.mxu0 %v218
    %v3702 = vpop.f32.mrf.mxu0
    %v3703 = vadd.f32 %v3534, %v3702
    %v3704 = vpop.f32.mrf.mxu0
    %v3705 = vadd.f32 %v3536, %v3704
    %3706 = vmatmul.bf16.gmra.mxu0 %v220
    %v3707 = vpop.f32.mrf.mxu0
    %v3708 = vadd.f32 %v3539, %v3707
    %v3709 = vpop.f32.mrf.mxu0
    %v3710 = vadd.f32 %v3541, %v3709
    %3711 = vmatmul.bf16.gmra.mxu0 %v222
    %v3712 = vpop.f32.mrf.mxu0
    %v3713 = vadd.f32 %v3544, %v3712
    %v3714 = vpop.f32.mrf.mxu0
    %v3715 = vadd.f32 %v3546, %v3714
    %3716 = vmatmul.bf16.gmra.mxu0 %v224
    %v3717 = vpop.f32.mrf.mxu0
    %v3718 = vadd.f32 %v3549, %v3717
    %v3719 = vpop.f32.mrf.mxu0
    %v3720 = vadd.f32 %v3551, %v3719
    %3721 = vmatmul.bf16.gmra.mxu0 %v226
    %v3722 = vpop.f32.mrf.mxu0
    %v3723 = vadd.f32 %v3554, %v3722
    %v3724 = vpop.f32.mrf.mxu0
    %v3725 = vadd.f32 %v3556, %v3724
    %3726 = vmatmul.bf16.gmra.mxu0 %v228
    %v3727 = vpop.f32.mrf.mxu0
    %v3728 = vadd.f32 %v3559, %v3727
    %v3729 = vpop.f32.mrf.mxu0
    %v3730 = vadd.f32 %v3561, %v3729
    %3731 = vmatmul.bf16.gmra.mxu0 %v230
    %v3732 = vpop.f32.mrf.mxu0
    %v3733 = vadd.f32 %v3564, %v3732
    %v3734 = vpop.f32.mrf.mxu0
    %v3735 = vadd.f32 %v3566, %v3734
    %3736 = vmatmul.bf16.gmra.mxu0 %v232
    %v3737 = vpop.f32.mrf.mxu0
    %v3738 = vadd.f32 %v3569, %v3737
    %v3739 = vpop.f32.mrf.mxu0
    %v3740 = vadd.f32 %v3571, %v3739
    %3741 = vmatmul.bf16.gmra.mxu0 %v234
    %v3742 = vpop.f32.mrf.mxu0
    %v3743 = vadd.f32 %v3574, %v3742
    %v3744 = vpop.f32.mrf.mxu0
    %v3745 = vadd.f32 %v3576, %v3744
    %3746 = vmatmul.bf16.gmra.mxu0 %v236
    %v3747 = vpop.f32.mrf.mxu0
    %v3748 = vadd.f32 %v3579, %v3747
    %v3749 = vpop.f32.mrf.mxu0
    %v3750 = vadd.f32 %v3581, %v3749
    %3751 = vmatmul.bf16.gmra.mxu0 %v238
    %v3752 = vpop.f32.mrf.mxu0
    %v3753 = vadd.f32 %v3584, %v3752
    %v3754 = vpop.f32.mrf.mxu0
    %v3755 = vadd.f32 %v3586, %v3754
    %3756 = vdwg.mxu0
    %3757 = vmatpush.bf16.msra.mxu0 %v1098
    %3758 = vmatpush.bf16.msra.mxu0 %v1086
    %3759 = vmatpush.bf16.msra.mxu0 %v1074
    %3760 = vmatpush.bf16.msra.mxu0 %v1062
    %3761 = vmatpush.bf16.msra.mxu0 %v1050
    %3762 = vmatpush.bf16.msra.mxu0 %v1038
    %3763 = vmatpush.bf16.msra.mxu0 %v1026
    %3764 = vmatpush.bf16.msra.mxu0 %v1014
    %3765 = vmatmul.bf16.gmra.mxu0 %v175
    %v3766 = vpop.f32.mrf.mxu0
    %v3767 = vadd.f32 0.0, %v3766
    %v3768 = vpop.f32.mrf.mxu0
    %v3769 = vadd.f32 0.0, %v3768
    %3770 = vmatmul.bf16.gmra.mxu0 %v177
    %v3771 = vpop.f32.mrf.mxu0
    %v3772 = vadd.f32 0.0, %v3771
    %v3773 = vpop.f32.mrf.mxu0
    %v3774 = vadd.f32 0.0, %v3773
    %3775 = vmatmul.bf16.gmra.mxu0 %v179
    %v3776 = vpop.f32.mrf.mxu0
    %v3777 = vadd.f32 0.0, %v3776
    %v3778 = vpop.f32.mrf.mxu0
    %v3779 = vadd.f32 0.0, %v3778
    %3780 = vmatmul.bf16.gmra.mxu0 %v181
    %v3781 = vpop.f32.mrf.mxu0
    %v3782 = vadd.f32 0.0, %v3781
    %v3783 = vpop.f32.mrf.mxu0
    %v3784 = vadd.f32 0.0, %v3783
    %3785 = vmatmul.bf16.gmra.mxu0 %v183
    %v3786 = vpop.f32.mrf.mxu0
    %v3787 = vadd.f32 0.0, %v3786
    %v3788 = vpop.f32.mrf.mxu0
    %v3789 = vadd.f32 0.0, %v3788
    %3790 = vmatmul.bf16.gmra.mxu0 %v185
    %v3791 = vpop.f32.mrf.mxu0
    %v3792 = vadd.f32 0.0, %v3791
    %v3793 = vpop.f32.mrf.mxu0
    %v3794 = vadd.f32 0.0, %v3793
    %3795 = vmatmul.bf16.gmra.mxu0 %v187
    %v3796 = vpop.f32.mrf.mxu0
    %v3797 = vadd.f32 0.0, %v3796
    %v3798 = vpop.f32.mrf.mxu0
    %v3799 = vadd.f32 0.0, %v3798
    %3800 = vmatmul.bf16.gmra.mxu0 %v189
    %v3801 = vpop.f32.mrf.mxu0
    %v3802 = vadd.f32 0.0, %v3801
    %v3803 = vpop.f32.mrf.mxu0
    %v3804 = vadd.f32 0.0, %v3803
    %3805 = vmatmul.bf16.gmra.mxu0 %v191
    %v3806 = vpop.f32.mrf.mxu0
    %v3807 = vadd.f32 0.0, %v3806
    %v3808 = vpop.f32.mrf.mxu0
    %v3809 = vadd.f32 0.0, %v3808
    %3810 = vmatmul.bf16.gmra.mxu0 %v193
    %v3811 = vpop.f32.mrf.mxu0
    %v3812 = vadd.f32 0.0, %v3811
    %v3813 = vpop.f32.mrf.mxu0
    %v3814 = vadd.f32 0.0, %v3813
    %3815 = vmatmul.bf16.gmra.mxu0 %v195
    %v3816 = vpop.f32.mrf.mxu0
    %v3817 = vadd.f32 0.0, %v3816
    %v3818 = vpop.f32.mrf.mxu0
    %v3819 = vadd.f32 0.0, %v3818
    %3820 = vmatmul.bf16.gmra.mxu0 %v197
    %v3821 = vpop.f32.mrf.mxu0
    %v3822 = vadd.f32 0.0, %v3821
    %v3823 = vpop.f32.mrf.mxu0
    %v3824 = vadd.f32 0.0, %v3823
    %3825 = vmatmul.bf16.gmra.mxu0 %v199
    %v3826 = vpop.f32.mrf.mxu0
    %v3827 = vadd.f32 0.0, %v3826
    %v3828 = vpop.f32.mrf.mxu0
    %v3829 = vadd.f32 0.0, %v3828
    %3830 = vmatmul.bf16.gmra.mxu0 %v201
    %v3831 = vpop.f32.mrf.mxu0
    %v3832 = vadd.f32 0.0, %v3831
    %v3833 = vpop.f32.mrf.mxu0
    %v3834 = vadd.f32 0.0, %v3833
    %3835 = vmatmul.bf16.gmra.mxu0 %v203
    %v3836 = vpop.f32.mrf.mxu0
    %v3837 = vadd.f32 0.0, %v3836
    %v3838 = vpop.f32.mrf.mxu0
    %v3839 = vadd.f32 0.0, %v3838
    %3840 = vmatmul.bf16.gmra.mxu0 %v205
    %v3841 = vpop.f32.mrf.mxu0
    %v3842 = vadd.f32 0.0, %v3841
    %v3843 = vpop.f32.mrf.mxu0
    %v3844 = vadd.f32 0.0, %v3843
    %3845 = vmatmul.bf16.gmra.mxu0 %v207
    %v3846 = vpop.f32.mrf.mxu0
    %v3847 = vadd.f32 0.0, %v3846
    %v3848 = vpop.f32.mrf.mxu0
    %v3849 = vadd.f32 0.0, %v3848
    %3850 = vmatmul.bf16.gmra.mxu0 %v209
    %v3851 = vpop.f32.mrf.mxu0
    %v3852 = vadd.f32 0.0, %v3851
    %v3853 = vpop.f32.mrf.mxu0
    %v3854 = vadd.f32 0.0, %v3853
    %3855 = vmatmul.bf16.gmra.mxu0 %v211
    %v3856 = vpop.f32.mrf.mxu0
    %v3857 = vadd.f32 0.0, %v3856
    %v3858 = vpop.f32.mrf.mxu0
    %v3859 = vadd.f32 0.0, %v3858
    %3860 = vmatmul.bf16.gmra.mxu0 %v213
    %v3861 = vpop.f32.mrf.mxu0
    %v3862 = vadd.f32 0.0, %v3861
    %v3863 = vpop.f32.mrf.mxu0
    %v3864 = vadd.f32 0.0, %v3863
    %3865 = vmatmul.bf16.gmra.mxu0 %v215
    %v3866 = vpop.f32.mrf.mxu0
    %v3867 = vadd.f32 0.0, %v3866
    %v3868 = vpop.f32.mrf.mxu0
    %v3869 = vadd.f32 0.0, %v3868
    %3870 = vmatmul.bf16.gmra.mxu0 %v217
    %v3871 = vpop.f32.mrf.mxu0
    %v3872 = vadd.f32 0.0, %v3871
    %v3873 = vpop.f32.mrf.mxu0
    %v3874 = vadd.f32 0.0, %v3873
    %3875 = vmatmul.bf16.gmra.mxu0 %v219
    %v3876 = vpop.f32.mrf.mxu0
    %v3877 = vadd.f32 0.0, %v3876
    %v3878 = vpop.f32.mrf.mxu0
    %v3879 = vadd.f32 0.0, %v3878
    %3880 = vmatmul.bf16.gmra.mxu0 %v221
    %v3881 = vpop.f32.mrf.mxu0
    %v3882 = vadd.f32 0.0, %v3881
    %v3883 = vpop.f32.mrf.mxu0
    %v3884 = vadd.f32 0.0, %v3883
    %3885 = vmatmul.bf16.gmra.mxu0 %v223
    %v3886 = vpop.f32.mrf.mxu0
    %v3887 = vadd.f32 0.0, %v3886
    %v3888 = vpop.f32.mrf.mxu0
    %v3889 = vadd.f32 0.0, %v3888
    %3890 = vmatmul.bf16.gmra.mxu0 %v225
    %v3891 = vpop.f32.mrf.mxu0
    %v3892 = vadd.f32 0.0, %v3891
    %v3893 = vpop.f32.mrf.mxu0
    %v3894 = vadd.f32 0.0, %v3893
    %3895 = vmatmul.bf16.gmra.mxu0 %v227
    %v3896 = vpop.f32.mrf.mxu0
    %v3897 = vadd.f32 0.0, %v3896
    %v3898 = vpop.f32.mrf.mxu0
    %v3899 = vadd.f32 0.0, %v3898
    %3900 = vmatmul.bf16.gmra.mxu0 %v229
    %v3901 = vpop.f32.mrf.mxu0
    %v3902 = vadd.f32 0.0, %v3901
    %v3903 = vpop.f32.mrf.mxu0
    %v3904 = vadd.f32 0.0, %v3903
    %3905 = vmatmul.bf16.gmra.mxu0 %v231
    %v3906 = vpop.f32.mrf.mxu0
    %v3907 = vadd.f32 0.0, %v3906
    %v3908 = vpop.f32.mrf.mxu0
    %v3909 = vadd.f32 0.0, %v3908
    %3910 = vmatmul.bf16.gmra.mxu0 %v233
    %v3911 = vpop.f32.mrf.mxu0
    %v3912 = vadd.f32 0.0, %v3911
    %v3913 = vpop.f32.mrf.mxu0
    %v3914 = vadd.f32 0.0, %v3913
    %3915 = vmatmul.bf16.gmra.mxu0 %v235
    %v3916 = vpop.f32.mrf.mxu0
    %v3917 = vadd.f32 0.0, %v3916
    %v3918 = vpop.f32.mrf.mxu0
    %v3919 = vadd.f32 0.0, %v3918
    %3920 = vmatmul.bf16.gmra.mxu0 %v237
    %v3921 = vpop.f32.mrf.mxu0
    %v3922 = vadd.f32 0.0, %v3921
    %v3923 = vpop.f32.mrf.mxu0
    %v3924 = vadd.f32 0.0, %v3923
    %3925 = vdwg.mxu0
    %3926 = vmatpush.bf16.msra.mxu0 %v1194
    %3927 = vmatpush.bf16.msra.mxu0 %v1182
    %3928 = vmatpush.bf16.msra.mxu0 %v1170
    %3929 = vmatpush.bf16.msra.mxu0 %v1158
    %3930 = vmatpush.bf16.msra.mxu0 %v1146
    %3931 = vmatpush.bf16.msra.mxu0 %v1134
    %3932 = vmatpush.bf16.msra.mxu0 %v1122
    %3933 = vmatpush.bf16.msra.mxu0 %v1110
    %3934 = vmatmul.bf16.gmra.mxu0 %v176
    %v3935 = vpop.f32.mrf.mxu0
    %v3936 = vadd.f32 %v3767, %v3935
    %v3937 = vpop.f32.mrf.mxu0
    %v3938 = vadd.f32 %v3769, %v3937
    %3939 = vmatmul.bf16.gmra.mxu0 %v178
    %v3940 = vpop.f32.mrf.mxu0
    %v3941 = vadd.f32 %v3772, %v3940
    %v3942 = vpop.f32.mrf.mxu0
    %v3943 = vadd.f32 %v3774, %v3942
    %3944 = vmatmul.bf16.gmra.mxu0 %v180
    %v3945 = vpop.f32.mrf.mxu0
    %v3946 = vadd.f32 %v3777, %v3945
    %v3947 = vpop.f32.mrf.mxu0
    %v3948 = vadd.f32 %v3779, %v3947
    %3949 = vmatmul.bf16.gmra.mxu0 %v182
    %v3950 = vpop.f32.mrf.mxu0
    %v3951 = vadd.f32 %v3782, %v3950
    %v3952 = vpop.f32.mrf.mxu0
    %v3953 = vadd.f32 %v3784, %v3952
    %3954 = vmatmul.bf16.gmra.mxu0 %v184
    %v3955 = vpop.f32.mrf.mxu0
    %v3956 = vadd.f32 %v3787, %v3955
    %v3957 = vpop.f32.mrf.mxu0
    %v3958 = vadd.f32 %v3789, %v3957
    %3959 = vmatmul.bf16.gmra.mxu0 %v186
    %v3960 = vpop.f32.mrf.mxu0
    %v3961 = vadd.f32 %v3792, %v3960
    %v3962 = vpop.f32.mrf.mxu0
    %v3963 = vadd.f32 %v3794, %v3962
    %3964 = vmatmul.bf16.gmra.mxu0 %v188
    %v3965 = vpop.f32.mrf.mxu0
    %v3966 = vadd.f32 %v3797, %v3965
    %v3967 = vpop.f32.mrf.mxu0
    %v3968 = vadd.f32 %v3799, %v3967
    %3969 = vmatmul.bf16.gmra.mxu0 %v190
    %v3970 = vpop.f32.mrf.mxu0
    %v3971 = vadd.f32 %v3802, %v3970
    %v3972 = vpop.f32.mrf.mxu0
    %v3973 = vadd.f32 %v3804, %v3972
    %3974 = vmatmul.bf16.gmra.mxu0 %v192
    %v3975 = vpop.f32.mrf.mxu0
    %v3976 = vadd.f32 %v3807, %v3975
    %v3977 = vpop.f32.mrf.mxu0
    %v3978 = vadd.f32 %v3809, %v3977
    %3979 = vmatmul.bf16.gmra.mxu0 %v194
    %v3980 = vpop.f32.mrf.mxu0
    %v3981 = vadd.f32 %v3812, %v3980
    %v3982 = vpop.f32.mrf.mxu0
    %v3983 = vadd.f32 %v3814, %v3982
    %3984 = vmatmul.bf16.gmra.mxu0 %v196
    %v3985 = vpop.f32.mrf.mxu0
    %v3986 = vadd.f32 %v3817, %v3985
    %v3987 = vpop.f32.mrf.mxu0
    %v3988 = vadd.f32 %v3819, %v3987
    %3989 = vmatmul.bf16.gmra.mxu0 %v198
    %v3990 = vpop.f32.mrf.mxu0
    %v3991 = vadd.f32 %v3822, %v3990
    %v3992 = vpop.f32.mrf.mxu0
    %v3993 = vadd.f32 %v3824, %v3992
    %3994 = vmatmul.bf16.gmra.mxu0 %v200
    %v3995 = vpop.f32.mrf.mxu0
    %v3996 = vadd.f32 %v3827, %v3995
    %v3997 = vpop.f32.mrf.mxu0
    %v3998 = vadd.f32 %v3829, %v3997
    %3999 = vmatmul.bf16.gmra.mxu0 %v202
    %v4000 = vpop.f32.mrf.mxu0
    %v4001 = vadd.f32 %v3832, %v4000
    %v4002 = vpop.f32.mrf.mxu0
    %v4003 = vadd.f32 %v3834, %v4002
    %4004 = vmatmul.bf16.gmra.mxu0 %v204
    %v4005 = vpop.f32.mrf.mxu0
    %v4006 = vadd.f32 %v3837, %v4005
    %v4007 = vpop.f32.mrf.mxu0
    %v4008 = vadd.f32 %v3839, %v4007
    %4009 = vmatmul.bf16.gmra.mxu0 %v206
    %v4010 = vpop.f32.mrf.mxu0
    %v4011 = vadd.f32 %v3842, %v4010
    %v4012 = vpop.f32.mrf.mxu0
    %v4013 = vadd.f32 %v3844, %v4012
    %4014 = vmatmul.bf16.gmra.mxu0 %v208
    %v4015 = vpop.f32.mrf.mxu0
    %v4016 = vadd.f32 %v3847, %v4015
    %v4017 = vpop.f32.mrf.mxu0
    %v4018 = vadd.f32 %v3849, %v4017
    %4019 = vmatmul.bf16.gmra.mxu0 %v210
    %v4020 = vpop.f32.mrf.mxu0
    %v4021 = vadd.f32 %v3852, %v4020
    %v4022 = vpop.f32.mrf.mxu0
    %v4023 = vadd.f32 %v3854, %v4022
    %4024 = vmatmul.bf16.gmra.mxu0 %v212
    %v4025 = vpop.f32.mrf.mxu0
    %v4026 = vadd.f32 %v3857, %v4025
    %v4027 = vpop.f32.mrf.mxu0
    %v4028 = vadd.f32 %v3859, %v4027
    %4029 = vmatmul.bf16.gmra.mxu0 %v214
    %v4030 = vpop.f32.mrf.mxu0
    %v4031 = vadd.f32 %v3862, %v4030
    %v4032 = vpop.f32.mrf.mxu0
    %v4033 = vadd.f32 %v3864, %v4032
    %4034 = vmatmul.bf16.gmra.mxu0 %v216
    %v4035 = vpop.f32.mrf.mxu0
    %v4036 = vadd.f32 %v3867, %v4035
    %v4037 = vpop.f32.mrf.mxu0
    %v4038 = vadd.f32 %v3869, %v4037
    %4039 = vmatmul.bf16.gmra.mxu0 %v218
    %v4040 = vpop.f32.mrf.mxu0
    %v4041 = vadd.f32 %v3872, %v4040
    %v4042 = vpop.f32.mrf.mxu0
    %v4043 = vadd.f32 %v3874, %v4042
    %4044 = vmatmul.bf16.gmra.mxu0 %v220
    %v4045 = vpop.f32.mrf.mxu0
    %v4046 = vadd.f32 %v3877, %v4045
    %v4047 = vpop.f32.mrf.mxu0
    %v4048 = vadd.f32 %v3879, %v4047
    %4049 = vmatmul.bf16.gmra.mxu0 %v222
    %v4050 = vpop.f32.mrf.mxu0
    %v4051 = vadd.f32 %v3882, %v4050
    %v4052 = vpop.f32.mrf.mxu0
    %v4053 = vadd.f32 %v3884, %v4052
    %4054 = vmatmul.bf16.gmra.mxu0 %v224
    %v4055 = vpop.f32.mrf.mxu0
    %v4056 = vadd.f32 %v3887, %v4055
    %v4057 = vpop.f32.mrf.mxu0
    %v4058 = vadd.f32 %v3889, %v4057
    %4059 = vmatmul.bf16.gmra.mxu0 %v226
    %v4060 = vpop.f32.mrf.mxu0
    %v4061 = vadd.f32 %v3892, %v4060
    %v4062 = vpop.f32.mrf.mxu0
    %v4063 = vadd.f32 %v3894, %v4062
    %4064 = vmatmul.bf16.gmra.mxu0 %v228
    %v4065 = vpop.f32.mrf.mxu0
    %v4066 = vadd.f32 %v3897, %v4065
    %v4067 = vpop.f32.mrf.mxu0
    %v4068 = vadd.f32 %v3899, %v4067
    %4069 = vmatmul.bf16.gmra.mxu0 %v230
    %v4070 = vpop.f32.mrf.mxu0
    %v4071 = vadd.f32 %v3902, %v4070
    %v4072 = vpop.f32.mrf.mxu0
    %v4073 = vadd.f32 %v3904, %v4072
    %4074 = vmatmul.bf16.gmra.mxu0 %v232
    %v4075 = vpop.f32.mrf.mxu0
    %v4076 = vadd.f32 %v3907, %v4075
    %v4077 = vpop.f32.mrf.mxu0
    %v4078 = vadd.f32 %v3909, %v4077
    %4079 = vmatmul.bf16.gmra.mxu0 %v234
    %v4080 = vpop.f32.mrf.mxu0
    %v4081 = vadd.f32 %v3912, %v4080
    %v4082 = vpop.f32.mrf.mxu0
    %v4083 = vadd.f32 %v3914, %v4082
    %4084 = vmatmul.bf16.gmra.mxu0 %v236
    %v4085 = vpop.f32.mrf.mxu0
    %v4086 = vadd.f32 %v3917, %v4085
    %v4087 = vpop.f32.mrf.mxu0
    %v4088 = vadd.f32 %v3919, %v4087
    %4089 = vmatmul.bf16.gmra.mxu0 %v238
    %v4090 = vpop.f32.mrf.mxu0
    %v4091 = vadd.f32 %v3922, %v4090
    %v4092 = vpop.f32.mrf.mxu0
    %v4093 = vadd.f32 %v3924, %v4092
    %4094 = vdwg.mxu0
    %4095 = vmatpush.bf16.msra.mxu0 %v1099
    %4096 = vmatpush.bf16.msra.mxu0 %v1087
    %4097 = vmatpush.bf16.msra.mxu0 %v1075
    %4098 = vmatpush.bf16.msra.mxu0 %v1063
    %4099 = vmatpush.bf16.msra.mxu0 %v1051
    %4100 = vmatpush.bf16.msra.mxu0 %v1039
    %4101 = vmatpush.bf16.msra.mxu0 %v1027
    %4102 = vmatpush.bf16.msra.mxu0 %v1015
    %4103 = vmatmul.bf16.gmra.mxu0 %v175
    %v4104 = vpop.f32.mrf.mxu0
    %v4105 = vadd.f32 0.0, %v4104
    %v4106 = vpop.f32.mrf.mxu0
    %v4107 = vadd.f32 0.0, %v4106
    %4108 = vmatmul.bf16.gmra.mxu0 %v177
    %v4109 = vpop.f32.mrf.mxu0
    %v4110 = vadd.f32 0.0, %v4109
    %v4111 = vpop.f32.mrf.mxu0
    %v4112 = vadd.f32 0.0, %v4111
    %4113 = vmatmul.bf16.gmra.mxu0 %v179
    %v4114 = vpop.f32.mrf.mxu0
    %v4115 = vadd.f32 0.0, %v4114
    %v4116 = vpop.f32.mrf.mxu0
    %v4117 = vadd.f32 0.0, %v4116
    %4118 = vmatmul.bf16.gmra.mxu0 %v181
    %v4119 = vpop.f32.mrf.mxu0
    %v4120 = vadd.f32 0.0, %v4119
    %v4121 = vpop.f32.mrf.mxu0
    %v4122 = vadd.f32 0.0, %v4121
    %4123 = vmatmul.bf16.gmra.mxu0 %v183
    %v4124 = vpop.f32.mrf.mxu0
    %v4125 = vadd.f32 0.0, %v4124
    %v4126 = vpop.f32.mrf.mxu0
    %v4127 = vadd.f32 0.0, %v4126
    %4128 = vmatmul.bf16.gmra.mxu0 %v185
    %v4129 = vpop.f32.mrf.mxu0
    %v4130 = vadd.f32 0.0, %v4129
    %v4131 = vpop.f32.mrf.mxu0
    %v4132 = vadd.f32 0.0, %v4131
    %4133 = vmatmul.bf16.gmra.mxu0 %v187
    %v4134 = vpop.f32.mrf.mxu0
    %v4135 = vadd.f32 0.0, %v4134
    %v4136 = vpop.f32.mrf.mxu0
    %v4137 = vadd.f32 0.0, %v4136
    %4138 = vmatmul.bf16.gmra.mxu0 %v189
    %v4139 = vpop.f32.mrf.mxu0
    %v4140 = vadd.f32 0.0, %v4139
    %v4141 = vpop.f32.mrf.mxu0
    %v4142 = vadd.f32 0.0, %v4141
    %4143 = vmatmul.bf16.gmra.mxu0 %v191
    %v4144 = vpop.f32.mrf.mxu0
    %v4145 = vadd.f32 0.0, %v4144
    %v4146 = vpop.f32.mrf.mxu0
    %v4147 = vadd.f32 0.0, %v4146
    %4148 = vmatmul.bf16.gmra.mxu0 %v193
    %v4149 = vpop.f32.mrf.mxu0
    %v4150 = vadd.f32 0.0, %v4149
    %v4151 = vpop.f32.mrf.mxu0
    %v4152 = vadd.f32 0.0, %v4151
    %4153 = vmatmul.bf16.gmra.mxu0 %v195
    %v4154 = vpop.f32.mrf.mxu0
    %v4155 = vadd.f32 0.0, %v4154
    %v4156 = vpop.f32.mrf.mxu0
    %v4157 = vadd.f32 0.0, %v4156
    %4158 = vmatmul.bf16.gmra.mxu0 %v197
    %v4159 = vpop.f32.mrf.mxu0
    %v4160 = vadd.f32 0.0, %v4159
    %v4161 = vpop.f32.mrf.mxu0
    %v4162 = vadd.f32 0.0, %v4161
    %4163 = vmatmul.bf16.gmra.mxu0 %v199
    %v4164 = vpop.f32.mrf.mxu0
    %v4165 = vadd.f32 0.0, %v4164
    %v4166 = vpop.f32.mrf.mxu0
    %v4167 = vadd.f32 0.0, %v4166
    %4168 = vmatmul.bf16.gmra.mxu0 %v201
    %v4169 = vpop.f32.mrf.mxu0
    %v4170 = vadd.f32 0.0, %v4169
    %v4171 = vpop.f32.mrf.mxu0
    %v4172 = vadd.f32 0.0, %v4171
    %4173 = vmatmul.bf16.gmra.mxu0 %v203
    %v4174 = vpop.f32.mrf.mxu0
    %v4175 = vadd.f32 0.0, %v4174
    %v4176 = vpop.f32.mrf.mxu0
    %v4177 = vadd.f32 0.0, %v4176
    %4178 = vmatmul.bf16.gmra.mxu0 %v205
    %v4179 = vpop.f32.mrf.mxu0
    %v4180 = vadd.f32 0.0, %v4179
    %v4181 = vpop.f32.mrf.mxu0
    %v4182 = vadd.f32 0.0, %v4181
    %4183 = vmatmul.bf16.gmra.mxu0 %v207
    %v4184 = vpop.f32.mrf.mxu0
    %v4185 = vadd.f32 0.0, %v4184
    %v4186 = vpop.f32.mrf.mxu0
    %v4187 = vadd.f32 0.0, %v4186
    %4188 = vmatmul.bf16.gmra.mxu0 %v209
    %v4189 = vpop.f32.mrf.mxu0
    %v4190 = vadd.f32 0.0, %v4189
    %v4191 = vpop.f32.mrf.mxu0
    %v4192 = vadd.f32 0.0, %v4191
    %4193 = vmatmul.bf16.gmra.mxu0 %v211
    %v4194 = vpop.f32.mrf.mxu0
    %v4195 = vadd.f32 0.0, %v4194
    %v4196 = vpop.f32.mrf.mxu0
    %v4197 = vadd.f32 0.0, %v4196
    %4198 = vmatmul.bf16.gmra.mxu0 %v213
    %v4199 = vpop.f32.mrf.mxu0
    %v4200 = vadd.f32 0.0, %v4199
    %v4201 = vpop.f32.mrf.mxu0
    %v4202 = vadd.f32 0.0, %v4201
    %4203 = vmatmul.bf16.gmra.mxu0 %v215
    %v4204 = vpop.f32.mrf.mxu0
    %v4205 = vadd.f32 0.0, %v4204
    %v4206 = vpop.f32.mrf.mxu0
    %v4207 = vadd.f32 0.0, %v4206
    %4208 = vmatmul.bf16.gmra.mxu0 %v217
    %v4209 = vpop.f32.mrf.mxu0
    %v4210 = vadd.f32 0.0, %v4209
    %v4211 = vpop.f32.mrf.mxu0
    %v4212 = vadd.f32 0.0, %v4211
    %4213 = vmatmul.bf16.gmra.mxu0 %v219
    %v4214 = vpop.f32.mrf.mxu0
    %v4215 = vadd.f32 0.0, %v4214
    %v4216 = vpop.f32.mrf.mxu0
    %v4217 = vadd.f32 0.0, %v4216
    %4218 = vmatmul.bf16.gmra.mxu0 %v221
    %v4219 = vpop.f32.mrf.mxu0
    %v4220 = vadd.f32 0.0, %v4219
    %v4221 = vpop.f32.mrf.mxu0
    %v4222 = vadd.f32 0.0, %v4221
    %4223 = vmatmul.bf16.gmra.mxu0 %v223
    %v4224 = vpop.f32.mrf.mxu0
    %v4225 = vadd.f32 0.0, %v4224
    %v4226 = vpop.f32.mrf.mxu0
    %v4227 = vadd.f32 0.0, %v4226
    %4228 = vmatmul.bf16.gmra.mxu0 %v225
    %v4229 = vpop.f32.mrf.mxu0
    %v4230 = vadd.f32 0.0, %v4229
    %v4231 = vpop.f32.mrf.mxu0
    %v4232 = vadd.f32 0.0, %v4231
    %4233 = vmatmul.bf16.gmra.mxu0 %v227
    %v4234 = vpop.f32.mrf.mxu0
    %v4235 = vadd.f32 0.0, %v4234
    %v4236 = vpop.f32.mrf.mxu0
    %v4237 = vadd.f32 0.0, %v4236
    %4238 = vmatmul.bf16.gmra.mxu0 %v229
    %v4239 = vpop.f32.mrf.mxu0
    %v4240 = vadd.f32 0.0, %v4239
    %v4241 = vpop.f32.mrf.mxu0
    %v4242 = vadd.f32 0.0, %v4241
    %4243 = vmatmul.bf16.gmra.mxu0 %v231
    %v4244 = vpop.f32.mrf.mxu0
    %v4245 = vadd.f32 0.0, %v4244
    %v4246 = vpop.f32.mrf.mxu0
    %v4247 = vadd.f32 0.0, %v4246
    %4248 = vmatmul.bf16.gmra.mxu0 %v233
    %v4249 = vpop.f32.mrf.mxu0
    %v4250 = vadd.f32 0.0, %v4249
    %v4251 = vpop.f32.mrf.mxu0
    %v4252 = vadd.f32 0.0, %v4251
    %4253 = vmatmul.bf16.gmra.mxu0 %v235
    %v4254 = vpop.f32.mrf.mxu0
    %v4255 = vadd.f32 0.0, %v4254
    %v4256 = vpop.f32.mrf.mxu0
    %v4257 = vadd.f32 0.0, %v4256
    %4258 = vmatmul.bf16.gmra.mxu0 %v237
    %v4259 = vpop.f32.mrf.mxu0
    %v4260 = vadd.f32 0.0, %v4259
    %v4261 = vpop.f32.mrf.mxu0
    %v4262 = vadd.f32 0.0, %v4261
    %4263 = vdwg.mxu0
    %4264 = vmatpush.bf16.msra.mxu0 %v1195
    %4265 = vmatpush.bf16.msra.mxu0 %v1183
    %4266 = vmatpush.bf16.msra.mxu0 %v1171
    %4267 = vmatpush.bf16.msra.mxu0 %v1159
    %4268 = vmatpush.bf16.msra.mxu0 %v1147
    %4269 = vmatpush.bf16.msra.mxu0 %v1135
    %4270 = vmatpush.bf16.msra.mxu0 %v1123
    %4271 = vmatpush.bf16.msra.mxu0 %v1111
    %4272 = vmatmul.bf16.gmra.mxu0 %v176
    %v4273 = vpop.f32.mrf.mxu0
    %v4274 = vadd.f32 %v4105, %v4273
    %v4275 = vpop.f32.mrf.mxu0
    %v4276 = vadd.f32 %v4107, %v4275
    %4277 = vmatmul.bf16.gmra.mxu0 %v178
    %v4278 = vpop.f32.mrf.mxu0
    %v4279 = vadd.f32 %v4110, %v4278
    %v4280 = vpop.f32.mrf.mxu0
    %v4281 = vadd.f32 %v4112, %v4280
    %4282 = vmatmul.bf16.gmra.mxu0 %v180
    %v4283 = vpop.f32.mrf.mxu0
    %v4284 = vadd.f32 %v4115, %v4283
    %v4285 = vpop.f32.mrf.mxu0
    %v4286 = vadd.f32 %v4117, %v4285
    %4287 = vmatmul.bf16.gmra.mxu0 %v182
    %v4288 = vpop.f32.mrf.mxu0
    %v4289 = vadd.f32 %v4120, %v4288
    %v4290 = vpop.f32.mrf.mxu0
    %v4291 = vadd.f32 %v4122, %v4290
    %4292 = vmatmul.bf16.gmra.mxu0 %v184
    %v4293 = vpop.f32.mrf.mxu0
    %v4294 = vadd.f32 %v4125, %v4293
    %v4295 = vpop.f32.mrf.mxu0
    %v4296 = vadd.f32 %v4127, %v4295
    %4297 = vmatmul.bf16.gmra.mxu0 %v186
    %v4298 = vpop.f32.mrf.mxu0
    %v4299 = vadd.f32 %v4130, %v4298
    %v4300 = vpop.f32.mrf.mxu0
    %v4301 = vadd.f32 %v4132, %v4300
    %4302 = vmatmul.bf16.gmra.mxu0 %v188
    %v4303 = vpop.f32.mrf.mxu0
    %v4304 = vadd.f32 %v4135, %v4303
    %v4305 = vpop.f32.mrf.mxu0
    %v4306 = vadd.f32 %v4137, %v4305
    %4307 = vmatmul.bf16.gmra.mxu0 %v190
    %v4308 = vpop.f32.mrf.mxu0
    %v4309 = vadd.f32 %v4140, %v4308
    %v4310 = vpop.f32.mrf.mxu0
    %v4311 = vadd.f32 %v4142, %v4310
    %4312 = vmatmul.bf16.gmra.mxu0 %v192
    %v4313 = vpop.f32.mrf.mxu0
    %v4314 = vadd.f32 %v4145, %v4313
    %v4315 = vpop.f32.mrf.mxu0
    %v4316 = vadd.f32 %v4147, %v4315
    %4317 = vmatmul.bf16.gmra.mxu0 %v194
    %v4318 = vpop.f32.mrf.mxu0
    %v4319 = vadd.f32 %v4150, %v4318
    %v4320 = vpop.f32.mrf.mxu0
    %v4321 = vadd.f32 %v4152, %v4320
    %4322 = vmatmul.bf16.gmra.mxu0 %v196
    %v4323 = vpop.f32.mrf.mxu0
    %v4324 = vadd.f32 %v4155, %v4323
    %v4325 = vpop.f32.mrf.mxu0
    %v4326 = vadd.f32 %v4157, %v4325
    %4327 = vmatmul.bf16.gmra.mxu0 %v198
    %v4328 = vpop.f32.mrf.mxu0
    %v4329 = vadd.f32 %v4160, %v4328
    %v4330 = vpop.f32.mrf.mxu0
    %v4331 = vadd.f32 %v4162, %v4330
    %4332 = vmatmul.bf16.gmra.mxu0 %v200
    %v4333 = vpop.f32.mrf.mxu0
    %v4334 = vadd.f32 %v4165, %v4333
    %v4335 = vpop.f32.mrf.mxu0
    %v4336 = vadd.f32 %v4167, %v4335
    %4337 = vmatmul.bf16.gmra.mxu0 %v202
    %v4338 = vpop.f32.mrf.mxu0
    %v4339 = vadd.f32 %v4170, %v4338
    %v4340 = vpop.f32.mrf.mxu0
    %v4341 = vadd.f32 %v4172, %v4340
    %4342 = vmatmul.bf16.gmra.mxu0 %v204
    %v4343 = vpop.f32.mrf.mxu0
    %v4344 = vadd.f32 %v4175, %v4343
    %v4345 = vpop.f32.mrf.mxu0
    %v4346 = vadd.f32 %v4177, %v4345
    %4347 = vmatmul.bf16.gmra.mxu0 %v206
    %v4348 = vpop.f32.mrf.mxu0
    %v4349 = vadd.f32 %v4180, %v4348
    %v4350 = vpop.f32.mrf.mxu0
    %v4351 = vadd.f32 %v4182, %v4350
    %4352 = vmatmul.bf16.gmra.mxu0 %v208
    %v4353 = vpop.f32.mrf.mxu0
    %v4354 = vadd.f32 %v4185, %v4353
    %v4355 = vpop.f32.mrf.mxu0
    %v4356 = vadd.f32 %v4187, %v4355
    %4357 = vmatmul.bf16.gmra.mxu0 %v210
    %v4358 = vpop.f32.mrf.mxu0
    %v4359 = vadd.f32 %v4190, %v4358
    %v4360 = vpop.f32.mrf.mxu0
    %v4361 = vadd.f32 %v4192, %v4360
    %4362 = vmatmul.bf16.gmra.mxu0 %v212
    %v4363 = vpop.f32.mrf.mxu0
    %v4364 = vadd.f32 %v4195, %v4363
    %v4365 = vpop.f32.mrf.mxu0
    %v4366 = vadd.f32 %v4197, %v4365
    %4367 = vmatmul.bf16.gmra.mxu0 %v214
    %v4368 = vpop.f32.mrf.mxu0
    %v4369 = vadd.f32 %v4200, %v4368
    %v4370 = vpop.f32.mrf.mxu0
    %v4371 = vadd.f32 %v4202, %v4370
    %4372 = vmatmul.bf16.gmra.mxu0 %v216
    %v4373 = vpop.f32.mrf.mxu0
    %v4374 = vadd.f32 %v4205, %v4373
    %v4375 = vpop.f32.mrf.mxu0
    %v4376 = vadd.f32 %v4207, %v4375
    %4377 = vmatmul.bf16.gmra.mxu0 %v218
    %v4378 = vpop.f32.mrf.mxu0
    %v4379 = vadd.f32 %v4210, %v4378
    %v4380 = vpop.f32.mrf.mxu0
    %v4381 = vadd.f32 %v4212, %v4380
    %4382 = vmatmul.bf16.gmra.mxu0 %v220
    %v4383 = vpop.f32.mrf.mxu0
    %v4384 = vadd.f32 %v4215, %v4383
    %v4385 = vpop.f32.mrf.mxu0
    %v4386 = vadd.f32 %v4217, %v4385
    %4387 = vmatmul.bf16.gmra.mxu0 %v222
    %v4388 = vpop.f32.mrf.mxu0
    %v4389 = vadd.f32 %v4220, %v4388
    %v4390 = vpop.f32.mrf.mxu0
    %v4391 = vadd.f32 %v4222, %v4390
    %4392 = vmatmul.bf16.gmra.mxu0 %v224
    %v4393 = vpop.f32.mrf.mxu0
    %v4394 = vadd.f32 %v4225, %v4393
    %v4395 = vpop.f32.mrf.mxu0
    %v4396 = vadd.f32 %v4227, %v4395
    %4397 = vmatmul.bf16.gmra.mxu0 %v226
    %v4398 = vpop.f32.mrf.mxu0
    %v4399 = vadd.f32 %v4230, %v4398
    %v4400 = vpop.f32.mrf.mxu0
    %v4401 = vadd.f32 %v4232, %v4400
    %4402 = vmatmul.bf16.gmra.mxu0 %v228
    %v4403 = vpop.f32.mrf.mxu0
    %v4404 = vadd.f32 %v4235, %v4403
    %v4405 = vpop.f32.mrf.mxu0
    %v4406 = vadd.f32 %v4237, %v4405
    %4407 = vmatmul.bf16.gmra.mxu0 %v230
    %v4408 = vpop.f32.mrf.mxu0
    %v4409 = vadd.f32 %v4240, %v4408
    %v4410 = vpop.f32.mrf.mxu0
    %v4411 = vadd.f32 %v4242, %v4410
    %4412 = vmatmul.bf16.gmra.mxu0 %v232
    %v4413 = vpop.f32.mrf.mxu0
    %v4414 = vadd.f32 %v4245, %v4413
    %v4415 = vpop.f32.mrf.mxu0
    %v4416 = vadd.f32 %v4247, %v4415
    %4417 = vmatmul.bf16.gmra.mxu0 %v234
    %v4418 = vpop.f32.mrf.mxu0
    %v4419 = vadd.f32 %v4250, %v4418
    %v4420 = vpop.f32.mrf.mxu0
    %v4421 = vadd.f32 %v4252, %v4420
    %4422 = vmatmul.bf16.gmra.mxu0 %v236
    %v4423 = vpop.f32.mrf.mxu0
    %v4424 = vadd.f32 %v4255, %v4423
    %v4425 = vpop.f32.mrf.mxu0
    %v4426 = vadd.f32 %v4257, %v4425
    %4427 = vmatmul.bf16.gmra.mxu0 %v238
    %v4428 = vpop.f32.mrf.mxu0
    %v4429 = vadd.f32 %v4260, %v4428
    %v4430 = vpop.f32.mrf.mxu0
    %v4431 = vadd.f32 %v4262, %v4430
    %4432 = vdwg.mxu0
    %4433 = vmatpush.bf16.msra.mxu0 %v1100
    %4434 = vmatpush.bf16.msra.mxu0 %v1088
    %4435 = vmatpush.bf16.msra.mxu0 %v1076
    %4436 = vmatpush.bf16.msra.mxu0 %v1064
    %4437 = vmatpush.bf16.msra.mxu0 %v1052
    %4438 = vmatpush.bf16.msra.mxu0 %v1040
    %4439 = vmatpush.bf16.msra.mxu0 %v1028
    %4440 = vmatpush.bf16.msra.mxu0 %v1016
    %4441 = vmatmul.bf16.gmra.mxu0 %v175
    %v4442 = vpop.f32.mrf.mxu0
    %v4443 = vadd.f32 0.0, %v4442
    %v4444 = vpop.f32.mrf.mxu0
    %v4445 = vadd.f32 0.0, %v4444
    %4446 = vmatmul.bf16.gmra.mxu0 %v177
    %v4447 = vpop.f32.mrf.mxu0
    %v4448 = vadd.f32 0.0, %v4447
    %v4449 = vpop.f32.mrf.mxu0
    %v4450 = vadd.f32 0.0, %v4449
    %4451 = vmatmul.bf16.gmra.mxu0 %v179
    %v4452 = vpop.f32.mrf.mxu0
    %v4453 = vadd.f32 0.0, %v4452
    %v4454 = vpop.f32.mrf.mxu0
    %v4455 = vadd.f32 0.0, %v4454
    %4456 = vmatmul.bf16.gmra.mxu0 %v181
    %v4457 = vpop.f32.mrf.mxu0
    %v4458 = vadd.f32 0.0, %v4457
    %v4459 = vpop.f32.mrf.mxu0
    %v4460 = vadd.f32 0.0, %v4459
    %4461 = vmatmul.bf16.gmra.mxu0 %v183
    %v4462 = vpop.f32.mrf.mxu0
    %v4463 = vadd.f32 0.0, %v4462
    %v4464 = vpop.f32.mrf.mxu0
    %v4465 = vadd.f32 0.0, %v4464
    %4466 = vmatmul.bf16.gmra.mxu0 %v185
    %v4467 = vpop.f32.mrf.mxu0
    %v4468 = vadd.f32 0.0, %v4467
    %v4469 = vpop.f32.mrf.mxu0
    %v4470 = vadd.f32 0.0, %v4469
    %4471 = vmatmul.bf16.gmra.mxu0 %v187
    %v4472 = vpop.f32.mrf.mxu0
    %v4473 = vadd.f32 0.0, %v4472
    %v4474 = vpop.f32.mrf.mxu0
    %v4475 = vadd.f32 0.0, %v4474
    %4476 = vmatmul.bf16.gmra.mxu0 %v189
    %v4477 = vpop.f32.mrf.mxu0
    %v4478 = vadd.f32 0.0, %v4477
    %v4479 = vpop.f32.mrf.mxu0
    %v4480 = vadd.f32 0.0, %v4479
    %4481 = vmatmul.bf16.gmra.mxu0 %v191
    %v4482 = vpop.f32.mrf.mxu0
    %v4483 = vadd.f32 0.0, %v4482
    %v4484 = vpop.f32.mrf.mxu0
    %v4485 = vadd.f32 0.0, %v4484
    %4486 = vmatmul.bf16.gmra.mxu0 %v193
    %v4487 = vpop.f32.mrf.mxu0
    %v4488 = vadd.f32 0.0, %v4487
    %v4489 = vpop.f32.mrf.mxu0
    %v4490 = vadd.f32 0.0, %v4489
    %4491 = vmatmul.bf16.gmra.mxu0 %v195
    %v4492 = vpop.f32.mrf.mxu0
    %v4493 = vadd.f32 0.0, %v4492
    %v4494 = vpop.f32.mrf.mxu0
    %v4495 = vadd.f32 0.0, %v4494
    %4496 = vmatmul.bf16.gmra.mxu0 %v197
    %v4497 = vpop.f32.mrf.mxu0
    %v4498 = vadd.f32 0.0, %v4497
    %v4499 = vpop.f32.mrf.mxu0
    %v4500 = vadd.f32 0.0, %v4499
    %4501 = vmatmul.bf16.gmra.mxu0 %v199
    %v4502 = vpop.f32.mrf.mxu0
    %v4503 = vadd.f32 0.0, %v4502
    %v4504 = vpop.f32.mrf.mxu0
    %v4505 = vadd.f32 0.0, %v4504
    %4506 = vmatmul.bf16.gmra.mxu0 %v201
    %v4507 = vpop.f32.mrf.mxu0
    %v4508 = vadd.f32 0.0, %v4507
    %v4509 = vpop.f32.mrf.mxu0
    %v4510 = vadd.f32 0.0, %v4509
    %4511 = vmatmul.bf16.gmra.mxu0 %v203
    %v4512 = vpop.f32.mrf.mxu0
    %v4513 = vadd.f32 0.0, %v4512
    %v4514 = vpop.f32.mrf.mxu0
    %v4515 = vadd.f32 0.0, %v4514
    %4516 = vmatmul.bf16.gmra.mxu0 %v205
    %v4517 = vpop.f32.mrf.mxu0
    %v4518 = vadd.f32 0.0, %v4517
    %v4519 = vpop.f32.mrf.mxu0
    %v4520 = vadd.f32 0.0, %v4519
    %4521 = vmatmul.bf16.gmra.mxu0 %v207
    %v4522 = vpop.f32.mrf.mxu0
    %v4523 = vadd.f32 0.0, %v4522
    %v4524 = vpop.f32.mrf.mxu0
    %v4525 = vadd.f32 0.0, %v4524
    %4526 = vmatmul.bf16.gmra.mxu0 %v209
    %v4527 = vpop.f32.mrf.mxu0
    %v4528 = vadd.f32 0.0, %v4527
    %v4529 = vpop.f32.mrf.mxu0
    %v4530 = vadd.f32 0.0, %v4529
    %4531 = vmatmul.bf16.gmra.mxu0 %v211
    %v4532 = vpop.f32.mrf.mxu0
    %v4533 = vadd.f32 0.0, %v4532
    %v4534 = vpop.f32.mrf.mxu0
    %v4535 = vadd.f32 0.0, %v4534
    %4536 = vmatmul.bf16.gmra.mxu0 %v213
    %v4537 = vpop.f32.mrf.mxu0
    %v4538 = vadd.f32 0.0, %v4537
    %v4539 = vpop.f32.mrf.mxu0
    %v4540 = vadd.f32 0.0, %v4539
    %4541 = vmatmul.bf16.gmra.mxu0 %v215
    %v4542 = vpop.f32.mrf.mxu0
    %v4543 = vadd.f32 0.0, %v4542
    %v4544 = vpop.f32.mrf.mxu0
    %v4545 = vadd.f32 0.0, %v4544
    %4546 = vmatmul.bf16.gmra.mxu0 %v217
    %v4547 = vpop.f32.mrf.mxu0
    %v4548 = vadd.f32 0.0, %v4547
    %v4549 = vpop.f32.mrf.mxu0
    %v4550 = vadd.f32 0.0, %v4549
    %4551 = vmatmul.bf16.gmra.mxu0 %v219
    %v4552 = vpop.f32.mrf.mxu0
    %v4553 = vadd.f32 0.0, %v4552
    %v4554 = vpop.f32.mrf.mxu0
    %v4555 = vadd.f32 0.0, %v4554
    %4556 = vmatmul.bf16.gmra.mxu0 %v221
    %v4557 = vpop.f32.mrf.mxu0
    %v4558 = vadd.f32 0.0, %v4557
    %v4559 = vpop.f32.mrf.mxu0
    %v4560 = vadd.f32 0.0, %v4559
    %4561 = vmatmul.bf16.gmra.mxu0 %v223
    %v4562 = vpop.f32.mrf.mxu0
    %v4563 = vadd.f32 0.0, %v4562
    %v4564 = vpop.f32.mrf.mxu0
    %v4565 = vadd.f32 0.0, %v4564
    %4566 = vmatmul.bf16.gmra.mxu0 %v225
    %v4567 = vpop.f32.mrf.mxu0
    %v4568 = vadd.f32 0.0, %v4567
    %v4569 = vpop.f32.mrf.mxu0
    %v4570 = vadd.f32 0.0, %v4569
    %4571 = vmatmul.bf16.gmra.mxu0 %v227
    %v4572 = vpop.f32.mrf.mxu0
    %v4573 = vadd.f32 0.0, %v4572
    %v4574 = vpop.f32.mrf.mxu0
    %v4575 = vadd.f32 0.0, %v4574
    %4576 = vmatmul.bf16.gmra.mxu0 %v229
    %v4577 = vpop.f32.mrf.mxu0
    %v4578 = vadd.f32 0.0, %v4577
    %v4579 = vpop.f32.mrf.mxu0
    %v4580 = vadd.f32 0.0, %v4579
    %4581 = vmatmul.bf16.gmra.mxu0 %v231
    %v4582 = vpop.f32.mrf.mxu0
    %v4583 = vadd.f32 0.0, %v4582
    %v4584 = vpop.f32.mrf.mxu0
    %v4585 = vadd.f32 0.0, %v4584
    %4586 = vmatmul.bf16.gmra.mxu0 %v233
    %v4587 = vpop.f32.mrf.mxu0
    %v4588 = vadd.f32 0.0, %v4587
    %v4589 = vpop.f32.mrf.mxu0
    %v4590 = vadd.f32 0.0, %v4589
    %4591 = vmatmul.bf16.gmra.mxu0 %v235
    %v4592 = vpop.f32.mrf.mxu0
    %v4593 = vadd.f32 0.0, %v4592
    %v4594 = vpop.f32.mrf.mxu0
    %v4595 = vadd.f32 0.0, %v4594
    %4596 = vmatmul.bf16.gmra.mxu0 %v237
    %v4597 = vpop.f32.mrf.mxu0
    %v4598 = vadd.f32 0.0, %v4597
    %v4599 = vpop.f32.mrf.mxu0
    %v4600 = vadd.f32 0.0, %v4599
    %4601 = vdwg.mxu0
    %4602 = vmatpush.bf16.msra.mxu0 %v1196
    %4603 = vmatpush.bf16.msra.mxu0 %v1184
    %4604 = vmatpush.bf16.msra.mxu0 %v1172
    %4605 = vmatpush.bf16.msra.mxu0 %v1160
    %4606 = vmatpush.bf16.msra.mxu0 %v1148
    %4607 = vmatpush.bf16.msra.mxu0 %v1136
    %4608 = vmatpush.bf16.msra.mxu0 %v1124
    %4609 = vmatpush.bf16.msra.mxu0 %v1112
    %4610 = vmatmul.bf16.gmra.mxu0 %v176
    %v4611 = vpop.f32.mrf.mxu0
    %v4612 = vadd.f32 %v4443, %v4611
    %v4613 = vpop.f32.mrf.mxu0
    %v4614 = vadd.f32 %v4445, %v4613
    %4615 = vmatmul.bf16.gmra.mxu0 %v178
    %v4616 = vpop.f32.mrf.mxu0
    %v4617 = vadd.f32 %v4448, %v4616
    %v4618 = vpop.f32.mrf.mxu0
    %v4619 = vadd.f32 %v4450, %v4618
    %4620 = vmatmul.bf16.gmra.mxu0 %v180
    %v4621 = vpop.f32.mrf.mxu0
    %v4622 = vadd.f32 %v4453, %v4621
    %v4623 = vpop.f32.mrf.mxu0
    %v4624 = vadd.f32 %v4455, %v4623
    %4625 = vmatmul.bf16.gmra.mxu0 %v182
    %v4626 = vpop.f32.mrf.mxu0
    %v4627 = vadd.f32 %v4458, %v4626
    %v4628 = vpop.f32.mrf.mxu0
    %v4629 = vadd.f32 %v4460, %v4628
    %4630 = vmatmul.bf16.gmra.mxu0 %v184
    %v4631 = vpop.f32.mrf.mxu0
    %v4632 = vadd.f32 %v4463, %v4631
    %v4633 = vpop.f32.mrf.mxu0
    %v4634 = vadd.f32 %v4465, %v4633
    %4635 = vmatmul.bf16.gmra.mxu0 %v186
    %v4636 = vpop.f32.mrf.mxu0
    %v4637 = vadd.f32 %v4468, %v4636
    %v4638 = vpop.f32.mrf.mxu0
    %v4639 = vadd.f32 %v4470, %v4638
    %4640 = vmatmul.bf16.gmra.mxu0 %v188
    %v4641 = vpop.f32.mrf.mxu0
    %v4642 = vadd.f32 %v4473, %v4641
    %v4643 = vpop.f32.mrf.mxu0
    %v4644 = vadd.f32 %v4475, %v4643
    %4645 = vmatmul.bf16.gmra.mxu0 %v190
    %v4646 = vpop.f32.mrf.mxu0
    %v4647 = vadd.f32 %v4478, %v4646
    %v4648 = vpop.f32.mrf.mxu0
    %v4649 = vadd.f32 %v4480, %v4648
    %4650 = vmatmul.bf16.gmra.mxu0 %v192
    %v4651 = vpop.f32.mrf.mxu0
    %v4652 = vadd.f32 %v4483, %v4651
    %v4653 = vpop.f32.mrf.mxu0
    %v4654 = vadd.f32 %v4485, %v4653
    %4655 = vmatmul.bf16.gmra.mxu0 %v194
    %v4656 = vpop.f32.mrf.mxu0
    %v4657 = vadd.f32 %v4488, %v4656
    %v4658 = vpop.f32.mrf.mxu0
    %v4659 = vadd.f32 %v4490, %v4658
    %4660 = vmatmul.bf16.gmra.mxu0 %v196
    %v4661 = vpop.f32.mrf.mxu0
    %v4662 = vadd.f32 %v4493, %v4661
    %v4663 = vpop.f32.mrf.mxu0
    %v4664 = vadd.f32 %v4495, %v4663
    %4665 = vmatmul.bf16.gmra.mxu0 %v198
    %v4666 = vpop.f32.mrf.mxu0
    %v4667 = vadd.f32 %v4498, %v4666
    %v4668 = vpop.f32.mrf.mxu0
    %v4669 = vadd.f32 %v4500, %v4668
    %4670 = vmatmul.bf16.gmra.mxu0 %v200
    %v4671 = vpop.f32.mrf.mxu0
    %v4672 = vadd.f32 %v4503, %v4671
    %v4673 = vpop.f32.mrf.mxu0
    %v4674 = vadd.f32 %v4505, %v4673
    %4675 = vmatmul.bf16.gmra.mxu0 %v202
    %v4676 = vpop.f32.mrf.mxu0
    %v4677 = vadd.f32 %v4508, %v4676
    %v4678 = vpop.f32.mrf.mxu0
    %v4679 = vadd.f32 %v4510, %v4678
    %4680 = vmatmul.bf16.gmra.mxu0 %v204
    %v4681 = vpop.f32.mrf.mxu0
    %v4682 = vadd.f32 %v4513, %v4681
    %v4683 = vpop.f32.mrf.mxu0
    %v4684 = vadd.f32 %v4515, %v4683
    %4685 = vmatmul.bf16.gmra.mxu0 %v206
    %v4686 = vpop.f32.mrf.mxu0
    %v4687 = vadd.f32 %v4518, %v4686
    %v4688 = vpop.f32.mrf.mxu0
    %v4689 = vadd.f32 %v4520, %v4688
    %4690 = vmatmul.bf16.gmra.mxu0 %v208
    %v4691 = vpop.f32.mrf.mxu0
    %v4692 = vadd.f32 %v4523, %v4691
    %v4693 = vpop.f32.mrf.mxu0
    %v4694 = vadd.f32 %v4525, %v4693
    %4695 = vmatmul.bf16.gmra.mxu0 %v210
    %v4696 = vpop.f32.mrf.mxu0
    %v4697 = vadd.f32 %v4528, %v4696
    %v4698 = vpop.f32.mrf.mxu0
    %v4699 = vadd.f32 %v4530, %v4698
    %4700 = vmatmul.bf16.gmra.mxu0 %v212
    %v4701 = vpop.f32.mrf.mxu0
    %v4702 = vadd.f32 %v4533, %v4701
    %v4703 = vpop.f32.mrf.mxu0
    %v4704 = vadd.f32 %v4535, %v4703
    %4705 = vmatmul.bf16.gmra.mxu0 %v214
    %v4706 = vpop.f32.mrf.mxu0
    %v4707 = vadd.f32 %v4538, %v4706
    %v4708 = vpop.f32.mrf.mxu0
    %v4709 = vadd.f32 %v4540, %v4708
    %4710 = vmatmul.bf16.gmra.mxu0 %v216
    %v4711 = vpop.f32.mrf.mxu0
    %v4712 = vadd.f32 %v4543, %v4711
    %v4713 = vpop.f32.mrf.mxu0
    %v4714 = vadd.f32 %v4545, %v4713
    %4715 = vmatmul.bf16.gmra.mxu0 %v218
    %v4716 = vpop.f32.mrf.mxu0
    %v4717 = vadd.f32 %v4548, %v4716
    %v4718 = vpop.f32.mrf.mxu0
    %v4719 = vadd.f32 %v4550, %v4718
    %4720 = vmatmul.bf16.gmra.mxu0 %v220
    %v4721 = vpop.f32.mrf.mxu0
    %v4722 = vadd.f32 %v4553, %v4721
    %v4723 = vpop.f32.mrf.mxu0
    %v4724 = vadd.f32 %v4555, %v4723
    %4725 = vmatmul.bf16.gmra.mxu0 %v222
    %v4726 = vpop.f32.mrf.mxu0
    %v4727 = vadd.f32 %v4558, %v4726
    %v4728 = vpop.f32.mrf.mxu0
    %v4729 = vadd.f32 %v4560, %v4728
    %4730 = vmatmul.bf16.gmra.mxu0 %v224
    %v4731 = vpop.f32.mrf.mxu0
    %v4732 = vadd.f32 %v4563, %v4731
    %v4733 = vpop.f32.mrf.mxu0
    %v4734 = vadd.f32 %v4565, %v4733
    %4735 = vmatmul.bf16.gmra.mxu0 %v226
    %v4736 = vpop.f32.mrf.mxu0
    %v4737 = vadd.f32 %v4568, %v4736
    %v4738 = vpop.f32.mrf.mxu0
    %v4739 = vadd.f32 %v4570, %v4738
    %4740 = vmatmul.bf16.gmra.mxu0 %v228
    %v4741 = vpop.f32.mrf.mxu0
    %v4742 = vadd.f32 %v4573, %v4741
    %v4743 = vpop.f32.mrf.mxu0
    %v4744 = vadd.f32 %v4575, %v4743
    %4745 = vmatmul.bf16.gmra.mxu0 %v230
    %v4746 = vpop.f32.mrf.mxu0
    %v4747 = vadd.f32 %v4578, %v4746
    %v4748 = vpop.f32.mrf.mxu0
    %v4749 = vadd.f32 %v4580, %v4748
    %4750 = vmatmul.bf16.gmra.mxu0 %v232
    %v4751 = vpop.f32.mrf.mxu0
    %v4752 = vadd.f32 %v4583, %v4751
    %v4753 = vpop.f32.mrf.mxu0
    %v4754 = vadd.f32 %v4585, %v4753
    %4755 = vmatmul.bf16.gmra.mxu0 %v234
    %v4756 = vpop.f32.mrf.mxu0
    %v4757 = vadd.f32 %v4588, %v4756
    %v4758 = vpop.f32.mrf.mxu0
    %v4759 = vadd.f32 %v4590, %v4758
    %4760 = vmatmul.bf16.gmra.mxu0 %v236
    %v4761 = vpop.f32.mrf.mxu0
    %v4762 = vadd.f32 %v4593, %v4761
    %v4763 = vpop.f32.mrf.mxu0
    %v4764 = vadd.f32 %v4595, %v4763
    %4765 = vmatmul.bf16.gmra.mxu0 %v238
    %v4766 = vpop.f32.mrf.mxu0
    %v4767 = vadd.f32 %v4598, %v4766
    %v4768 = vpop.f32.mrf.mxu0
    %v4769 = vadd.f32 %v4600, %v4768
    %4770 = vdwg.mxu0
    %4771 = vmatpush.bf16.msra.mxu0 %v1101
    %4772 = vmatpush.bf16.msra.mxu0 %v1089
    %4773 = vmatpush.bf16.msra.mxu0 %v1077
    %4774 = vmatpush.bf16.msra.mxu0 %v1065
    %4775 = vmatpush.bf16.msra.mxu0 %v1053
    %4776 = vmatpush.bf16.msra.mxu0 %v1041
    %4777 = vmatpush.bf16.msra.mxu0 %v1029
    %4778 = vmatpush.bf16.msra.mxu0 %v1017
    %4779 = vmatmul.bf16.gmra.mxu0 %v175
    %v4780 = vpop.f32.mrf.mxu0
    %v4781 = vadd.f32 0.0, %v4780
    %v4782 = vpop.f32.mrf.mxu0
    %v4783 = vadd.f32 0.0, %v4782
    %4784 = vmatmul.bf16.gmra.mxu0 %v177
    %v4785 = vpop.f32.mrf.mxu0
    %v4786 = vadd.f32 0.0, %v4785
    %v4787 = vpop.f32.mrf.mxu0
    %v4788 = vadd.f32 0.0, %v4787
    %4789 = vmatmul.bf16.gmra.mxu0 %v179
    %v4790 = vpop.f32.mrf.mxu0
    %v4791 = vadd.f32 0.0, %v4790
    %v4792 = vpop.f32.mrf.mxu0
    %v4793 = vadd.f32 0.0, %v4792
    %4794 = vmatmul.bf16.gmra.mxu0 %v181
    %v4795 = vpop.f32.mrf.mxu0
    %v4796 = vadd.f32 0.0, %v4795
    %v4797 = vpop.f32.mrf.mxu0
    %v4798 = vadd.f32 0.0, %v4797
    %4799 = vmatmul.bf16.gmra.mxu0 %v183
    %v4800 = vpop.f32.mrf.mxu0
    %v4801 = vadd.f32 0.0, %v4800
    %v4802 = vpop.f32.mrf.mxu0
    %v4803 = vadd.f32 0.0, %v4802
    %4804 = vmatmul.bf16.gmra.mxu0 %v185
    %v4805 = vpop.f32.mrf.mxu0
    %v4806 = vadd.f32 0.0, %v4805
    %v4807 = vpop.f32.mrf.mxu0
    %v4808 = vadd.f32 0.0, %v4807
    %4809 = vmatmul.bf16.gmra.mxu0 %v187
    %v4810 = vpop.f32.mrf.mxu0
    %v4811 = vadd.f32 0.0, %v4810
    %v4812 = vpop.f32.mrf.mxu0
    %v4813 = vadd.f32 0.0, %v4812
    %4814 = vmatmul.bf16.gmra.mxu0 %v189
    %v4815 = vpop.f32.mrf.mxu0
    %v4816 = vadd.f32 0.0, %v4815
    %v4817 = vpop.f32.mrf.mxu0
    %v4818 = vadd.f32 0.0, %v4817
    %4819 = vmatmul.bf16.gmra.mxu0 %v191
    %v4820 = vpop.f32.mrf.mxu0
    %v4821 = vadd.f32 0.0, %v4820
    %v4822 = vpop.f32.mrf.mxu0
    %v4823 = vadd.f32 0.0, %v4822
    %4824 = vmatmul.bf16.gmra.mxu0 %v193
    %v4825 = vpop.f32.mrf.mxu0
    %v4826 = vadd.f32 0.0, %v4825
    %v4827 = vpop.f32.mrf.mxu0
    %v4828 = vadd.f32 0.0, %v4827
    %4829 = vmatmul.bf16.gmra.mxu0 %v195
    %v4830 = vpop.f32.mrf.mxu0
    %v4831 = vadd.f32 0.0, %v4830
    %v4832 = vpop.f32.mrf.mxu0
    %v4833 = vadd.f32 0.0, %v4832
    %4834 = vmatmul.bf16.gmra.mxu0 %v197
    %v4835 = vpop.f32.mrf.mxu0
    %v4836 = vadd.f32 0.0, %v4835
    %v4837 = vpop.f32.mrf.mxu0
    %v4838 = vadd.f32 0.0, %v4837
    %4839 = vmatmul.bf16.gmra.mxu0 %v199
    %v4840 = vpop.f32.mrf.mxu0
    %v4841 = vadd.f32 0.0, %v4840
    %v4842 = vpop.f32.mrf.mxu0
    %v4843 = vadd.f32 0.0, %v4842
    %4844 = vmatmul.bf16.gmra.mxu0 %v201
    %v4845 = vpop.f32.mrf.mxu0
    %v4846 = vadd.f32 0.0, %v4845
    %v4847 = vpop.f32.mrf.mxu0
    %v4848 = vadd.f32 0.0, %v4847
    %4849 = vmatmul.bf16.gmra.mxu0 %v203
    %v4850 = vpop.f32.mrf.mxu0
    %v4851 = vadd.f32 0.0, %v4850
    %v4852 = vpop.f32.mrf.mxu0
    %v4853 = vadd.f32 0.0, %v4852
    %4854 = vmatmul.bf16.gmra.mxu0 %v205
    %v4855 = vpop.f32.mrf.mxu0
    %v4856 = vadd.f32 0.0, %v4855
    %v4857 = vpop.f32.mrf.mxu0
    %v4858 = vadd.f32 0.0, %v4857
    %4859 = vmatmul.bf16.gmra.mxu0 %v207
    %v4860 = vpop.f32.mrf.mxu0
    %v4861 = vadd.f32 0.0, %v4860
    %v4862 = vpop.f32.mrf.mxu0
    %v4863 = vadd.f32 0.0, %v4862
    %4864 = vmatmul.bf16.gmra.mxu0 %v209
    %v4865 = vpop.f32.mrf.mxu0
    %v4866 = vadd.f32 0.0, %v4865
    %v4867 = vpop.f32.mrf.mxu0
    %v4868 = vadd.f32 0.0, %v4867
    %4869 = vmatmul.bf16.gmra.mxu0 %v211
    %v4870 = vpop.f32.mrf.mxu0
    %v4871 = vadd.f32 0.0, %v4870
    %v4872 = vpop.f32.mrf.mxu0
    %v4873 = vadd.f32 0.0, %v4872
    %4874 = vmatmul.bf16.gmra.mxu0 %v213
    %v4875 = vpop.f32.mrf.mxu0
    %v4876 = vadd.f32 0.0, %v4875
    %v4877 = vpop.f32.mrf.mxu0
    %v4878 = vadd.f32 0.0, %v4877
    %4879 = vmatmul.bf16.gmra.mxu0 %v215
    %v4880 = vpop.f32.mrf.mxu0
    %v4881 = vadd.f32 0.0, %v4880
    %v4882 = vpop.f32.mrf.mxu0
    %v4883 = vadd.f32 0.0, %v4882
    %4884 = vmatmul.bf16.gmra.mxu0 %v217
    %v4885 = vpop.f32.mrf.mxu0
    %v4886 = vadd.f32 0.0, %v4885
    %v4887 = vpop.f32.mrf.mxu0
    %v4888 = vadd.f32 0.0, %v4887
    %4889 = vmatmul.bf16.gmra.mxu0 %v219
    %v4890 = vpop.f32.mrf.mxu0
    %v4891 = vadd.f32 0.0, %v4890
    %v4892 = vpop.f32.mrf.mxu0
    %v4893 = vadd.f32 0.0, %v4892
    %4894 = vmatmul.bf16.gmra.mxu0 %v221
    %v4895 = vpop.f32.mrf.mxu0
    %v4896 = vadd.f32 0.0, %v4895
    %v4897 = vpop.f32.mrf.mxu0
    %v4898 = vadd.f32 0.0, %v4897
    %4899 = vmatmul.bf16.gmra.mxu0 %v223
    %v4900 = vpop.f32.mrf.mxu0
    %v4901 = vadd.f32 0.0, %v4900
    %v4902 = vpop.f32.mrf.mxu0
    %v4903 = vadd.f32 0.0, %v4902
    %4904 = vmatmul.bf16.gmra.mxu0 %v225
    %v4905 = vpop.f32.mrf.mxu0
    %v4906 = vadd.f32 0.0, %v4905
    %v4907 = vpop.f32.mrf.mxu0
    %v4908 = vadd.f32 0.0, %v4907
    %4909 = vmatmul.bf16.gmra.mxu0 %v227
    %v4910 = vpop.f32.mrf.mxu0
    %v4911 = vadd.f32 0.0, %v4910
    %v4912 = vpop.f32.mrf.mxu0
    %v4913 = vadd.f32 0.0, %v4912
    %4914 = vmatmul.bf16.gmra.mxu0 %v229
    %v4915 = vpop.f32.mrf.mxu0
    %v4916 = vadd.f32 0.0, %v4915
    %v4917 = vpop.f32.mrf.mxu0
    %v4918 = vadd.f32 0.0, %v4917
    %4919 = vmatmul.bf16.gmra.mxu0 %v231
    %v4920 = vpop.f32.mrf.mxu0
    %v4921 = vadd.f32 0.0, %v4920
    %v4922 = vpop.f32.mrf.mxu0
    %v4923 = vadd.f32 0.0, %v4922
    %4924 = vmatmul.bf16.gmra.mxu0 %v233
    %v4925 = vpop.f32.mrf.mxu0
    %v4926 = vadd.f32 0.0, %v4925
    %v4927 = vpop.f32.mrf.mxu0
    %v4928 = vadd.f32 0.0, %v4927
    %4929 = vmatmul.bf16.gmra.mxu0 %v235
    %v4930 = vpop.f32.mrf.mxu0
    %v4931 = vadd.f32 0.0, %v4930
    %v4932 = vpop.f32.mrf.mxu0
    %v4933 = vadd.f32 0.0, %v4932
    %4934 = vmatmul.bf16.gmra.mxu0 %v237
    %v4935 = vpop.f32.mrf.mxu0
    %v4936 = vadd.f32 0.0, %v4935
    %v4937 = vpop.f32.mrf.mxu0
    %v4938 = vadd.f32 0.0, %v4937
    %4939 = vdwg.mxu0
    %4940 = vmatpush.bf16.msra.mxu0 %v1197
    %4941 = vmatpush.bf16.msra.mxu0 %v1185
    %4942 = vmatpush.bf16.msra.mxu0 %v1173
    %4943 = vmatpush.bf16.msra.mxu0 %v1161
    %4944 = vmatpush.bf16.msra.mxu0 %v1149
    %4945 = vmatpush.bf16.msra.mxu0 %v1137
    %4946 = vmatpush.bf16.msra.mxu0 %v1125
    %4947 = vmatpush.bf16.msra.mxu0 %v1113
    %4948 = vmatmul.bf16.gmra.mxu0 %v176
    %v4949 = vpop.f32.mrf.mxu0
    %v4950 = vadd.f32 %v4781, %v4949
    %v4951 = vpop.f32.mrf.mxu0
    %v4952 = vadd.f32 %v4783, %v4951
    %4953 = vmatmul.bf16.gmra.mxu0 %v178
    %v4954 = vpop.f32.mrf.mxu0
    %v4955 = vadd.f32 %v4786, %v4954
    %v4956 = vpop.f32.mrf.mxu0
    %v4957 = vadd.f32 %v4788, %v4956
    %4958 = vmatmul.bf16.gmra.mxu0 %v180
    %v4959 = vpop.f32.mrf.mxu0
    %v4960 = vadd.f32 %v4791, %v4959
    %v4961 = vpop.f32.mrf.mxu0
    %v4962 = vadd.f32 %v4793, %v4961
    %4963 = vmatmul.bf16.gmra.mxu0 %v182
    %v4964 = vpop.f32.mrf.mxu0
    %v4965 = vadd.f32 %v4796, %v4964
    %v4966 = vpop.f32.mrf.mxu0
    %v4967 = vadd.f32 %v4798, %v4966
    %4968 = vmatmul.bf16.gmra.mxu0 %v184
    %v4969 = vpop.f32.mrf.mxu0
    %v4970 = vadd.f32 %v4801, %v4969
    %v4971 = vpop.f32.mrf.mxu0
    %v4972 = vadd.f32 %v4803, %v4971
    %4973 = vmatmul.bf16.gmra.mxu0 %v186
    %v4974 = vpop.f32.mrf.mxu0
    %v4975 = vadd.f32 %v4806, %v4974
    %v4976 = vpop.f32.mrf.mxu0
    %v4977 = vadd.f32 %v4808, %v4976
    %4978 = vmatmul.bf16.gmra.mxu0 %v188
    %v4979 = vpop.f32.mrf.mxu0
    %v4980 = vadd.f32 %v4811, %v4979
    %v4981 = vpop.f32.mrf.mxu0
    %v4982 = vadd.f32 %v4813, %v4981
    %4983 = vmatmul.bf16.gmra.mxu0 %v190
    %v4984 = vpop.f32.mrf.mxu0
    %v4985 = vadd.f32 %v4816, %v4984
    %v4986 = vpop.f32.mrf.mxu0
    %v4987 = vadd.f32 %v4818, %v4986
    %4988 = vmatmul.bf16.gmra.mxu0 %v192
    %v4989 = vpop.f32.mrf.mxu0
    %v4990 = vadd.f32 %v4821, %v4989
    %v4991 = vpop.f32.mrf.mxu0
    %v4992 = vadd.f32 %v4823, %v4991
    %4993 = vmatmul.bf16.gmra.mxu0 %v194
    %v4994 = vpop.f32.mrf.mxu0
    %v4995 = vadd.f32 %v4826, %v4994
    %v4996 = vpop.f32.mrf.mxu0
    %v4997 = vadd.f32 %v4828, %v4996
    %4998 = vmatmul.bf16.gmra.mxu0 %v196
    %v4999 = vpop.f32.mrf.mxu0
    %v5000 = vadd.f32 %v4831, %v4999
    %v5001 = vpop.f32.mrf.mxu0
    %v5002 = vadd.f32 %v4833, %v5001
    %5003 = vmatmul.bf16.gmra.mxu0 %v198
    %v5004 = vpop.f32.mrf.mxu0
    %v5005 = vadd.f32 %v4836, %v5004
    %v5006 = vpop.f32.mrf.mxu0
    %v5007 = vadd.f32 %v4838, %v5006
    %5008 = vmatmul.bf16.gmra.mxu0 %v200
    %v5009 = vpop.f32.mrf.mxu0
    %v5010 = vadd.f32 %v4841, %v5009
    %v5011 = vpop.f32.mrf.mxu0
    %v5012 = vadd.f32 %v4843, %v5011
    %5013 = vmatmul.bf16.gmra.mxu0 %v202
    %v5014 = vpop.f32.mrf.mxu0
    %v5015 = vadd.f32 %v4846, %v5014
    %v5016 = vpop.f32.mrf.mxu0
    %v5017 = vadd.f32 %v4848, %v5016
    %5018 = vmatmul.bf16.gmra.mxu0 %v204
    %v5019 = vpop.f32.mrf.mxu0
    %v5020 = vadd.f32 %v4851, %v5019
    %v5021 = vpop.f32.mrf.mxu0
    %v5022 = vadd.f32 %v4853, %v5021
    %5023 = vmatmul.bf16.gmra.mxu0 %v206
    %v5024 = vpop.f32.mrf.mxu0
    %v5025 = vadd.f32 %v4856, %v5024
    %v5026 = vpop.f32.mrf.mxu0
    %v5027 = vadd.f32 %v4858, %v5026
    %5028 = vmatmul.bf16.gmra.mxu0 %v208
    %v5029 = vpop.f32.mrf.mxu0
    %v5030 = vadd.f32 %v4861, %v5029
    %v5031 = vpop.f32.mrf.mxu0
    %v5032 = vadd.f32 %v4863, %v5031
    %5033 = vmatmul.bf16.gmra.mxu0 %v210
    %v5034 = vpop.f32.mrf.mxu0
    %v5035 = vadd.f32 %v4866, %v5034
    %v5036 = vpop.f32.mrf.mxu0
    %v5037 = vadd.f32 %v4868, %v5036
    %5038 = vmatmul.bf16.gmra.mxu0 %v212
    %v5039 = vpop.f32.mrf.mxu0
    %v5040 = vadd.f32 %v4871, %v5039
    %v5041 = vpop.f32.mrf.mxu0
    %v5042 = vadd.f32 %v4873, %v5041
    %5043 = vmatmul.bf16.gmra.mxu0 %v214
    %v5044 = vpop.f32.mrf.mxu0
    %v5045 = vadd.f32 %v4876, %v5044
    %v5046 = vpop.f32.mrf.mxu0
    %v5047 = vadd.f32 %v4878, %v5046
    %5048 = vmatmul.bf16.gmra.mxu0 %v216
    %v5049 = vpop.f32.mrf.mxu0
    %v5050 = vadd.f32 %v4881, %v5049
    %v5051 = vpop.f32.mrf.mxu0
    %v5052 = vadd.f32 %v4883, %v5051
    %5053 = vmatmul.bf16.gmra.mxu0 %v218
    %v5054 = vpop.f32.mrf.mxu0
    %v5055 = vadd.f32 %v4886, %v5054
    %v5056 = vpop.f32.mrf.mxu0
    %v5057 = vadd.f32 %v4888, %v5056
    %5058 = vmatmul.bf16.gmra.mxu0 %v220
    %v5059 = vpop.f32.mrf.mxu0
    %v5060 = vadd.f32 %v4891, %v5059
    %v5061 = vpop.f32.mrf.mxu0
    %v5062 = vadd.f32 %v4893, %v5061
    %5063 = vmatmul.bf16.gmra.mxu0 %v222
    %v5064 = vpop.f32.mrf.mxu0
    %v5065 = vadd.f32 %v4896, %v5064
    %v5066 = vpop.f32.mrf.mxu0
    %v5067 = vadd.f32 %v4898, %v5066
    %5068 = vmatmul.bf16.gmra.mxu0 %v224
    %v5069 = vpop.f32.mrf.mxu0
    %v5070 = vadd.f32 %v4901, %v5069
    %v5071 = vpop.f32.mrf.mxu0
    %v5072 = vadd.f32 %v4903, %v5071
    %5073 = vmatmul.bf16.gmra.mxu0 %v226
    %v5074 = vpop.f32.mrf.mxu0
    %v5075 = vadd.f32 %v4906, %v5074
    %v5076 = vpop.f32.mrf.mxu0
    %v5077 = vadd.f32 %v4908, %v5076
    %5078 = vmatmul.bf16.gmra.mxu0 %v228
    %v5079 = vpop.f32.mrf.mxu0
    %v5080 = vadd.f32 %v4911, %v5079
    %v5081 = vpop.f32.mrf.mxu0
    %v5082 = vadd.f32 %v4913, %v5081
    %5083 = vmatmul.bf16.gmra.mxu0 %v230
    %v5084 = vpop.f32.mrf.mxu0
    %v5085 = vadd.f32 %v4916, %v5084
    %v5086 = vpop.f32.mrf.mxu0
    %v5087 = vadd.f32 %v4918, %v5086
    %5088 = vmatmul.bf16.gmra.mxu0 %v232
    %v5089 = vpop.f32.mrf.mxu0
    %v5090 = vadd.f32 %v4921, %v5089
    %v5091 = vpop.f32.mrf.mxu0
    %v5092 = vadd.f32 %v4923, %v5091
    %5093 = vmatmul.bf16.gmra.mxu0 %v234
    %v5094 = vpop.f32.mrf.mxu0
    %v5095 = vadd.f32 %v4926, %v5094
    %v5096 = vpop.f32.mrf.mxu0
    %v5097 = vadd.f32 %v4928, %v5096
    %5098 = vmatmul.bf16.gmra.mxu0 %v236
    %v5099 = vpop.f32.mrf.mxu0
    %v5100 = vadd.f32 %v4931, %v5099
    %v5101 = vpop.f32.mrf.mxu0
    %v5102 = vadd.f32 %v4933, %v5101
    %5103 = vmatmul.bf16.gmra.mxu0 %v238
    %v5104 = vpop.f32.mrf.mxu0
    %v5105 = vadd.f32 %v4936, %v5104
    %v5106 = vpop.f32.mrf.mxu0
    %v5107 = vadd.f32 %v4938, %v5106
    %5108 = vdwg.mxu0
    %5109 = vmatpush.bf16.msra.mxu0 %v1102
    %5110 = vmatpush.bf16.msra.mxu0 %v1090
    %5111 = vmatpush.bf16.msra.mxu0 %v1078
    %5112 = vmatpush.bf16.msra.mxu0 %v1066
    %5113 = vmatpush.bf16.msra.mxu0 %v1054
    %5114 = vmatpush.bf16.msra.mxu0 %v1042
    %5115 = vmatpush.bf16.msra.mxu0 %v1030
    %5116 = vmatpush.bf16.msra.mxu0 %v1018
    %5117 = vmatmul.bf16.gmra.mxu0 %v175
    %v5118 = vpop.f32.mrf.mxu0
    %v5119 = vadd.f32 0.0, %v5118
    %v5120 = vpop.f32.mrf.mxu0
    %v5121 = vadd.f32 0.0, %v5120
    %5122 = vmatmul.bf16.gmra.mxu0 %v177
    %v5123 = vpop.f32.mrf.mxu0
    %v5124 = vadd.f32 0.0, %v5123
    %v5125 = vpop.f32.mrf.mxu0
    %v5126 = vadd.f32 0.0, %v5125
    %5127 = vmatmul.bf16.gmra.mxu0 %v179
    %v5128 = vpop.f32.mrf.mxu0
    %v5129 = vadd.f32 0.0, %v5128
    %v5130 = vpop.f32.mrf.mxu0
    %v5131 = vadd.f32 0.0, %v5130
    %5132 = vmatmul.bf16.gmra.mxu0 %v181
    %v5133 = vpop.f32.mrf.mxu0
    %v5134 = vadd.f32 0.0, %v5133
    %v5135 = vpop.f32.mrf.mxu0
    %v5136 = vadd.f32 0.0, %v5135
    %5137 = vmatmul.bf16.gmra.mxu0 %v183
    %v5138 = vpop.f32.mrf.mxu0
    %v5139 = vadd.f32 0.0, %v5138
    %v5140 = vpop.f32.mrf.mxu0
    %v5141 = vadd.f32 0.0, %v5140
    %5142 = vmatmul.bf16.gmra.mxu0 %v185
    %v5143 = vpop.f32.mrf.mxu0
    %v5144 = vadd.f32 0.0, %v5143
    %v5145 = vpop.f32.mrf.mxu0
    %v5146 = vadd.f32 0.0, %v5145
    %5147 = vmatmul.bf16.gmra.mxu0 %v187
    %v5148 = vpop.f32.mrf.mxu0
    %v5149 = vadd.f32 0.0, %v5148
    %v5150 = vpop.f32.mrf.mxu0
    %v5151 = vadd.f32 0.0, %v5150
    %5152 = vmatmul.bf16.gmra.mxu0 %v189
    %v5153 = vpop.f32.mrf.mxu0
    %v5154 = vadd.f32 0.0, %v5153
    %v5155 = vpop.f32.mrf.mxu0
    %v5156 = vadd.f32 0.0, %v5155
    %5157 = vmatmul.bf16.gmra.mxu0 %v191
    %v5158 = vpop.f32.mrf.mxu0
    %v5159 = vadd.f32 0.0, %v5158
    %v5160 = vpop.f32.mrf.mxu0
    %v5161 = vadd.f32 0.0, %v5160
    %5162 = vmatmul.bf16.gmra.mxu0 %v193
    %v5163 = vpop.f32.mrf.mxu0
    %v5164 = vadd.f32 0.0, %v5163
    %v5165 = vpop.f32.mrf.mxu0
    %v5166 = vadd.f32 0.0, %v5165
    %5167 = vmatmul.bf16.gmra.mxu0 %v195
    %v5168 = vpop.f32.mrf.mxu0
    %v5169 = vadd.f32 0.0, %v5168
    %v5170 = vpop.f32.mrf.mxu0
    %v5171 = vadd.f32 0.0, %v5170
    %5172 = vmatmul.bf16.gmra.mxu0 %v197
    %v5173 = vpop.f32.mrf.mxu0
    %v5174 = vadd.f32 0.0, %v5173
    %v5175 = vpop.f32.mrf.mxu0
    %v5176 = vadd.f32 0.0, %v5175
    %5177 = vmatmul.bf16.gmra.mxu0 %v199
    %v5178 = vpop.f32.mrf.mxu0
    %v5179 = vadd.f32 0.0, %v5178
    %v5180 = vpop.f32.mrf.mxu0
    %v5181 = vadd.f32 0.0, %v5180
    %5182 = vmatmul.bf16.gmra.mxu0 %v201
    %v5183 = vpop.f32.mrf.mxu0
    %v5184 = vadd.f32 0.0, %v5183
    %v5185 = vpop.f32.mrf.mxu0
    %v5186 = vadd.f32 0.0, %v5185
    %5187 = vmatmul.bf16.gmra.mxu0 %v203
    %v5188 = vpop.f32.mrf.mxu0
    %v5189 = vadd.f32 0.0, %v5188
    %v5190 = vpop.f32.mrf.mxu0
    %v5191 = vadd.f32 0.0, %v5190
    %5192 = vmatmul.bf16.gmra.mxu0 %v205
    %v5193 = vpop.f32.mrf.mxu0
    %v5194 = vadd.f32 0.0, %v5193
    %v5195 = vpop.f32.mrf.mxu0
    %v5196 = vadd.f32 0.0, %v5195
    %5197 = vmatmul.bf16.gmra.mxu0 %v207
    %v5198 = vpop.f32.mrf.mxu0
    %v5199 = vadd.f32 0.0, %v5198
    %v5200 = vpop.f32.mrf.mxu0
    %v5201 = vadd.f32 0.0, %v5200
    %5202 = vmatmul.bf16.gmra.mxu0 %v209
    %v5203 = vpop.f32.mrf.mxu0
    %v5204 = vadd.f32 0.0, %v5203
    %v5205 = vpop.f32.mrf.mxu0
    %v5206 = vadd.f32 0.0, %v5205
    %5207 = vmatmul.bf16.gmra.mxu0 %v211
    %v5208 = vpop.f32.mrf.mxu0
    %v5209 = vadd.f32 0.0, %v5208
    %v5210 = vpop.f32.mrf.mxu0
    %v5211 = vadd.f32 0.0, %v5210
    %5212 = vmatmul.bf16.gmra.mxu0 %v213
    %v5213 = vpop.f32.mrf.mxu0
    %v5214 = vadd.f32 0.0, %v5213
    %v5215 = vpop.f32.mrf.mxu0
    %v5216 = vadd.f32 0.0, %v5215
    %5217 = vmatmul.bf16.gmra.mxu0 %v215
    %v5218 = vpop.f32.mrf.mxu0
    %v5219 = vadd.f32 0.0, %v5218
    %v5220 = vpop.f32.mrf.mxu0
    %v5221 = vadd.f32 0.0, %v5220
    %5222 = vmatmul.bf16.gmra.mxu0 %v217
    %v5223 = vpop.f32.mrf.mxu0
    %v5224 = vadd.f32 0.0, %v5223
    %v5225 = vpop.f32.mrf.mxu0
    %v5226 = vadd.f32 0.0, %v5225
    %5227 = vmatmul.bf16.gmra.mxu0 %v219
    %v5228 = vpop.f32.mrf.mxu0
    %v5229 = vadd.f32 0.0, %v5228
    %v5230 = vpop.f32.mrf.mxu0
    %v5231 = vadd.f32 0.0, %v5230
    %5232 = vmatmul.bf16.gmra.mxu0 %v221
    %v5233 = vpop.f32.mrf.mxu0
    %v5234 = vadd.f32 0.0, %v5233
    %v5235 = vpop.f32.mrf.mxu0
    %v5236 = vadd.f32 0.0, %v5235
    %5237 = vmatmul.bf16.gmra.mxu0 %v223
    %v5238 = vpop.f32.mrf.mxu0
    %v5239 = vadd.f32 0.0, %v5238
    %v5240 = vpop.f32.mrf.mxu0
    %v5241 = vadd.f32 0.0, %v5240
    %5242 = vmatmul.bf16.gmra.mxu0 %v225
    %v5243 = vpop.f32.mrf.mxu0
    %v5244 = vadd.f32 0.0, %v5243
    %v5245 = vpop.f32.mrf.mxu0
    %v5246 = vadd.f32 0.0, %v5245
    %5247 = vmatmul.bf16.gmra.mxu0 %v227
    %v5248 = vpop.f32.mrf.mxu0
    %v5249 = vadd.f32 0.0, %v5248
    %v5250 = vpop.f32.mrf.mxu0
    %v5251 = vadd.f32 0.0, %v5250
    %5252 = vmatmul.bf16.gmra.mxu0 %v229
    %v5253 = vpop.f32.mrf.mxu0
    %v5254 = vadd.f32 0.0, %v5253
    %v5255 = vpop.f32.mrf.mxu0
    %v5256 = vadd.f32 0.0, %v5255
    %5257 = vmatmul.bf16.gmra.mxu0 %v231
    %v5258 = vpop.f32.mrf.mxu0
    %v5259 = vadd.f32 0.0, %v5258
    %v5260 = vpop.f32.mrf.mxu0
    %v5261 = vadd.f32 0.0, %v5260
    %5262 = vmatmul.bf16.gmra.mxu0 %v233
    %v5263 = vpop.f32.mrf.mxu0
    %v5264 = vadd.f32 0.0, %v5263
    %v5265 = vpop.f32.mrf.mxu0
    %v5266 = vadd.f32 0.0, %v5265
    %5267 = vmatmul.bf16.gmra.mxu0 %v235
    %v5268 = vpop.f32.mrf.mxu0
    %v5269 = vadd.f32 0.0, %v5268
    %v5270 = vpop.f32.mrf.mxu0
    %v5271 = vadd.f32 0.0, %v5270
    %5272 = vmatmul.bf16.gmra.mxu0 %v237
    %v5273 = vpop.f32.mrf.mxu0
    %v5274 = vadd.f32 0.0, %v5273
    %v5275 = vpop.f32.mrf.mxu0
    %v5276 = vadd.f32 0.0, %v5275
    %5277 = vdwg.mxu0
    %5278 = vmatpush.bf16.msra.mxu0 %v1198
    %5279 = vmatpush.bf16.msra.mxu0 %v1186
    %5280 = vmatpush.bf16.msra.mxu0 %v1174
    %5281 = vmatpush.bf16.msra.mxu0 %v1162
    %5282 = vmatpush.bf16.msra.mxu0 %v1150
    %5283 = vmatpush.bf16.msra.mxu0 %v1138
    %5284 = vmatpush.bf16.msra.mxu0 %v1126
    %5285 = vmatpush.bf16.msra.mxu0 %v1114
    %5286 = vmatmul.bf16.gmra.mxu0 %v176
    %v5287 = vpop.f32.mrf.mxu0
    %v5288 = vadd.f32 %v5119, %v5287
    %v5289 = vpop.f32.mrf.mxu0
    %v5290 = vadd.f32 %v5121, %v5289
    %5291 = vmatmul.bf16.gmra.mxu0 %v178
    %v5292 = vpop.f32.mrf.mxu0
    %v5293 = vadd.f32 %v5124, %v5292
    %v5294 = vpop.f32.mrf.mxu0
    %v5295 = vadd.f32 %v5126, %v5294
    %5296 = vmatmul.bf16.gmra.mxu0 %v180
    %v5297 = vpop.f32.mrf.mxu0
    %v5298 = vadd.f32 %v5129, %v5297
    %v5299 = vpop.f32.mrf.mxu0
    %v5300 = vadd.f32 %v5131, %v5299
    %5301 = vmatmul.bf16.gmra.mxu0 %v182
    %v5302 = vpop.f32.mrf.mxu0
    %v5303 = vadd.f32 %v5134, %v5302
    %v5304 = vpop.f32.mrf.mxu0
    %v5305 = vadd.f32 %v5136, %v5304
    %5306 = vmatmul.bf16.gmra.mxu0 %v184
    %v5307 = vpop.f32.mrf.mxu0
    %v5308 = vadd.f32 %v5139, %v5307
    %v5309 = vpop.f32.mrf.mxu0
    %v5310 = vadd.f32 %v5141, %v5309
    %5311 = vmatmul.bf16.gmra.mxu0 %v186
    %v5312 = vpop.f32.mrf.mxu0
    %v5313 = vadd.f32 %v5144, %v5312
    %v5314 = vpop.f32.mrf.mxu0
    %v5315 = vadd.f32 %v5146, %v5314
    %5316 = vmatmul.bf16.gmra.mxu0 %v188
    %v5317 = vpop.f32.mrf.mxu0
    %v5318 = vadd.f32 %v5149, %v5317
    %v5319 = vpop.f32.mrf.mxu0
    %v5320 = vadd.f32 %v5151, %v5319
    %5321 = vmatmul.bf16.gmra.mxu0 %v190
    %v5322 = vpop.f32.mrf.mxu0
    %v5323 = vadd.f32 %v5154, %v5322
    %v5324 = vpop.f32.mrf.mxu0
    %v5325 = vadd.f32 %v5156, %v5324
    %5326 = vmatmul.bf16.gmra.mxu0 %v192
    %v5327 = vpop.f32.mrf.mxu0
    %v5328 = vadd.f32 %v5159, %v5327
    %v5329 = vpop.f32.mrf.mxu0
    %v5330 = vadd.f32 %v5161, %v5329
    %5331 = vmatmul.bf16.gmra.mxu0 %v194
    %v5332 = vpop.f32.mrf.mxu0
    %v5333 = vadd.f32 %v5164, %v5332
    %v5334 = vpop.f32.mrf.mxu0
    %v5335 = vadd.f32 %v5166, %v5334
    %5336 = vmatmul.bf16.gmra.mxu0 %v196
    %v5337 = vpop.f32.mrf.mxu0
    %v5338 = vadd.f32 %v5169, %v5337
    %v5339 = vpop.f32.mrf.mxu0
    %v5340 = vadd.f32 %v5171, %v5339
    %5341 = vmatmul.bf16.gmra.mxu0 %v198
    %v5342 = vpop.f32.mrf.mxu0
    %v5343 = vadd.f32 %v5174, %v5342
    %v5344 = vpop.f32.mrf.mxu0
    %v5345 = vadd.f32 %v5176, %v5344
    %5346 = vmatmul.bf16.gmra.mxu0 %v200
    %v5347 = vpop.f32.mrf.mxu0
    %v5348 = vadd.f32 %v5179, %v5347
    %v5349 = vpop.f32.mrf.mxu0
    %v5350 = vadd.f32 %v5181, %v5349
    %5351 = vmatmul.bf16.gmra.mxu0 %v202
    %v5352 = vpop.f32.mrf.mxu0
    %v5353 = vadd.f32 %v5184, %v5352
    %v5354 = vpop.f32.mrf.mxu0
    %v5355 = vadd.f32 %v5186, %v5354
    %5356 = vmatmul.bf16.gmra.mxu0 %v204
    %v5357 = vpop.f32.mrf.mxu0
    %v5358 = vadd.f32 %v5189, %v5357
    %v5359 = vpop.f32.mrf.mxu0
    %v5360 = vadd.f32 %v5191, %v5359
    %5361 = vmatmul.bf16.gmra.mxu0 %v206
    %v5362 = vpop.f32.mrf.mxu0
    %v5363 = vadd.f32 %v5194, %v5362
    %v5364 = vpop.f32.mrf.mxu0
    %v5365 = vadd.f32 %v5196, %v5364
    %5366 = vmatmul.bf16.gmra.mxu0 %v208
    %v5367 = vpop.f32.mrf.mxu0
    %v5368 = vadd.f32 %v5199, %v5367
    %v5369 = vpop.f32.mrf.mxu0
    %v5370 = vadd.f32 %v5201, %v5369
    %5371 = vmatmul.bf16.gmra.mxu0 %v210
    %v5372 = vpop.f32.mrf.mxu0
    %v5373 = vadd.f32 %v5204, %v5372
    %v5374 = vpop.f32.mrf.mxu0
    %v5375 = vadd.f32 %v5206, %v5374
    %5376 = vmatmul.bf16.gmra.mxu0 %v212
    %v5377 = vpop.f32.mrf.mxu0
    %v5378 = vadd.f32 %v5209, %v5377
    %v5379 = vpop.f32.mrf.mxu0
    %v5380 = vadd.f32 %v5211, %v5379
    %5381 = vmatmul.bf16.gmra.mxu0 %v214
    %v5382 = vpop.f32.mrf.mxu0
    %v5383 = vadd.f32 %v5214, %v5382
    %v5384 = vpop.f32.mrf.mxu0
    %v5385 = vadd.f32 %v5216, %v5384
    %5386 = vmatmul.bf16.gmra.mxu0 %v216
    %v5387 = vpop.f32.mrf.mxu0
    %v5388 = vadd.f32 %v5219, %v5387
    %v5389 = vpop.f32.mrf.mxu0
    %v5390 = vadd.f32 %v5221, %v5389
    %5391 = vmatmul.bf16.gmra.mxu0 %v218
    %v5392 = vpop.f32.mrf.mxu0
    %v5393 = vadd.f32 %v5224, %v5392
    %v5394 = vpop.f32.mrf.mxu0
    %v5395 = vadd.f32 %v5226, %v5394
    %5396 = vmatmul.bf16.gmra.mxu0 %v220
    %v5397 = vpop.f32.mrf.mxu0
    %v5398 = vadd.f32 %v5229, %v5397
    %v5399 = vpop.f32.mrf.mxu0
    %v5400 = vadd.f32 %v5231, %v5399
    %5401 = vmatmul.bf16.gmra.mxu0 %v222
    %v5402 = vpop.f32.mrf.mxu0
    %v5403 = vadd.f32 %v5234, %v5402
    %v5404 = vpop.f32.mrf.mxu0
    %v5405 = vadd.f32 %v5236, %v5404
    %5406 = vmatmul.bf16.gmra.mxu0 %v224
    %v5407 = vpop.f32.mrf.mxu0
    %v5408 = vadd.f32 %v5239, %v5407
    %v5409 = vpop.f32.mrf.mxu0
    %v5410 = vadd.f32 %v5241, %v5409
    %5411 = vmatmul.bf16.gmra.mxu0 %v226
    %v5412 = vpop.f32.mrf.mxu0
    %v5413 = vadd.f32 %v5244, %v5412
    %v5414 = vpop.f32.mrf.mxu0
    %v5415 = vadd.f32 %v5246, %v5414
    %5416 = vmatmul.bf16.gmra.mxu0 %v228
    %v5417 = vpop.f32.mrf.mxu0
    %v5418 = vadd.f32 %v5249, %v5417
    %v5419 = vpop.f32.mrf.mxu0
    %v5420 = vadd.f32 %v5251, %v5419
    %5421 = vmatmul.bf16.gmra.mxu0 %v230
    %v5422 = vpop.f32.mrf.mxu0
    %v5423 = vadd.f32 %v5254, %v5422
    %v5424 = vpop.f32.mrf.mxu0
    %v5425 = vadd.f32 %v5256, %v5424
    %5426 = vmatmul.bf16.gmra.mxu0 %v232
    %v5427 = vpop.f32.mrf.mxu0
    %v5428 = vadd.f32 %v5259, %v5427
    %v5429 = vpop.f32.mrf.mxu0
    %v5430 = vadd.f32 %v5261, %v5429
    %5431 = vmatmul.bf16.gmra.mxu0 %v234
    %v5432 = vpop.f32.mrf.mxu0
    %v5433 = vadd.f32 %v5264, %v5432
    %v5434 = vpop.f32.mrf.mxu0
    %v5435 = vadd.f32 %v5266, %v5434
    %5436 = vmatmul.bf16.gmra.mxu0 %v236
    %v5437 = vpop.f32.mrf.mxu0
    %v5438 = vadd.f32 %v5269, %v5437
    %v5439 = vpop.f32.mrf.mxu0
    %v5440 = vadd.f32 %v5271, %v5439
    %5441 = vmatmul.bf16.gmra.mxu0 %v238
    %v5442 = vpop.f32.mrf.mxu0
    %v5443 = vadd.f32 %v5274, %v5442
    %v5444 = vpop.f32.mrf.mxu0
    %v5445 = vadd.f32 %v5276, %v5444
    %5446 = vdwg.mxu0
    %v5447 = vpack.c.bf16 %v1908, %v1570
    %v5448 = vpack.c.bf16 %v2584, %v2246
    %v5449 = vpack.c.bf16 %v1910, %v1572
    %v5450 = vpack.c.bf16 %v2586, %v2248
    %v5451 = vpack.c.bf16 %v1913, %v1575
    %v5452 = vpack.c.bf16 %v2589, %v2251
    %v5453 = vpack.c.bf16 %v1915, %v1577
    %v5454 = vpack.c.bf16 %v2591, %v2253
    %v5455 = vpack.c.bf16 %v1918, %v1580
    %v5456 = vpack.c.bf16 %v2594, %v2256
    %v5457 = vpack.c.bf16 %v1920, %v1582
    %v5458 = vpack.c.bf16 %v2596, %v2258
    %v5459 = vpack.c.bf16 %v1923, %v1585
    %v5460 = vpack.c.bf16 %v2599, %v2261
    %v5461 = vpack.c.bf16 %v1925, %v1587
    %v5462 = vpack.c.bf16 %v2601, %v2263
    %v5463 = vpack.c.bf16 %v1928, %v1590
    %v5464 = vpack.c.bf16 %v2604, %v2266
    %v5465 = vpack.c.bf16 %v1930, %v1592
    %v5466 = vpack.c.bf16 %v2606, %v2268
    %v5467 = vpack.c.bf16 %v1933, %v1595
    %v5468 = vpack.c.bf16 %v2609, %v2271
    %v5469 = vpack.c.bf16 %v1935, %v1597
    %v5470 = vpack.c.bf16 %v2611, %v2273
    %v5471 = vpack.c.bf16 %v1938, %v1600
    %v5472 = vpack.c.bf16 %v2614, %v2276
    %v5473 = vpack.c.bf16 %v1940, %v1602
    %v5474 = vpack.c.bf16 %v2616, %v2278
    %v5475 = vpack.c.bf16 %v1943, %v1605
    %v5476 = vpack.c.bf16 %v2619, %v2281
    %v5477 = vpack.c.bf16 %v1945, %v1607
    %v5478 = vpack.c.bf16 %v2621, %v2283
    %v5479 = vpack.c.bf16 %v1948, %v1610
    %v5480 = vpack.c.bf16 %v2624, %v2286
    %v5481 = vpack.c.bf16 %v1950, %v1612
    %v5482 = vpack.c.bf16 %v2626, %v2288
    %v5483 = vpack.c.bf16 %v1953, %v1615
    %v5484 = vpack.c.bf16 %v2629, %v2291
    %v5485 = vpack.c.bf16 %v1955, %v1617
    %v5486 = vpack.c.bf16 %v2631, %v2293
    %v5487 = vpack.c.bf16 %v1958, %v1620
    %v5488 = vpack.c.bf16 %v2634, %v2296
    %v5489 = vpack.c.bf16 %v1960, %v1622
    %v5490 = vpack.c.bf16 %v2636, %v2298
    %v5491 = vpack.c.bf16 %v1963, %v1625
    %v5492 = vpack.c.bf16 %v2639, %v2301
    %v5493 = vpack.c.bf16 %v1965, %v1627
    %v5494 = vpack.c.bf16 %v2641, %v2303
    %v5495 = vpack.c.bf16 %v1968, %v1630
    %v5496 = vpack.c.bf16 %v2644, %v2306
    %v5497 = vpack.c.bf16 %v1970, %v1632
    %v5498 = vpack.c.bf16 %v2646, %v2308
    %v5499 = vpack.c.bf16 %v1973, %v1635
    %v5500 = vpack.c.bf16 %v2649, %v2311
    %v5501 = vpack.c.bf16 %v1975, %v1637
    %v5502 = vpack.c.bf16 %v2651, %v2313
    %v5503 = vpack.c.bf16 %v1978, %v1640
    %v5504 = vpack.c.bf16 %v2654, %v2316
    %v5505 = vpack.c.bf16 %v1980, %v1642
    %v5506 = vpack.c.bf16 %v2656, %v2318
    %v5507 = vpack.c.bf16 %v1983, %v1645
    %v5508 = vpack.c.bf16 %v2659, %v2321
    %v5509 = vpack.c.bf16 %v1985, %v1647
    %v5510 = vpack.c.bf16 %v2661, %v2323
    %v5511 = vpack.c.bf16 %v1988, %v1650
    %v5512 = vpack.c.bf16 %v2664, %v2326
    %v5513 = vpack.c.bf16 %v1990, %v1652
    %v5514 = vpack.c.bf16 %v2666, %v2328
    %v5515 = vpack.c.bf16 %v1993, %v1655
    %v5516 = vpack.c.bf16 %v2669, %v2331
    %v5517 = vpack.c.bf16 %v1995, %v1657
    %v5518 = vpack.c.bf16 %v2671, %v2333
    %v5519 = vpack.c.bf16 %v1998, %v1660
    %v5520 = vpack.c.bf16 %v2674, %v2336
    %v5521 = vpack.c.bf16 %v2000, %v1662
    %v5522 = vpack.c.bf16 %v2676, %v2338
    %v5523 = vpack.c.bf16 %v2003, %v1665
    %v5524 = vpack.c.bf16 %v2679, %v2341
    %v5525 = vpack.c.bf16 %v2005, %v1667
    %v5526 = vpack.c.bf16 %v2681, %v2343
    %v5527 = vpack.c.bf16 %v2008, %v1670
    %v5528 = vpack.c.bf16 %v2684, %v2346
    %v5529 = vpack.c.bf16 %v2010, %v1672
    %v5530 = vpack.c.bf16 %v2686, %v2348
    %v5531 = vpack.c.bf16 %v2013, %v1675
    %v5532 = vpack.c.bf16 %v2689, %v2351
    %v5533 = vpack.c.bf16 %v2015, %v1677
    %v5534 = vpack.c.bf16 %v2691, %v2353
    %v5535 = vpack.c.bf16 %v2018, %v1680
    %v5536 = vpack.c.bf16 %v2694, %v2356
    %v5537 = vpack.c.bf16 %v2020, %v1682
    %v5538 = vpack.c.bf16 %v2696, %v2358
    %v5539 = vpack.c.bf16 %v2023, %v1685
    %v5540 = vpack.c.bf16 %v2699, %v2361
    %v5541 = vpack.c.bf16 %v2025, %v1687
    %v5542 = vpack.c.bf16 %v2701, %v2363
    %v5543 = vpack.c.bf16 %v2028, %v1690
    %v5544 = vpack.c.bf16 %v2704, %v2366
    %v5545 = vpack.c.bf16 %v2030, %v1692
    %v5546 = vpack.c.bf16 %v2706, %v2368
    %v5547 = vpack.c.bf16 %v2033, %v1695
    %v5548 = vpack.c.bf16 %v2709, %v2371
    %v5549 = vpack.c.bf16 %v2035, %v1697
    %v5550 = vpack.c.bf16 %v2711, %v2373
    %v5551 = vpack.c.bf16 %v2038, %v1700
    %v5552 = vpack.c.bf16 %v2714, %v2376
    %v5553 = vpack.c.bf16 %v2040, %v1702
    %v5554 = vpack.c.bf16 %v2716, %v2378
    %v5555 = vpack.c.bf16 %v2043, %v1705
    %v5556 = vpack.c.bf16 %v2719, %v2381
    %v5557 = vpack.c.bf16 %v2045, %v1707
    %v5558 = vpack.c.bf16 %v2721, %v2383
    %v5559 = vpack.c.bf16 %v2048, %v1710
    %v5560 = vpack.c.bf16 %v2724, %v2386
    %v5561 = vpack.c.bf16 %v2050, %v1712
    %v5562 = vpack.c.bf16 %v2726, %v2388
    %v5563 = vpack.c.bf16 %v2053, %v1715
    %v5564 = vpack.c.bf16 %v2729, %v2391
    %v5565 = vpack.c.bf16 %v2055, %v1717
    %v5566 = vpack.c.bf16 %v2731, %v2393
    %v5567 = vpack.c.bf16 %v2058, %v1720
    %v5568 = vpack.c.bf16 %v2734, %v2396
    %v5569 = vpack.c.bf16 %v2060, %v1722
    %v5570 = vpack.c.bf16 %v2736, %v2398
    %v5571 = vpack.c.bf16 %v2063, %v1725
    %v5572 = vpack.c.bf16 %v2739, %v2401
    %v5573 = vpack.c.bf16 %v2065, %v1727
    %v5574 = vpack.c.bf16 %v2741, %v2403
    %5575 = vst [vmem:[#allocation7] sm:$0xff] %v5447
    %5576 = vst [vmem:[#allocation7 + $0x8] sm:$0xff] %v5448
    %5577 = vst [vmem:[#allocation7 + $0x10] sm:$0xff] %v5449
    %5578 = vst [vmem:[#allocation7 + $0x18] sm:$0xff] %v5450
    %5579 = vst [vmem:[#allocation7 + $0x20] sm:$0xff] %v5451
    %5580 = vst [vmem:[#allocation7 + $0x28] sm:$0xff] %v5452
    %5581 = vst [vmem:[#allocation7 + $0x30] sm:$0xff] %v5453
    %5582 = vst [vmem:[#allocation7 + $0x38] sm:$0xff] %v5454
    %5583 = vst [vmem:[#allocation7 + $0x40] sm:$0xff] %v5455
    %5584 = vst [vmem:[#allocation7 + $0x48] sm:$0xff] %v5456
    %5585 = vst [vmem:[#allocation7 + $0x50] sm:$0xff] %v5457
    %5586 = vst [vmem:[#allocation7 + $0x58] sm:$0xff] %v5458
    %5587 = vst [vmem:[#allocation7 + $0x60] sm:$0xff] %v5459
    %5588 = vst [vmem:[#allocation7 + $0x68] sm:$0xff] %v5460
    %5589 = vst [vmem:[#allocation7 + $0x70] sm:$0xff] %v5461
    %5590 = vst [vmem:[#allocation7 + $0x78] sm:$0xff] %v5462
    %5591 = vst [vmem:[#allocation7 + $0x80] sm:$0xff] %v5463
    %5592 = vst [vmem:[#allocation7 + $0x88] sm:$0xff] %v5464
    %5593 = vst [vmem:[#allocation7 + $0x90] sm:$0xff] %v5465
    %5594 = vst [vmem:[#allocation7 + $0x98] sm:$0xff] %v5466
    %5595 = vst [vmem:[#allocation7 + $0xa0] sm:$0xff] %v5467
    %5596 = vst [vmem:[#allocation7 + $0xa8] sm:$0xff] %v5468
    %5597 = vst [vmem:[#allocation7 + $0xb0] sm:$0xff] %v5469
    %5598 = vst [vmem:[#allocation7 + $0xb8] sm:$0xff] %v5470
    %5599 = vst [vmem:[#allocation7 + $0xc0] sm:$0xff] %v5471
    %5600 = vst [vmem:[#allocation7 + $0xc8] sm:$0xff] %v5472
    %5601 = vst [vmem:[#allocation7 + $0xd0] sm:$0xff] %v5473
    %5602 = vst [vmem:[#allocation7 + $0xd8] sm:$0xff] %v5474
    %5603 = vst [vmem:[#allocation7 + $0xe0] sm:$0xff] %v5475
    %5604 = vst [vmem:[#allocation7 + $0xe8] sm:$0xff] %v5476
    %5605 = vst [vmem:[#allocation7 + $0xf0] sm:$0xff] %v5477
    %5606 = vst [vmem:[#allocation7 + $0xf8] sm:$0xff] %v5478
    %5607 = vst [vmem:[#allocation7 + $0x100] sm:$0xff] %v5479
    %5608 = vst [vmem:[#allocation7 + $0x108] sm:$0xff] %v5480
    %5609 = vst [vmem:[#allocation7 + $0x110] sm:$0xff] %v5481
    %5610 = vst [vmem:[#allocation7 + $0x118] sm:$0xff] %v5482
    %5611 = vst [vmem:[#allocation7 + $0x120] sm:$0xff] %v5483
    %5612 = vst [vmem:[#allocation7 + $0x128] sm:$0xff] %v5484
    %5613 = vst [vmem:[#allocation7 + $0x130] sm:$0xff] %v5485
    %5614 = vst [vmem:[#allocation7 + $0x138] sm:$0xff] %v5486
    %5615 = vst [vmem:[#allocation7 + $0x140] sm:$0xff] %v5487
    %5616 = vst [vmem:[#allocation7 + $0x148] sm:$0xff] %v5488
    %5617 = vst [vmem:[#allocation7 + $0x150] sm:$0xff] %v5489
    %5618 = vst [vmem:[#allocation7 + $0x158] sm:$0xff] %v5490
    %5619 = vst [vmem:[#allocation7 + $0x160] sm:$0xff] %v5491
    %5620 = vst [vmem:[#allocation7 + $0x168] sm:$0xff] %v5492
    %5621 = vst [vmem:[#allocation7 + $0x170] sm:$0xff] %v5493
    %5622 = vst [vmem:[#allocation7 + $0x178] sm:$0xff] %v5494
    %5623 = vst [vmem:[#allocation7 + $0x180] sm:$0xff] %v5495
    %5624 = vst [vmem:[#allocation7 + $0x188] sm:$0xff] %v5496
    %5625 = vst [vmem:[#allocation7 + $0x190] sm:$0xff] %v5497
    %5626 = vst [vmem:[#allocation7 + $0x198] sm:$0xff] %v5498
    %5627 = vst [vmem:[#allocation7 + $0x1a0] sm:$0xff] %v5499
    %5628 = vst [vmem:[#allocation7 + $0x1a8] sm:$0xff] %v5500
    %5629 = vst [vmem:[#allocation7 + $0x1b0] sm:$0xff] %v5501
    %5630 = vst [vmem:[#allocation7 + $0x1b8] sm:$0xff] %v5502
    %5631 = vst [vmem:[#allocation7 + $0x1c0] sm:$0xff] %v5503
    %5632 = vst [vmem:[#allocation7 + $0x1c8] sm:$0xff] %v5504
    %5633 = vst [vmem:[#allocation7 + $0x1d0] sm:$0xff] %v5505
    %5634 = vst [vmem:[#allocation7 + $0x1d8] sm:$0xff] %v5506
    %5635 = vst [vmem:[#allocation7 + $0x1e0] sm:$0xff] %v5507
    %5636 = vst [vmem:[#allocation7 + $0x1e8] sm:$0xff] %v5508
    %5637 = vst [vmem:[#allocation7 + $0x1f0] sm:$0xff] %v5509
    %5638 = vst [vmem:[#allocation7 + $0x1f8] sm:$0xff] %v5510
    %5639 = vst [vmem:[#allocation7 + $0x200] sm:$0xff] %v5511
    %5640 = vst [vmem:[#allocation7 + $0x208] sm:$0xff] %v5512
    %5641 = vst [vmem:[#allocation7 + $0x210] sm:$0xff] %v5513
    %5642 = vst [vmem:[#allocation7 + $0x218] sm:$0xff] %v5514
    %5643 = vst [vmem:[#allocation7 + $0x220] sm:$0xff] %v5515
    %5644 = vst [vmem:[#allocation7 + $0x228] sm:$0xff] %v5516
    %5645 = vst [vmem:[#allocation7 + $0x230] sm:$0xff] %v5517
    %5646 = vst [vmem:[#allocation7 + $0x238] sm:$0xff] %v5518
    %5647 = vst [vmem:[#allocation7 + $0x240] sm:$0xff] %v5519
    %5648 = vst [vmem:[#allocation7 + $0x248] sm:$0xff] %v5520
    %5649 = vst [vmem:[#allocation7 + $0x250] sm:$0xff] %v5521
    %5650 = vst [vmem:[#allocation7 + $0x258] sm:$0xff] %v5522
    %5651 = vst [vmem:[#allocation7 + $0x260] sm:$0xff] %v5523
    %5652 = vst [vmem:[#allocation7 + $0x268] sm:$0xff] %v5524
    %5653 = vst [vmem:[#allocation7 + $0x270] sm:$0xff] %v5525
    %5654 = vst [vmem:[#allocation7 + $0x278] sm:$0xff] %v5526
    %5655 = vst [vmem:[#allocation7 + $0x280] sm:$0xff] %v5527
    %5656 = vst [vmem:[#allocation7 + $0x288] sm:$0xff] %v5528
    %5657 = vst [vmem:[#allocation7 + $0x290] sm:$0xff] %v5529
    %5658 = vst [vmem:[#allocation7 + $0x298] sm:$0xff] %v5530
    %5659 = vst [vmem:[#allocation7 + $0x2a0] sm:$0xff] %v5531
    %5660 = vst [vmem:[#allocation7 + $0x2a8] sm:$0xff] %v5532
    %5661 = vst [vmem:[#allocation7 + $0x2b0] sm:$0xff] %v5533
    %5662 = vst [vmem:[#allocation7 + $0x2b8] sm:$0xff] %v5534
    %5663 = vst [vmem:[#allocation7 + $0x2c0] sm:$0xff] %v5535
    %5664 = vst [vmem:[#allocation7 + $0x2c8] sm:$0xff] %v5536
    %5665 = vst [vmem:[#allocation7 + $0x2d0] sm:$0xff] %v5537
    %5666 = vst [vmem:[#allocation7 + $0x2d8] sm:$0xff] %v5538
    %5667 = vst [vmem:[#allocation7 + $0x2e0] sm:$0xff] %v5539
    %5668 = vst [vmem:[#allocation7 + $0x2e8] sm:$0xff] %v5540
    %5669 = vst [vmem:[#allocation7 + $0x2f0] sm:$0xff] %v5541
    %5670 = vst [vmem:[#allocation7 + $0x2f8] sm:$0xff] %v5542
    %5671 = vst [vmem:[#allocation7 + $0x300] sm:$0xff] %v5543
    %5672 = vst [vmem:[#allocation7 + $0x308] sm:$0xff] %v5544
    %5673 = vst [vmem:[#allocation7 + $0x310] sm:$0xff] %v5545
    %5674 = vst [vmem:[#allocation7 + $0x318] sm:$0xff] %v5546
    %5675 = vst [vmem:[#allocation7 + $0x320] sm:$0xff] %v5547
    %5676 = vst [vmem:[#allocation7 + $0x328] sm:$0xff] %v5548
    %5677 = vst [vmem:[#allocation7 + $0x330] sm:$0xff] %v5549
    %5678 = vst [vmem:[#allocation7 + $0x338] sm:$0xff] %v5550
    %5679 = vst [vmem:[#allocation7 + $0x340] sm:$0xff] %v5551
    %5680 = vst [vmem:[#allocation7 + $0x348] sm:$0xff] %v5552
    %5681 = vst [vmem:[#allocation7 + $0x350] sm:$0xff] %v5553
    %5682 = vst [vmem:[#allocation7 + $0x358] sm:$0xff] %v5554
    %5683 = vst [vmem:[#allocation7 + $0x360] sm:$0xff] %v5555
    %5684 = vst [vmem:[#allocation7 + $0x368] sm:$0xff] %v5556
    %5685 = vst [vmem:[#allocation7 + $0x370] sm:$0xff] %v5557
    %5686 = vst [vmem:[#allocation7 + $0x378] sm:$0xff] %v5558
    %5687 = vst [vmem:[#allocation7 + $0x380] sm:$0xff] %v5559
    %5688 = vst [vmem:[#allocation7 + $0x388] sm:$0xff] %v5560
    %5689 = vst [vmem:[#allocation7 + $0x390] sm:$0xff] %v5561
    %5690 = vst [vmem:[#allocation7 + $0x398] sm:$0xff] %v5562
    %5691 = vst [vmem:[#allocation7 + $0x3a0] sm:$0xff] %v5563
    %5692 = vst [vmem:[#allocation7 + $0x3a8] sm:$0xff] %v5564
    %5693 = vst [vmem:[#allocation7 + $0x3b0] sm:$0xff] %v5565
    %5694 = vst [vmem:[#allocation7 + $0x3b8] sm:$0xff] %v5566
    %5695 = vst [vmem:[#allocation7 + $0x3c0] sm:$0xff] %v5567
    %5696 = vst [vmem:[#allocation7 + $0x3c8] sm:$0xff] %v5568
    %5697 = vst [vmem:[#allocation7 + $0x3d0] sm:$0xff] %v5569
    %5698 = vst [vmem:[#allocation7 + $0x3d8] sm:$0xff] %v5570
    %5699 = vst [vmem:[#allocation7 + $0x3e0] sm:$0xff] %v5571
    %5700 = vst [vmem:[#allocation7 + $0x3e8] sm:$0xff] %v5572
    %5701 = vst [vmem:[#allocation7 + $0x3f0] sm:$0xff] %v5573
    %5702 = vst [vmem:[#allocation7 + $0x3f8] sm:$0xff] %v5574
    %v5703 = vpack.c.bf16 %v3260, %v2922
    %v5704 = vpack.c.bf16 %v3936, %v3598
    %v5705 = vpack.c.bf16 %v4612, %v4274
    %v5706 = vpack.c.bf16 %v5288, %v4950
    %v5707 = vpack.c.bf16 %v3262, %v2924
    %v5708 = vpack.c.bf16 %v3938, %v3600
    %v5709 = vpack.c.bf16 %v4614, %v4276
    %v5710 = vpack.c.bf16 %v5290, %v4952
    %v5711 = vpack.c.bf16 %v3265, %v2927
    %v5712 = vpack.c.bf16 %v3941, %v3603
    %v5713 = vpack.c.bf16 %v4617, %v4279
    %v5714 = vpack.c.bf16 %v5293, %v4955
    %v5715 = vpack.c.bf16 %v3267, %v2929
    %v5716 = vpack.c.bf16 %v3943, %v3605
    %v5717 = vpack.c.bf16 %v4619, %v4281
    %v5718 = vpack.c.bf16 %v5295, %v4957
    %v5719 = vpack.c.bf16 %v3270, %v2932
    %v5720 = vpack.c.bf16 %v3946, %v3608
    %v5721 = vpack.c.bf16 %v4622, %v4284
    %v5722 = vpack.c.bf16 %v5298, %v4960
    %v5723 = vpack.c.bf16 %v3272, %v2934
    %v5724 = vpack.c.bf16 %v3948, %v3610
    %v5725 = vpack.c.bf16 %v4624, %v4286
    %v5726 = vpack.c.bf16 %v5300, %v4962
    %v5727 = vpack.c.bf16 %v3275, %v2937
    %v5728 = vpack.c.bf16 %v3951, %v3613
    %v5729 = vpack.c.bf16 %v4627, %v4289
    %v5730 = vpack.c.bf16 %v5303, %v4965
    %v5731 = vpack.c.bf16 %v3277, %v2939
    %v5732 = vpack.c.bf16 %v3953, %v3615
    %v5733 = vpack.c.bf16 %v4629, %v4291
    %v5734 = vpack.c.bf16 %v5305, %v4967
    %v5735 = vpack.c.bf16 %v3280, %v2942
    %v5736 = vpack.c.bf16 %v3956, %v3618
    %v5737 = vpack.c.bf16 %v4632, %v4294
    %v5738 = vpack.c.bf16 %v5308, %v4970
    %v5739 = vpack.c.bf16 %v3282, %v2944
    %v5740 = vpack.c.bf16 %v3958, %v3620
    %v5741 = vpack.c.bf16 %v4634, %v4296
    %v5742 = vpack.c.bf16 %v5310, %v4972
    %v5743 = vpack.c.bf16 %v3285, %v2947
    %v5744 = vpack.c.bf16 %v3961, %v3623
    %v5745 = vpack.c.bf16 %v4637, %v4299
    %v5746 = vpack.c.bf16 %v5313, %v4975
    %v5747 = vpack.c.bf16 %v3287, %v2949
    %v5748 = vpack.c.bf16 %v3963, %v3625
    %v5749 = vpack.c.bf16 %v4639, %v4301
    %v5750 = vpack.c.bf16 %v5315, %v4977
    %v5751 = vpack.c.bf16 %v3290, %v2952
    %v5752 = vpack.c.bf16 %v3966, %v3628
    %v5753 = vpack.c.bf16 %v4642, %v4304
    %v5754 = vpack.c.bf16 %v5318, %v4980
    %v5755 = vpack.c.bf16 %v3292, %v2954
    %v5756 = vpack.c.bf16 %v3968, %v3630
    %v5757 = vpack.c.bf16 %v4644, %v4306
    %v5758 = vpack.c.bf16 %v5320, %v4982
    %v5759 = vpack.c.bf16 %v3295, %v2957
    %v5760 = vpack.c.bf16 %v3971, %v3633
    %v5761 = vpack.c.bf16 %v4647, %v4309
    %v5762 = vpack.c.bf16 %v5323, %v4985
    %v5763 = vpack.c.bf16 %v3297, %v2959
    %v5764 = vpack.c.bf16 %v3973, %v3635
    %v5765 = vpack.c.bf16 %v4649, %v4311
    %v5766 = vpack.c.bf16 %v5325, %v4987
    %v5767 = vpack.c.bf16 %v3300, %v2962
    %v5768 = vpack.c.bf16 %v3976, %v3638
    %v5769 = vpack.c.bf16 %v4652, %v4314
    %v5770 = vpack.c.bf16 %v5328, %v4990
    %v5771 = vpack.c.bf16 %v3302, %v2964
    %v5772 = vpack.c.bf16 %v3978, %v3640
    %v5773 = vpack.c.bf16 %v4654, %v4316
    %v5774 = vpack.c.bf16 %v5330, %v4992
    %v5775 = vpack.c.bf16 %v3305, %v2967
    %v5776 = vpack.c.bf16 %v3981, %v3643
    %v5777 = vpack.c.bf16 %v4657, %v4319
    %v5778 = vpack.c.bf16 %v5333, %v4995
    %v5779 = vpack.c.bf16 %v3307, %v2969
    %v5780 = vpack.c.bf16 %v3983, %v3645
    %v5781 = vpack.c.bf16 %v4659, %v4321
    %v5782 = vpack.c.bf16 %v5335, %v4997
    %v5783 = vpack.c.bf16 %v3310, %v2972
    %v5784 = vpack.c.bf16 %v3986, %v3648
    %v5785 = vpack.c.bf16 %v4662, %v4324
    %v5786 = vpack.c.bf16 %v5338, %v5000
    %v5787 = vpack.c.bf16 %v3312, %v2974
    %v5788 = vpack.c.bf16 %v3988, %v3650
    %v5789 = vpack.c.bf16 %v4664, %v4326
    %v5790 = vpack.c.bf16 %v5340, %v5002
    %v5791 = vpack.c.bf16 %v3315, %v2977
    %v5792 = vpack.c.bf16 %v3991, %v3653
    %v5793 = vpack.c.bf16 %v4667, %v4329
    %v5794 = vpack.c.bf16 %v5343, %v5005
    %v5795 = vpack.c.bf16 %v3317, %v2979
    %v5796 = vpack.c.bf16 %v3993, %v3655
    %v5797 = vpack.c.bf16 %v4669, %v4331
    %v5798 = vpack.c.bf16 %v5345, %v5007
    %v5799 = vpack.c.bf16 %v3320, %v2982
    %v5800 = vpack.c.bf16 %v3996, %v3658
    %v5801 = vpack.c.bf16 %v4672, %v4334
    %v5802 = vpack.c.bf16 %v5348, %v5010
    %v5803 = vpack.c.bf16 %v3322, %v2984
    %v5804 = vpack.c.bf16 %v3998, %v3660
    %v5805 = vpack.c.bf16 %v4674, %v4336
    %v5806 = vpack.c.bf16 %v5350, %v5012
    %v5807 = vpack.c.bf16 %v3325, %v2987
    %v5808 = vpack.c.bf16 %v4001, %v3663
    %v5809 = vpack.c.bf16 %v4677, %v4339
    %v5810 = vpack.c.bf16 %v5353, %v5015
    %v5811 = vpack.c.bf16 %v3327, %v2989
    %v5812 = vpack.c.bf16 %v4003, %v3665
    %v5813 = vpack.c.bf16 %v4679, %v4341
    %v5814 = vpack.c.bf16 %v5355, %v5017
    %v5815 = vpack.c.bf16 %v3330, %v2992
    %v5816 = vpack.c.bf16 %v4006, %v3668
    %v5817 = vpack.c.bf16 %v4682, %v4344
    %v5818 = vpack.c.bf16 %v5358, %v5020
    %v5819 = vpack.c.bf16 %v3332, %v2994
    %v5820 = vpack.c.bf16 %v4008, %v3670
    %v5821 = vpack.c.bf16 %v4684, %v4346
    %v5822 = vpack.c.bf16 %v5360, %v5022
    %v5823 = vpack.c.bf16 %v3335, %v2997
    %v5824 = vpack.c.bf16 %v4011, %v3673
    %v5825 = vpack.c.bf16 %v4687, %v4349
    %v5826 = vpack.c.bf16 %v5363, %v5025
    %v5827 = vpack.c.bf16 %v3337, %v2999
    %v5828 = vpack.c.bf16 %v4013, %v3675
    %v5829 = vpack.c.bf16 %v4689, %v4351
    %v5830 = vpack.c.bf16 %v5365, %v5027
    %v5831 = vpack.c.bf16 %v3340, %v3002
    %v5832 = vpack.c.bf16 %v4016, %v3678
    %v5833 = vpack.c.bf16 %v4692, %v4354
    %v5834 = vpack.c.bf16 %v5368, %v5030
    %v5835 = vpack.c.bf16 %v3342, %v3004
    %v5836 = vpack.c.bf16 %v4018, %v3680
    %v5837 = vpack.c.bf16 %v4694, %v4356
    %v5838 = vpack.c.bf16 %v5370, %v5032
    %v5839 = vpack.c.bf16 %v3345, %v3007
    %v5840 = vpack.c.bf16 %v4021, %v3683
    %v5841 = vpack.c.bf16 %v4697, %v4359
    %v5842 = vpack.c.bf16 %v5373, %v5035
    %v5843 = vpack.c.bf16 %v3347, %v3009
    %v5844 = vpack.c.bf16 %v4023, %v3685
    %v5845 = vpack.c.bf16 %v4699, %v4361
    %v5846 = vpack.c.bf16 %v5375, %v5037
    %v5847 = vpack.c.bf16 %v3350, %v3012
    %v5848 = vpack.c.bf16 %v4026, %v3688
    %v5849 = vpack.c.bf16 %v4702, %v4364
    %v5850 = vpack.c.bf16 %v5378, %v5040
    %v5851 = vpack.c.bf16 %v3352, %v3014
    %v5852 = vpack.c.bf16 %v4028, %v3690
    %v5853 = vpack.c.bf16 %v4704, %v4366
    %v5854 = vpack.c.bf16 %v5380, %v5042
    %v5855 = vpack.c.bf16 %v3355, %v3017
    %v5856 = vpack.c.bf16 %v4031, %v3693
    %v5857 = vpack.c.bf16 %v4707, %v4369
    %v5858 = vpack.c.bf16 %v5383, %v5045
    %v5859 = vpack.c.bf16 %v3357, %v3019
    %v5860 = vpack.c.bf16 %v4033, %v3695
    %v5861 = vpack.c.bf16 %v4709, %v4371
    %v5862 = vpack.c.bf16 %v5385, %v5047
    %v5863 = vpack.c.bf16 %v3360, %v3022
    %v5864 = vpack.c.bf16 %v4036, %v3698
    %v5865 = vpack.c.bf16 %v4712, %v4374
    %v5866 = vpack.c.bf16 %v5388, %v5050
    %v5867 = vpack.c.bf16 %v3362, %v3024
    %v5868 = vpack.c.bf16 %v4038, %v3700
    %v5869 = vpack.c.bf16 %v4714, %v4376
    %v5870 = vpack.c.bf16 %v5390, %v5052
    %v5871 = vpack.c.bf16 %v3365, %v3027
    %v5872 = vpack.c.bf16 %v4041, %v3703
    %v5873 = vpack.c.bf16 %v4717, %v4379
    %v5874 = vpack.c.bf16 %v5393, %v5055
    %v5875 = vpack.c.bf16 %v3367, %v3029
    %v5876 = vpack.c.bf16 %v4043, %v3705
    %v5877 = vpack.c.bf16 %v4719, %v4381
    %v5878 = vpack.c.bf16 %v5395, %v5057
    %v5879 = vpack.c.bf16 %v3370, %v3032
    %v5880 = vpack.c.bf16 %v4046, %v3708
    %v5881 = vpack.c.bf16 %v4722, %v4384
    %v5882 = vpack.c.bf16 %v5398, %v5060
    %v5883 = vpack.c.bf16 %v3372, %v3034
    %v5884 = vpack.c.bf16 %v4048, %v3710
    %v5885 = vpack.c.bf16 %v4724, %v4386
    %v5886 = vpack.c.bf16 %v5400, %v5062
    %v5887 = vpack.c.bf16 %v3375, %v3037
    %v5888 = vpack.c.bf16 %v4051, %v3713
    %v5889 = vpack.c.bf16 %v4727, %v4389
    %v5890 = vpack.c.bf16 %v5403, %v5065
    %v5891 = vpack.c.bf16 %v3377, %v3039
    %v5892 = vpack.c.bf16 %v4053, %v3715
    %v5893 = vpack.c.bf16 %v4729, %v4391
    %v5894 = vpack.c.bf16 %v5405, %v5067
    %v5895 = vpack.c.bf16 %v3380, %v3042
    %v5896 = vpack.c.bf16 %v4056, %v3718
    %v5897 = vpack.c.bf16 %v4732, %v4394
    %v5898 = vpack.c.bf16 %v5408, %v5070
    %v5899 = vpack.c.bf16 %v3382, %v3044
    %v5900 = vpack.c.bf16 %v4058, %v3720
    %v5901 = vpack.c.bf16 %v4734, %v4396
    %v5902 = vpack.c.bf16 %v5410, %v5072
    %v5903 = vpack.c.bf16 %v3385, %v3047
    %v5904 = vpack.c.bf16 %v4061, %v3723
    %v5905 = vpack.c.bf16 %v4737, %v4399
    %v5906 = vpack.c.bf16 %v5413, %v5075
    %v5907 = vpack.c.bf16 %v3387, %v3049
    %v5908 = vpack.c.bf16 %v4063, %v3725
    %v5909 = vpack.c.bf16 %v4739, %v4401
    %v5910 = vpack.c.bf16 %v5415, %v5077
    %v5911 = vpack.c.bf16 %v3390, %v3052
    %v5912 = vpack.c.bf16 %v4066, %v3728
    %v5913 = vpack.c.bf16 %v4742, %v4404
    %v5914 = vpack.c.bf16 %v5418, %v5080
    %v5915 = vpack.c.bf16 %v3392, %v3054
    %v5916 = vpack.c.bf16 %v4068, %v3730
    %v5917 = vpack.c.bf16 %v4744, %v4406
    %v5918 = vpack.c.bf16 %v5420, %v5082
    %v5919 = vpack.c.bf16 %v3395, %v3057
    %v5920 = vpack.c.bf16 %v4071, %v3733
    %v5921 = vpack.c.bf16 %v4747, %v4409
    %v5922 = vpack.c.bf16 %v5423, %v5085
    %v5923 = vpack.c.bf16 %v3397, %v3059
    %v5924 = vpack.c.bf16 %v4073, %v3735
    %v5925 = vpack.c.bf16 %v4749, %v4411
    %v5926 = vpack.c.bf16 %v5425, %v5087
    %v5927 = vpack.c.bf16 %v3400, %v3062
    %v5928 = vpack.c.bf16 %v4076, %v3738
    %v5929 = vpack.c.bf16 %v4752, %v4414
    %v5930 = vpack.c.bf16 %v5428, %v5090
    %v5931 = vpack.c.bf16 %v3402, %v3064
    %v5932 = vpack.c.bf16 %v4078, %v3740
    %v5933 = vpack.c.bf16 %v4754, %v4416
    %v5934 = vpack.c.bf16 %v5430, %v5092
    %v5935 = vpack.c.bf16 %v3405, %v3067
    %v5936 = vpack.c.bf16 %v4081, %v3743
    %v5937 = vpack.c.bf16 %v4757, %v4419
    %v5938 = vpack.c.bf16 %v5433, %v5095
    %v5939 = vpack.c.bf16 %v3407, %v3069
    %v5940 = vpack.c.bf16 %v4083, %v3745
    %v5941 = vpack.c.bf16 %v4759, %v4421
    %v5942 = vpack.c.bf16 %v5435, %v5097
    %v5943 = vpack.c.bf16 %v3410, %v3072
    %v5944 = vpack.c.bf16 %v4086, %v3748
    %v5945 = vpack.c.bf16 %v4762, %v4424
    %v5946 = vpack.c.bf16 %v5438, %v5100
    %v5947 = vpack.c.bf16 %v3412, %v3074
    %v5948 = vpack.c.bf16 %v4088, %v3750
    %v5949 = vpack.c.bf16 %v4764, %v4426
    %v5950 = vpack.c.bf16 %v5440, %v5102
    %v5951 = vpack.c.bf16 %v3415, %v3077
    %v5952 = vpack.c.bf16 %v4091, %v3753
    %v5953 = vpack.c.bf16 %v4767, %v4429
    %v5954 = vpack.c.bf16 %v5443, %v5105
    %v5955 = vpack.c.bf16 %v3417, %v3079
    %v5956 = vpack.c.bf16 %v4093, %v3755
    %v5957 = vpack.c.bf16 %v4769, %v4431
    %v5958 = vpack.c.bf16 %v5445, %v5107
    %5959 = vst [vmem:[#allocation8] sm:$0xff] %v5703
    %5960 = vst [vmem:[#allocation8 + $0x8] sm:$0xff] %v5704
    %5961 = vst [vmem:[#allocation8 + $0x10] sm:$0xff] %v5705
    %5962 = vst [vmem:[#allocation8 + $0x18] sm:$0xff] %v5706
    %5963 = vst [vmem:[#allocation8 + $0x20] sm:$0xff] %v5707
    %5964 = vst [vmem:[#allocation8 + $0x28] sm:$0xff] %v5708
    %5965 = vst [vmem:[#allocation8 + $0x30] sm:$0xff] %v5709
    %5966 = vst [vmem:[#allocation8 + $0x38] sm:$0xff] %v5710
    %5967 = vst [vmem:[#allocation8 + $0x40] sm:$0xff] %v5711
    %5968 = vst [vmem:[#allocation8 + $0x48] sm:$0xff] %v5712
    %5969 = vst [vmem:[#allocation8 + $0x50] sm:$0xff] %v5713
    %5970 = vst [vmem:[#allocation8 + $0x58] sm:$0xff] %v5714
    %5971 = vst [vmem:[#allocation8 + $0x60] sm:$0xff] %v5715
    %5972 = vst [vmem:[#allocation8 + $0x68] sm:$0xff] %v5716
    %5973 = vst [vmem:[#allocation8 + $0x70] sm:$0xff] %v5717
    %5974 = vst [vmem:[#allocation8 + $0x78] sm:$0xff] %v5718
    %5975 = vst [vmem:[#allocation8 + $0x80] sm:$0xff] %v5719
    %5976 = vst [vmem:[#allocation8 + $0x88] sm:$0xff] %v5720
    %5977 = vst [vmem:[#allocation8 + $0x90] sm:$0xff] %v5721
    %5978 = vst [vmem:[#allocation8 + $0x98] sm:$0xff] %v5722
    %5979 = vst [vmem:[#allocation8 + $0xa0] sm:$0xff] %v5723
    %5980 = vst [vmem:[#allocation8 + $0xa8] sm:$0xff] %v5724
    %5981 = vst [vmem:[#allocation8 + $0xb0] sm:$0xff] %v5725
    %5982 = vst [vmem:[#allocation8 + $0xb8] sm:$0xff] %v5726
    %5983 = vst [vmem:[#allocation8 + $0xc0] sm:$0xff] %v5727
    %5984 = vst [vmem:[#allocation8 + $0xc8] sm:$0xff] %v5728
    %5985 = vst [vmem:[#allocation8 + $0xd0] sm:$0xff] %v5729
    %5986 = vst [vmem:[#allocation8 + $0xd8] sm:$0xff] %v5730
    %5987 = vst [vmem:[#allocation8 + $0xe0] sm:$0xff] %v5731
    %5988 = vst [vmem:[#allocation8 + $0xe8] sm:$0xff] %v5732
    %5989 = vst [vmem:[#allocation8 + $0xf0] sm:$0xff] %v5733
    %5990 = vst [vmem:[#allocation8 + $0xf8] sm:$0xff] %v5734
    %5991 = vst [vmem:[#allocation8 + $0x100] sm:$0xff] %v5735
    %5992 = vst [vmem:[#allocation8 + $0x108] sm:$0xff] %v5736
    %5993 = vst [vmem:[#allocation8 + $0x110] sm:$0xff] %v5737
    %5994 = vst [vmem:[#allocation8 + $0x118] sm:$0xff] %v5738
    %5995 = vst [vmem:[#allocation8 + $0x120] sm:$0xff] %v5739
    %5996 = vst [vmem:[#allocation8 + $0x128] sm:$0xff] %v5740
    %5997 = vst [vmem:[#allocation8 + $0x130] sm:$0xff] %v5741
    %5998 = vst [vmem:[#allocation8 + $0x138] sm:$0xff] %v5742
    %5999 = vst [vmem:[#allocation8 + $0x140] sm:$0xff] %v5743
    %6000 = vst [vmem:[#allocation8 + $0x148] sm:$0xff] %v5744
    %6001 = vst [vmem:[#allocation8 + $0x150] sm:$0xff] %v5745
    %6002 = vst [vmem:[#allocation8 + $0x158] sm:$0xff] %v5746
    %6003 = vst [vmem:[#allocation8 + $0x160] sm:$0xff] %v5747
    %6004 = vst [vmem:[#allocation8 + $0x168] sm:$0xff] %v5748
    %6005 = vst [vmem:[#allocation8 + $0x170] sm:$0xff] %v5749
    %6006 = vst [vmem:[#allocation8 + $0x178] sm:$0xff] %v5750
    %6007 = vst [vmem:[#allocation8 + $0x180] sm:$0xff] %v5751
    %6008 = vst [vmem:[#allocation8 + $0x188] sm:$0xff] %v5752
    %6009 = vst [vmem:[#allocation8 + $0x190] sm:$0xff] %v5753
    %6010 = vst [vmem:[#allocation8 + $0x198] sm:$0xff] %v5754
    %6011 = vst [vmem:[#allocation8 + $0x1a0] sm:$0xff] %v5755
    %6012 = vst [vmem:[#allocation8 + $0x1a8] sm:$0xff] %v5756
    %6013 = vst [vmem:[#allocation8 + $0x1b0] sm:$0xff] %v5757
    %6014 = vst [vmem:[#allocation8 + $0x1b8] sm:$0xff] %v5758
    %6015 = vst [vmem:[#allocation8 + $0x1c0] sm:$0xff] %v5759
    %6016 = vst [vmem:[#allocation8 + $0x1c8] sm:$0xff] %v5760
    %6017 = vst [vmem:[#allocation8 + $0x1d0] sm:$0xff] %v5761
    %6018 = vst [vmem:[#allocation8 + $0x1d8] sm:$0xff] %v5762
    %6019 = vst [vmem:[#allocation8 + $0x1e0] sm:$0xff] %v5763
    %6020 = vst [vmem:[#allocation8 + $0x1e8] sm:$0xff] %v5764
    %6021 = vst [vmem:[#allocation8 + $0x1f0] sm:$0xff] %v5765
    %6022 = vst [vmem:[#allocation8 + $0x1f8] sm:$0xff] %v5766
    %6023 = vst [vmem:[#allocation8 + $0x200] sm:$0xff] %v5767
    %6024 = vst [vmem:[#allocation8 + $0x208] sm:$0xff] %v5768
    %6025 = vst [vmem:[#allocation8 + $0x210] sm:$0xff] %v5769
    %6026 = vst [vmem:[#allocation8 + $0x218] sm:$0xff] %v5770
    %6027 = vst [vmem:[#allocation8 + $0x220] sm:$0xff] %v5771
    %6028 = vst [vmem:[#allocation8 + $0x228] sm:$0xff] %v5772
    %6029 = vst [vmem:[#allocation8 + $0x230] sm:$0xff] %v5773
    %6030 = vst [vmem:[#allocation8 + $0x238] sm:$0xff] %v5774
    %6031 = vst [vmem:[#allocation8 + $0x240] sm:$0xff] %v5775
    %6032 = vst [vmem:[#allocation8 + $0x248] sm:$0xff] %v5776
    %6033 = vst [vmem:[#allocation8 + $0x250] sm:$0xff] %v5777
    %6034 = vst [vmem:[#allocation8 + $0x258] sm:$0xff] %v5778
    %6035 = vst [vmem:[#allocation8 + $0x260] sm:$0xff] %v5779
    %6036 = vst [vmem:[#allocation8 + $0x268] sm:$0xff] %v5780
    %6037 = vst [vmem:[#allocation8 + $0x270] sm:$0xff] %v5781
    %6038 = vst [vmem:[#allocation8 + $0x278] sm:$0xff] %v5782
    %6039 = vst [vmem:[#allocation8 + $0x280] sm:$0xff] %v5783
    %6040 = vst [vmem:[#allocation8 + $0x288] sm:$0xff] %v5784
    %6041 = vst [vmem:[#allocation8 + $0x290] sm:$0xff] %v5785
    %6042 = vst [vmem:[#allocation8 + $0x298] sm:$0xff] %v5786
    %6043 = vst [vmem:[#allocation8 + $0x2a0] sm:$0xff] %v5787
    %6044 = vst [vmem:[#allocation8 + $0x2a8] sm:$0xff] %v5788
    %6045 = vst [vmem:[#allocation8 + $0x2b0] sm:$0xff] %v5789
    %6046 = vst [vmem:[#allocation8 + $0x2b8] sm:$0xff] %v5790
    %6047 = vst [vmem:[#allocation8 + $0x2c0] sm:$0xff] %v5791
    %6048 = vst [vmem:[#allocation8 + $0x2c8] sm:$0xff] %v5792
    %6049 = vst [vmem:[#allocation8 + $0x2d0] sm:$0xff] %v5793
    %6050 = vst [vmem:[#allocation8 + $0x2d8] sm:$0xff] %v5794
    %6051 = vst [vmem:[#allocation8 + $0x2e0] sm:$0xff] %v5795
    %6052 = vst [vmem:[#allocation8 + $0x2e8] sm:$0xff] %v5796
    %6053 = vst [vmem:[#allocation8 + $0x2f0] sm:$0xff] %v5797
    %6054 = vst [vmem:[#allocation8 + $0x2f8] sm:$0xff] %v5798
    %6055 = vst [vmem:[#allocation8 + $0x300] sm:$0xff] %v5799
    %6056 = vst [vmem:[#allocation8 + $0x308] sm:$0xff] %v5800
    %6057 = vst [vmem:[#allocation8 + $0x310] sm:$0xff] %v5801
    %6058 = vst [vmem:[#allocation8 + $0x318] sm:$0xff] %v5802
    %6059 = vst [vmem:[#allocation8 + $0x320] sm:$0xff] %v5803
    %6060 = vst [vmem:[#allocation8 + $0x328] sm:$0xff] %v5804
    %6061 = vst [vmem:[#allocation8 + $0x330] sm:$0xff] %v5805
    %6062 = vst [vmem:[#allocation8 + $0x338] sm:$0xff] %v5806
    %6063 = vst [vmem:[#allocation8 + $0x340] sm:$0xff] %v5807
    %6064 = vst [vmem:[#allocation8 + $0x348] sm:$0xff] %v5808
    %6065 = vst [vmem:[#allocation8 + $0x350] sm:$0xff] %v5809
    %6066 = vst [vmem:[#allocation8 + $0x358] sm:$0xff] %v5810
    %6067 = vst [vmem:[#allocation8 + $0x360] sm:$0xff] %v5811
    %6068 = vst [vmem:[#allocation8 + $0x368] sm:$0xff] %v5812
    %6069 = vst [vmem:[#allocation8 + $0x370] sm:$0xff] %v5813
    %6070 = vst [vmem:[#allocation8 + $0x378] sm:$0xff] %v5814
    %6071 = vst [vmem:[#allocation8 + $0x380] sm:$0xff] %v5815
    %6072 = vst [vmem:[#allocation8 + $0x388] sm:$0xff] %v5816
    %6073 = vst [vmem:[#allocation8 + $0x390] sm:$0xff] %v5817
    %6074 = vst [vmem:[#allocation8 + $0x398] sm:$0xff] %v5818
    %6075 = vst [vmem:[#allocation8 + $0x3a0] sm:$0xff] %v5819
    %6076 = vst [vmem:[#allocation8 + $0x3a8] sm:$0xff] %v5820
    %6077 = vst [vmem:[#allocation8 + $0x3b0] sm:$0xff] %v5821
    %6078 = vst [vmem:[#allocation8 + $0x3b8] sm:$0xff] %v5822
    %6079 = vst [vmem:[#allocation8 + $0x3c0] sm:$0xff] %v5823
    %6080 = vst [vmem:[#allocation8 + $0x3c8] sm:$0xff] %v5824
    %6081 = vst [vmem:[#allocation8 + $0x3d0] sm:$0xff] %v5825
    %6082 = vst [vmem:[#allocation8 + $0x3d8] sm:$0xff] %v5826
    %6083 = vst [vmem:[#allocation8 + $0x3e0] sm:$0xff] %v5827
    %6084 = vst [vmem:[#allocation8 + $0x3e8] sm:$0xff] %v5828
    %6085 = vst [vmem:[#allocation8 + $0x3f0] sm:$0xff] %v5829
    %6086 = vst [vmem:[#allocation8 + $0x3f8] sm:$0xff] %v5830
    %6087 = vst [vmem:[#allocation8 + $0x400] sm:$0xff] %v5831
    %6088 = vst [vmem:[#allocation8 + $0x408] sm:$0xff] %v5832
    %6089 = vst [vmem:[#allocation8 + $0x410] sm:$0xff] %v5833
    %6090 = vst [vmem:[#allocation8 + $0x418] sm:$0xff] %v5834
    %6091 = vst [vmem:[#allocation8 + $0x420] sm:$0xff] %v5835
    %6092 = vst [vmem:[#allocation8 + $0x428] sm:$0xff] %v5836
    %6093 = vst [vmem:[#allocation8 + $0x430] sm:$0xff] %v5837
    %6094 = vst [vmem:[#allocation8 + $0x438] sm:$0xff] %v5838
    %6095 = vst [vmem:[#allocation8 + $0x440] sm:$0xff] %v5839
    %6096 = vst [vmem:[#allocation8 + $0x448] sm:$0xff] %v5840
    %6097 = vst [vmem:[#allocation8 + $0x450] sm:$0xff] %v5841
    %6098 = vst [vmem:[#allocation8 + $0x458] sm:$0xff] %v5842
    %6099 = vst [vmem:[#allocation8 + $0x460] sm:$0xff] %v5843
    %6100 = vst [vmem:[#allocation8 + $0x468] sm:$0xff] %v5844
    %6101 = vst [vmem:[#allocation8 + $0x470] sm:$0xff] %v5845
    %6102 = vst [vmem:[#allocation8 + $0x478] sm:$0xff] %v5846
    %6103 = vst [vmem:[#allocation8 + $0x480] sm:$0xff] %v5847
    %6104 = vst [vmem:[#allocation8 + $0x488] sm:$0xff] %v5848
    %6105 = vst [vmem:[#allocation8 + $0x490] sm:$0xff] %v5849
    %6106 = vst [vmem:[#allocation8 + $0x498] sm:$0xff] %v5850
    %6107 = vst [vmem:[#allocation8 + $0x4a0] sm:$0xff] %v5851
    %6108 = vst [vmem:[#allocation8 + $0x4a8] sm:$0xff] %v5852
    %6109 = vst [vmem:[#allocation8 + $0x4b0] sm:$0xff] %v5853
    %6110 = vst [vmem:[#allocation8 + $0x4b8] sm:$0xff] %v5854
    %6111 = vst [vmem:[#allocation8 + $0x4c0] sm:$0xff] %v5855
    %6112 = vst [vmem:[#allocation8 + $0x4c8] sm:$0xff] %v5856
    %6113 = vst [vmem:[#allocation8 + $0x4d0] sm:$0xff] %v5857
    %6114 = vst [vmem:[#allocation8 + $0x4d8] sm:$0xff] %v5858
    %6115 = vst [vmem:[#allocation8 + $0x4e0] sm:$0xff] %v5859
    %6116 = vst [vmem:[#allocation8 + $0x4e8] sm:$0xff] %v5860
    %6117 = vst [vmem:[#allocation8 + $0x4f0] sm:$0xff] %v5861
    %6118 = vst [vmem:[#allocation8 + $0x4f8] sm:$0xff] %v5862
    %6119 = vst [vmem:[#allocation8 + $0x500] sm:$0xff] %v5863
    %6120 = vst [vmem:[#allocation8 + $0x508] sm:$0xff] %v5864
    %6121 = vst [vmem:[#allocation8 + $0x510] sm:$0xff] %v5865
    %6122 = vst [vmem:[#allocation8 + $0x518] sm:$0xff] %v5866
    %6123 = vst [vmem:[#allocation8 + $0x520] sm:$0xff] %v5867
    %6124 = vst [vmem:[#allocation8 + $0x528] sm:$0xff] %v5868
    %6125 = vst [vmem:[#allocation8 + $0x530] sm:$0xff] %v5869
    %6126 = vst [vmem:[#allocation8 + $0x538] sm:$0xff] %v5870
    %6127 = vst [vmem:[#allocation8 + $0x540] sm:$0xff] %v5871
    %6128 = vst [vmem:[#allocation8 + $0x548] sm:$0xff] %v5872
    %6129 = vst [vmem:[#allocation8 + $0x550] sm:$0xff] %v5873
    %6130 = vst [vmem:[#allocation8 + $0x558] sm:$0xff] %v5874
    %6131 = vst [vmem:[#allocation8 + $0x560] sm:$0xff] %v5875
    %6132 = vst [vmem:[#allocation8 + $0x568] sm:$0xff] %v5876
    %6133 = vst [vmem:[#allocation8 + $0x570] sm:$0xff] %v5877
    %6134 = vst [vmem:[#allocation8 + $0x578] sm:$0xff] %v5878
    %6135 = vst [vmem:[#allocation8 + $0x580] sm:$0xff] %v5879
    %6136 = vst [vmem:[#allocation8 + $0x588] sm:$0xff] %v5880
    %6137 = vst [vmem:[#allocation8 + $0x590] sm:$0xff] %v5881
    %6138 = vst [vmem:[#allocation8 + $0x598] sm:$0xff] %v5882
    %6139 = vst [vmem:[#allocation8 + $0x5a0] sm:$0xff] %v5883
    %6140 = vst [vmem:[#allocation8 + $0x5a8] sm:$0xff] %v5884
    %6141 = vst [vmem:[#allocation8 + $0x5b0] sm:$0xff] %v5885
    %6142 = vst [vmem:[#allocation8 + $0x5b8] sm:$0xff] %v5886
    %6143 = vst [vmem:[#allocation8 + $0x5c0] sm:$0xff] %v5887
    %6144 = vst [vmem:[#allocation8 + $0x5c8] sm:$0xff] %v5888
    %6145 = vst [vmem:[#allocation8 + $0x5d0] sm:$0xff] %v5889
    %6146 = vst [vmem:[#allocation8 + $0x5d8] sm:$0xff] %v5890
    %6147 = vst [vmem:[#allocation8 + $0x5e0] sm:$0xff] %v5891
    %6148 = vst [vmem:[#allocation8 + $0x5e8] sm:$0xff] %v5892
    %6149 = vst [vmem:[#allocation8 + $0x5f0] sm:$0xff] %v5893
    %6150 = vst [vmem:[#allocation8 + $0x5f8] sm:$0xff] %v5894
    %6151 = vst [vmem:[#allocation8 + $0x600] sm:$0xff] %v5895
    %6152 = vst [vmem:[#allocation8 + $0x608] sm:$0xff] %v5896
    %6153 = vst [vmem:[#allocation8 + $0x610] sm:$0xff] %v5897
    %6154 = vst [vmem:[#allocation8 + $0x618] sm:$0xff] %v5898
    %6155 = vst [vmem:[#allocation8 + $0x620] sm:$0xff] %v5899
    %6156 = vst [vmem:[#allocation8 + $0x628] sm:$0xff] %v5900
    %6157 = vst [vmem:[#allocation8 + $0x630] sm:$0xff] %v5901
    %6158 = vst [vmem:[#allocation8 + $0x638] sm:$0xff] %v5902
    %6159 = vst [vmem:[#allocation8 + $0x640] sm:$0xff] %v5903
    %6160 = vst [vmem:[#allocation8 + $0x648] sm:$0xff] %v5904
    %6161 = vst [vmem:[#allocation8 + $0x650] sm:$0xff] %v5905
    %6162 = vst [vmem:[#allocation8 + $0x658] sm:$0xff] %v5906
    %6163 = vst [vmem:[#allocation8 + $0x660] sm:$0xff] %v5907
    %6164 = vst [vmem:[#allocation8 + $0x668] sm:$0xff] %v5908
    %6165 = vst [vmem:[#allocation8 + $0x670] sm:$0xff] %v5909
    %6166 = vst [vmem:[#allocation8 + $0x678] sm:$0xff] %v5910
    %6167 = vst [vmem:[#allocation8 + $0x680] sm:$0xff] %v5911
    %6168 = vst [vmem:[#allocation8 + $0x688] sm:$0xff] %v5912
    %6169 = vst [vmem:[#allocation8 + $0x690] sm:$0xff] %v5913
    %6170 = vst [vmem:[#allocation8 + $0x698] sm:$0xff] %v5914
    %6171 = vst [vmem:[#allocation8 + $0x6a0] sm:$0xff] %v5915
    %6172 = vst [vmem:[#allocation8 + $0x6a8] sm:$0xff] %v5916
    %6173 = vst [vmem:[#allocation8 + $0x6b0] sm:$0xff] %v5917
    %6174 = vst [vmem:[#allocation8 + $0x6b8] sm:$0xff] %v5918
    %6175 = vst [vmem:[#allocation8 + $0x6c0] sm:$0xff] %v5919
    %6176 = vst [vmem:[#allocation8 + $0x6c8] sm:$0xff] %v5920
    %6177 = vst [vmem:[#allocation8 + $0x6d0] sm:$0xff] %v5921
    %6178 = vst [vmem:[#allocation8 + $0x6d8] sm:$0xff] %v5922
    %6179 = vst [vmem:[#allocation8 + $0x6e0] sm:$0xff] %v5923
    %6180 = vst [vmem:[#allocation8 + $0x6e8] sm:$0xff] %v5924
    %6181 = vst [vmem:[#allocation8 + $0x6f0] sm:$0xff] %v5925
    %6182 = vst [vmem:[#allocation8 + $0x6f8] sm:$0xff] %v5926
    %6183 = vst [vmem:[#allocation8 + $0x700] sm:$0xff] %v5927
    %6184 = vst [vmem:[#allocation8 + $0x708] sm:$0xff] %v5928
    %6185 = vst [vmem:[#allocation8 + $0x710] sm:$0xff] %v5929
    %6186 = vst [vmem:[#allocation8 + $0x718] sm:$0xff] %v5930
    %6187 = vst [vmem:[#allocation8 + $0x720] sm:$0xff] %v5931
    %6188 = vst [vmem:[#allocation8 + $0x728] sm:$0xff] %v5932
    %6189 = vst [vmem:[#allocation8 + $0x730] sm:$0xff] %v5933
    %6190 = vst [vmem:[#allocation8 + $0x738] sm:$0xff] %v5934
    %6191 = vst [vmem:[#allocation8 + $0x740] sm:$0xff] %v5935
    %6192 = vst [vmem:[#allocation8 + $0x748] sm:$0xff] %v5936
    %6193 = vst [vmem:[#allocation8 + $0x750] sm:$0xff] %v5937
    %6194 = vst [vmem:[#allocation8 + $0x758] sm:$0xff] %v5938
    %6195 = vst [vmem:[#allocation8 + $0x760] sm:$0xff] %v5939
    %6196 = vst [vmem:[#allocation8 + $0x768] sm:$0xff] %v5940
    %6197 = vst [vmem:[#allocation8 + $0x770] sm:$0xff] %v5941
    %6198 = vst [vmem:[#allocation8 + $0x778] sm:$0xff] %v5942
    %6199 = vst [vmem:[#allocation8 + $0x780] sm:$0xff] %v5943
    %6200 = vst [vmem:[#allocation8 + $0x788] sm:$0xff] %v5944
    %6201 = vst [vmem:[#allocation8 + $0x790] sm:$0xff] %v5945
    %6202 = vst [vmem:[#allocation8 + $0x798] sm:$0xff] %v5946
    %6203 = vst [vmem:[#allocation8 + $0x7a0] sm:$0xff] %v5947
    %6204 = vst [vmem:[#allocation8 + $0x7a8] sm:$0xff] %v5948
    %6205 = vst [vmem:[#allocation8 + $0x7b0] sm:$0xff] %v5949
    %6206 = vst [vmem:[#allocation8 + $0x7b8] sm:$0xff] %v5950
    %6207 = vst [vmem:[#allocation8 + $0x7c0] sm:$0xff] %v5951
    %6208 = vst [vmem:[#allocation8 + $0x7c8] sm:$0xff] %v5952
    %6209 = vst [vmem:[#allocation8 + $0x7d0] sm:$0xff] %v5953
    %6210 = vst [vmem:[#allocation8 + $0x7d8] sm:$0xff] %v5954
    %6211 = vst [vmem:[#allocation8 + $0x7e0] sm:$0xff] %v5955
    %6212 = vst [vmem:[#allocation8 + $0x7e8] sm:$0xff] %v5956
    %6213 = vst [vmem:[#allocation8 + $0x7f0] sm:$0xff] %v5957
    %6214 = vst [vmem:[#allocation8 + $0x7f8] sm:$0xff] %v5958
    // Predicated region
    $region18: #{tpu_custom_call.1} parent=1 // pred_check
      _
    $region19: #{tpu_custom_call.1} parent=1 // pred_check_branch
      %6216 = sbr.rel (0) target = $region21
    $region20: #{tpu_custom_call.1} parent=1 // pred_region
      %6218 = vsyncadd [#allocation4], 0
      %s6219 = sshll.u32 [#allocation7], 4
      %s6220 = int_to_ptr.vmem [resolvable:$true] %s6219
      %s6221 = sshll.u32 %s2, 4
      %s6222 = int_to_ptr.hbm [resolvable:$true] %s6221
      %6227 = dma.vmem_to_hbm [thread:$0]  %s6220, 16384, %s6222, [#allocation4], 256, 256, 16
    $region21: #{tpu_custom_call.1} parent=1 // pred_fallthru
      _
    // Predicated region
    $region22: #{tpu_custom_call.1} parent=1 // pred_check
      _
    $region23: #{tpu_custom_call.1} parent=1 // pred_check_branch
      %6229 = sbr.rel (0) target = $region25
    $region24: #{tpu_custom_call.1} parent=1 // pred_region
      %6231 = vsyncadd [#allocation9], 0
      %s6232 = sshll.u32 [#allocation8], 4
      %s6233 = int_to_ptr.vmem [resolvable:$true] %s6232
      %s6234 = sshll.u32 %s3, 4
      %s6235 = int_to_ptr.hbm [resolvable:$true] %s6234
      %6240 = dma.vmem_to_hbm [thread:$0]  %s6233, 32768, %s6235, [#allocation9], 512, 512, 32
    $region25: #{tpu_custom_call.1} parent=1 // pred_fallthru
      _
    // Predicated region
    $region26: #{tpu_custom_call.1} parent=1 // pred_check
      _
    $region27: #{tpu_custom_call.1} parent=1 // pred_check_branch
      %6242 = sbr.rel (0) target = $region29
    $region28: #{tpu_custom_call.1} parent=1 // pred_region
      %6244 = dma.done [#allocation4], 16384
    $region29: #{tpu_custom_call.1} parent=1 // pred_fallthru
      _
    // Predicated region
    $region30: #{tpu_custom_call.1} parent=1 // pred_check
      _
    $region31: #{tpu_custom_call.1} parent=1 // pred_check_branch
      %6246 = sbr.rel (0) target = $region33
    $region32: #{tpu_custom_call.1} parent=1 // pred_region
      %6248 = dma.done [#allocation9], 32768
    $region33: #{tpu_custom_call.1} parent=1 // pred_fallthru
      _
    %6249 = vsyncpa [#allocation3], 1
    %6250 = vsyncpa [#allocation6], 1
    %6251 = vsyncpa [#allocation4], 1
    %6252 = vsyncpa [#allocation9], 1

</llo_original>
